<compile_context>
chip_gen: v7x
topology: tpu7x:2x2x1
jax: 0.10.0
libtpu: 0.0.40
codegen_flags: <defaults>
</compile_context>

<pallas_src>
import jax
import jax.numpy as jnp
from jax.experimental import pallas as pl
from jax.experimental.pallas import tpu as pltpu


_HID1, _HID2 = 512, 256
_N_OUT = 128          # lane-padded width of the (really 1-wide) final weight
_MAX_TILE_B = 1024    # upper bound on batch-tile rows


def _round_up(x, m):
    return (x + m - 1) // m * m


def _cdiv(a, b):
    return -(-a // b)


def _leaky_relu(x, alpha=0.2):
    return jnp.where(x > 0, x, alpha * x)


# ---------------------------------------------------------------------------
# Kernel
# ---------------------------------------------------------------------------
def discriminator_kernel(x_ref, w1_ref, b1_ref, w2_ref, b2_ref, w3_ref, b3_ref,
                         o_ref, h1_acc):
    """Grid = (batch tiles, K tiles over the flatten dim).

    x tile: (tile_b, tk) bf16; weights bf16 (MXU operands), biases f32.
    Layer-1 partial products accumulate in an f32 VMEM scratch; layers 2/3,
    the bias adds, LeakyReLU and sigmoid run on the last K step.  Activation
    math stays f32 (v5e's VPU/EUP have no bf16 path).
    """
    k = pl.program_id(1)

    @pl.when(k == 0)
    def _():
        h1_acc[...] = jnp.zeros_like(h1_acc)

    # Layer 1 partial product: x k-slab @ w1 k-slab -> f32 accumulator.
    h1_acc[...] += jnp.dot(x_ref[...], w1_ref[...],
                           preferred_element_type=jnp.float32)

    @pl.when(k == pl.num_programs(1) - 1)
    def _():
        h1 = _leaky_relu(h1_acc[...] + b1_ref[...])
        h2 = _leaky_relu(
            jnp.dot(h1.astype(jnp.bfloat16), w2_ref[...],
                    preferred_element_type=jnp.float32) + b2_ref[...])
        # w3 is lane-padded to 128 columns purely to keep the MXU fed; only
        # column 0 carries the real logit.  Slice before the bias/sigmoid so
        # the EUP only does one exp per row.
        h3 = jnp.dot(h2.astype(jnp.bfloat16), w3_ref[...],
                     preferred_element_type=jnp.float32)
        logit = h3[:, 0:1] + b3_ref[0, 0]        # b3 is a true SMEM scalar
        # sigmoid(x) = 1 / (1 + exp(-x)); approx reciprocal rides the EUP slot.
        # The (tile_b, 1) store is narrow/masked, but its cost is negligible
        # next to the three matmuls, and HBM writeback drops to 4 B/row.
        o_ref[...] = pl.reciprocal(1.0 + jnp.exp(-logit), approx=True)


# ---------------------------------------------------------------------------
# Tiling / VMEM sizing
# ---------------------------------------------------------------------------
def _tpu_vmem_and_cores():
    """Per-TensorCore VMEM capacity and a 2-TC (v7x-style) heuristic."""
    try:
        cap = int(pltpu.get_tpu_info().vmem_capacity_bytes)
    except Exception:  # noqa: BLE001
        cap = 64 << 20            # conservative: assume the smallest (v7x) VMEM
    num_tc = 2 if cap <= (64 << 20) else 1   # 64 MiB/TC generation has 2 TCs
    return cap, num_tc


def _vmem_need(tile_b, tk, n_k):
    """Rough per-TC VMEM working set (bytes) for one grid step."""
    w1_bufs = 1 if n_k == 1 else 2                   # Buffered(1) only if resident
    need = (_HID1 * _HID2 + _HID2 * _N_OUT) * 2      # w2, w3 (bf16, single buffer)
    need += (_HID1 + _HID2) * 4                      # b1, b2 (f32, single buffer)
    need += w1_bufs * tk * _HID1 * 2                 # w1 k-slab(s), bf16
    need += 2 * tile_b * tk * 2                      # x tile, bf16, double-buffered
    need += 2 * tile_b * 4                           # (tile_b, 1) f32 out blocks
    need += tile_b * _HID1 * 4                       # h1 f32 accumulator scratch
    need += tile_b * (_HID1 * 2 + _HID2 * 6 + _N_OUT * 4)  # transient intermediates
    return need


def _pick_tiles(batch, d, vmem_cap, num_tc):
    """Pick (tile_b, n_b, b_pad, tk, n_k, need_bytes).

    Preference: fewest padded batch rows, then the largest batch tile (w1 is
    re-streamed once per batch tile when K-tiled), then the fewest K tiles.
    """
    budget = min(vmem_cap - (16 << 20), vmem_cap * 3 // 4)  # 48 MiB v7x, 96 MiB v5e/v6e

    cands = set()
    t = 128
    while t <= min(_MAX_TILE_B, _round_up(batch, 128)):
        cands.add(t)
        t *= 2
    b16 = _round_up(batch, 16)
    if b16 <= _MAX_TILE_B:
        cands.add(b16)            # single-tile option for small / odd batches

    best = None
    for tile_b in sorted(cands):
        b_pad = _round_up(batch, tile_b)
        n_b = b_pad // tile_b
        for n_k in range(1, max(1, _cdiv(d, 512)) + 1):
            tk = d if n_k == 1 else _round_up(_cdiv(d, n_k), 128)
            if n_k > 1 and tk * (n_k - 1) >= d:
                continue          # last k-slab would be pure padding
            need = _vmem_need(tile_b, tk, n_k)
            if need <= budget:
                key = (b_pad, -tile_b, n_k)
                if best is None or key < best[0]:
                    best = (key, (tile_b, n_b, b_pad, tk, n_k, need))
                break
    if best is None:
        # Pathologically large flatten dim: most conservative shape; let the
        # compiler + vmem_limit handle the rest.
        tile_b = min(b16, 128)
        n_k = max(1, _cdiv(d, 512))
        tk = d if n_k == 1 else _round_up(_cdiv(d, n_k), 128)
        b_pad = _round_up(batch, tile_b)
        best = (None, (tile_b, b_pad // tile_b, b_pad, tk, n_k,
                       _vmem_need(tile_b, tk, n_k)))

    tile_b, n_b, b_pad, tk, n_k, need = best[1]

    # v7x: 2 TensorCores per chip.  Ensure the "parallel" batch axis has >= 2
    # grid steps so both cores get work (each core holds its own copy of the
    # resident weights -- the budget above is already per-TC).
    if num_tc >= 2 and n_b == 1 and tile_b % 32 == 0 and batch > tile_b // 2:
        tile_b //= 2
        b_pad = _round_up(batch, tile_b)
        n_b = b_pad // tile_b
        need = _vmem_need(tile_b, tk, n_k)
    return tile_b, n_b, b_pad, tk, n_k, need


# ---------------------------------------------------------------------------
# Wrapper
# ---------------------------------------------------------------------------
def discriminator_forward(img, params):
    """img: (B, C, H, W) -> validity (B, 1) float32.

    The kernel consumes x as bf16 (MXU-native operands, f32 accumulation).
    Produce `img` in bf16 upstream (as __main__ does) so the cast below is a
    no-op rather than an extra HBM round trip.
    """
    w1, b1, w2, b2, w3, b3 = params
    w1 = w1.astype(jnp.bfloat16)
    w2 = w2.astype(jnp.bfloat16)
    w3 = w3.astype(jnp.bfloat16)
    b1 = b1.reshape(1, _HID1).astype(jnp.float32)
    b2 = b2.reshape(1, _HID2).astype(jnp.float32)
    b3s = b3.reshape(1, 1).astype(jnp.float32)

    batch = img.shape[0]
    x_flat = img.reshape(batch, -1).astype(jnp.bfloat16)  # row-major == torch .view
    d = x_flat.shape[1]

    cap, num_tc = _tpu_vmem_and_cores()
    tile_b, n_b, b_pad, tk, n_k, need = _pick_tiles(batch, d, cap, num_tc)
    d_pad = tk * n_k

    if b_pad != batch or d_pad != d:
        x_flat = jnp.pad(x_flat, ((0, b_pad - batch), (0, d_pad - d)))
    w1p = w1 if d_pad == d else jnp.pad(w1, ((0, d_pad - d), (0, 0)))
    w3p = jnp.pad(w3, ((0, 0), (0, _N_OUT - w3.shape[1])))   # lane-pad for the MXU

    grid = (n_b, n_k)

    vmem_limit = int(min(max(need + (8 << 20), 32 << 20), cap - (8 << 20)))
    flops = 2 * b_pad * (d_pad * _HID1 + _HID1 * _HID2 + _HID2 * _N_OUT)
    w1_bytes = int(w1p.size) * 2 * (n_b if n_k > 1 else 1)  # re-streamed per batch tile if K-tiled
    bytes_accessed = int(int(x_flat.size) * 2 + w1_bytes
                         + (int(w2.size) + int(w3p.size)) * 2
                         + (int(b1.size) + int(b2.size) + 1) * 4
                         + b_pad * 4)

    def _build_and_run(single_buffer_weights):
        # Resident (constant-block-index) operands don't need a second pipeline
        # buffer; Buffered(1) halves their VMEM footprint.  w1 only qualifies
        # when it is not K-tiled (otherwise its block index changes with k and
        # it must keep default double-buffering to overlap its DMA).
        res = ({"pipeline_mode": pl.Buffered(1)} if single_buffer_weights else {})
        w1_res = res if (single_buffer_weights and n_k == 1) else {}
        return pl.pallas_call(
            discriminator_kernel,
            grid=grid,
            in_specs=[
                pl.BlockSpec((tile_b, tk), lambda i, k: (i, k)),            # x: streamed
                pl.BlockSpec((tk, _HID1), lambda i, k: (k, 0), **w1_res),   # w1
                pl.BlockSpec((1, _HID1), lambda i, k: (0, 0), **res),       # b1
                pl.BlockSpec((_HID1, _HID2), lambda i, k: (0, 0), **res),   # w2
                pl.BlockSpec((1, _HID2), lambda i, k: (0, 0), **res),       # b2
                pl.BlockSpec((_HID2, _N_OUT), lambda i, k: (0, 0), **res),  # w3 (lane-padded)
                pl.BlockSpec((1, 1), lambda i, k: (0, 0),
                             memory_space=pltpu.MemorySpace.SMEM),          # b3 scalar
            ],
            # (tile_b, 1) f32 output column: 4 B/row HBM writeback (was 512).
            out_specs=pl.BlockSpec((tile_b, 1), lambda i, k: (i, 0)),
            out_shape=jax.ShapeDtypeStruct((b_pad, 1), jnp.float32),
            scratch_shapes=[pltpu.VMEM((tile_b, _HID1), jnp.float32)],
            compiler_params=pltpu.CompilerParams(
                dimension_semantics=("parallel", "arbitrary"),
                vmem_limit_bytes=vmem_limit,
            ),
            cost_estimate=pl.CostEstimate(
                flops=int(flops),
                transcendentals=int(2 * b_pad),
                bytes_accessed=bytes_accessed,
            ),
        )(x_flat, w1p, b1, w2, b2, w3p, b3s)

    try:
        out = _build_and_run(True)
    except Exception:  # noqa: BLE001
        # TODO(synk): Buffered(1) single-buffering rejected by this JAX build;
        # fall back to default double-buffered resident weights.
        out = _build_and_run(False)

    return out[:batch]


def init_params(key, in_dim):
    """Deterministic parameter init (shapes from the PyTorch __init__)."""
    ks = jax.random.split(key, 6)

    def lin(kw, kb, fan_in, fan_out):
        # Uniform(-1/sqrt(fan_in), 1/sqrt(fan_in)), like torch.nn.Linear default.
        bound = 1.0 / jnp.sqrt(jnp.float32(fan_in))
        w = jax.random.uniform(kw, (fan_in, fan_out), jnp.float32, -bound, bound)
        b = jax.random.uniform(kb, (1, fan_out), jnp.float32, -bound, bound)
        # bf16 weights halve HBM traffic; MXU takes bf16 operands with f32 acc.
        return w.astype(jnp.bfloat16), b

    w1, b1 = lin(ks[0], ks[1], in_dim, _HID1)
    w2, b2 = lin(ks[2], ks[3], _HID1, _HID2)
    w3, b3 = lin(ks[4], ks[5], _HID2, 1)
    return (w1, b1, w2, b2, w3, b3)


if __name__ == "__main__":
    key = jax.random.PRNGKey(0)
    k_img, k_par = jax.random.split(key)

    # Small, module-consistent shapes: batch=2, channels=4, img_size=16 -> D=1024.
    B, C, H, W = 2, 4, 16, 16
    # Produce the image in bf16 upstream so the kernel's x stream is half-width.
    img = jax.random.normal(k_img, (B, C, H, W), dtype=jnp.bfloat16)
    params = init_params(k_par, C * H * W)

    validity = discriminator_forward(img, params)
    validity = jax.block_until_ready(validity)

    # Pure-JAX reference mirroring the kernel's mixed precision
    # (bf16 x / weights, f32 accumulation, f32 activations).
    w1, b1, w2, b2, w3, b3 = params
    x = img.reshape(B, -1)

    def lrelu(z):
        return jnp.where(z > 0, z, 0.2 * z)

    h1 = lrelu(jnp.dot(x, w1, preferred_element_type=jnp.float32) + b1)
    h2 = lrelu(jnp.dot(h1.astype(jnp.bfloat16), w2,
                       preferred_element_type=jnp.float32) + b2)
    ref = jax.nn.sigmoid(jnp.dot(h2.astype(jnp.bfloat16), w3,
                                 preferred_element_type=jnp.float32) + b3)

    assert validity.shape == (B, 1)
    assert jnp.allclose(validity, ref, atol=5e-3, rtol=5e-3), (validity, ref)

    print("KERNEL_OK")
</pallas_src>

<mosaic_0001>
module attributes {stable_mosaic.version = 11 : i64} {
  func.func @discriminator_kernel(%arg0: i32, %arg1: i32, %arg2: memref<16x1024xbf16, #tpu.memory_space<vmem>>, %arg3: memref<1024x512xbf16, #tpu.memory_space<vmem>>, %arg4: memref<1x512xf32, #tpu.memory_space<vmem>>, %arg5: memref<512x256xbf16, #tpu.memory_space<vmem>>, %arg6: memref<1x256xf32, #tpu.memory_space<vmem>>, %arg7: memref<256x128xbf16, #tpu.memory_space<vmem>>, %arg8: memref<1x1xf32, #tpu.memory_space<smem>>, %arg9: memref<16x1xf32, #tpu.memory_space<vmem>>, %arg10: memref<16x512xf32, #tpu.memory_space<vmem>>) attributes {dimension_semantics = [#tpu.dimension_semantics<parallel>, #tpu.dimension_semantics<arbitrary>], iteration_bounds = array<i64: 1, 1>, scalar_prefetch = 0 : i64, scratch_operands = 1 : i64, tpu.core_type = #tpu.core_type<tc>, window_params = [{transform_indices = @transform_0, window_bounds = array<i64: 16, 1024>}, {pipeline_mode = #tpu.pipeline_mode<synchronous>, transform_indices = @transform_1, window_bounds = array<i64: 1024, 512>}, {pipeline_mode = #tpu.pipeline_mode<synchronous>, transform_indices = @transform_2, window_bounds = array<i64: 1, 512>}, {pipeline_mode = #tpu.pipeline_mode<synchronous>, transform_indices = @transform_3, window_bounds = array<i64: 512, 256>}, {pipeline_mode = #tpu.pipeline_mode<synchronous>, transform_indices = @transform_4, window_bounds = array<i64: 1, 256>}, {pipeline_mode = #tpu.pipeline_mode<synchronous>, transform_indices = @transform_5, window_bounds = array<i64: 256, 128>}, {transform_indices = @transform_6, window_bounds = array<i64: 1, 1>}, {transform_indices = @transform_7, window_bounds = array<i64: 16, 1>}]} {
    %c0_i32 = arith.constant 0 : i32
    %0 = arith.cmpi eq, %arg1, %c0_i32 : i32
    %1 = arith.extui %0 : i1 to i32
    %c0_i32_0 = arith.constant 0 : i32
    %2 = arith.cmpi ne, %1, %c0_i32_0 : i32
    scf.if %2 {
      %cst_10 = arith.constant 0.000000e+00 : f32
      %12 = vector.broadcast %cst_10 : f32 to vector<16x512xf32>
      %c0_11 = arith.constant 0 : index
      %c0_12 = arith.constant 0 : index
      %13 = vector.load %arg10[%c0_11, %c0_12] : memref<16x512xf32, #tpu.memory_space<vmem>>, vector<16x512xf32>
      tpu.vector_store %arg10[%c0_11, %c0_12], %12 {strides = array<i32>} : memref<16x512xf32, #tpu.memory_space<vmem>>, vector<16x512xf32>,
    } else {
    }
    %c0 = arith.constant 0 : index
    %c0_1 = arith.constant 0 : index
    %3 = vector.load %arg10[%c0, %c0_1] : memref<16x512xf32, #tpu.memory_space<vmem>>, vector<16x512xf32>
    %c0_2 = arith.constant 0 : index
    %c0_3 = arith.constant 0 : index
    %4 = vector.load %arg2[%c0_2, %c0_3] : memref<16x1024xbf16, #tpu.memory_space<vmem>>, vector<16x1024xbf16>
    %c0_4 = arith.constant 0 : index
    %c0_5 = arith.constant 0 : index
    %5 = vector.load %arg3[%c0_4, %c0_5] : memref<1024x512xbf16, #tpu.memory_space<vmem>>, vector<1024x512xbf16>
    %cst = arith.constant dense<0.000000e+00> : vector<16x512xf32>
    %6 = tpu.matmul %4, %5, %cst {dimension_numbers = #tpu.dot_dimension_numbers<[1], [0], [0], [1], [0, 0, 1, 1], [], []>} : vector<16x1024xbf16>, vector<1024x512xbf16>, vector<16x512xf32> -> vector<16x512xf32>
    %7 = arith.addf %3, %6 : vector<16x512xf32>
    %c0_6 = arith.constant 0 : index
    %c0_7 = arith.constant 0 : index
    %8 = vector.load %arg10[%c0_6, %c0_7] : memref<16x512xf32, #tpu.memory_space<vmem>>, vector<16x512xf32>
    tpu.vector_store %arg10[%c0_6, %c0_7], %7 {strides = array<i32>} : memref<16x512xf32, #tpu.memory_space<vmem>>, vector<16x512xf32>,
    %c0_i32_8 = arith.constant 0 : i32
    %9 = arith.cmpi eq, %arg1, %c0_i32_8 : i32
    %10 = arith.extui %9 : i1 to i32
    %c0_i32_9 = arith.constant 0 : i32
    %11 = arith.cmpi ne, %10, %c0_i32_9 : i32
    scf.if %11 {
      %c0_10 = arith.constant 0 : index
      %c0_11 = arith.constant 0 : index
      %12 = vector.load %arg10[%c0_10, %c0_11] : memref<16x512xf32, #tpu.memory_space<vmem>>, vector<16x512xf32>
      %c0_12 = arith.constant 0 : index
      %c0_13 = arith.constant 0 : index
      %13 = vector.load %arg4[%c0_12, %c0_13] : memref<1x512xf32, #tpu.memory_space<vmem>>, vector<1x512xf32>
      %14 = vector.broadcast %13 : vector<1x512xf32> to vector<16x512xf32>
      %15 = arith.addf %12, %14 : vector<16x512xf32>
      %cst_14 = arith.constant 0.000000e+00 : f32
      %16 = vector.broadcast %cst_14 : f32 to vector<16x512xf32>
      %17 = arith.cmpf ogt, %15, %16 : vector<16x512xf32>
      %cst_15 = arith.constant 2.000000e-01 : f32
      %18 = vector.broadcast %cst_15 : f32 to vector<16x512xf32>
      %19 = arith.mulf %18, %15 : vector<16x512xf32>
      %20 = arith.select %17, %15, %19 : vector<16x512xi1>, vector<16x512xf32>
      %21 = arith.truncf %20 : vector<16x512xf32> to vector<16x512xbf16>
      %c0_16 = arith.constant 0 : index
      %c0_17 = arith.constant 0 : index
      %22 = vector.load %arg5[%c0_16, %c0_17] : memref<512x256xbf16, #tpu.memory_space<vmem>>, vector<512x256xbf16>
      %cst_18 = arith.constant dense<0.000000e+00> : vector<16x256xf32>
      %23 = tpu.matmul %21, %22, %cst_18 {dimension_numbers = #tpu.dot_dimension_numbers<[1], [0], [0], [1], [0, 0, 1, 1], [], []>} : vector<16x512xbf16>, vector<512x256xbf16>, vector<16x256xf32> -> vector<16x256xf32>
      %c0_19 = arith.constant 0 : index
      %c0_20 = arith.constant 0 : index
      %24 = vector.load %arg6[%c0_19, %c0_20] : memref<1x256xf32, #tpu.memory_space<vmem>>, vector<1x256xf32>
      %25 = vector.broadcast %24 : vector<1x256xf32> to vector<16x256xf32>
      %26 = arith.addf %23, %25 : vector<16x256xf32>
      %cst_21 = arith.constant 0.000000e+00 : f32
      %27 = vector.broadcast %cst_21 : f32 to vector<16x256xf32>
      %28 = arith.cmpf ogt, %26, %27 : vector<16x256xf32>
      %cst_22 = arith.constant 2.000000e-01 : f32
      %29 = vector.broadcast %cst_22 : f32 to vector<16x256xf32>
      %30 = arith.mulf %29, %26 : vector<16x256xf32>
      %31 = arith.select %28, %26, %30 : vector<16x256xi1>, vector<16x256xf32>
      %32 = arith.truncf %31 : vector<16x256xf32> to vector<16x256xbf16>
      %c0_23 = arith.constant 0 : index
      %c0_24 = arith.constant 0 : index
      %33 = vector.load %arg7[%c0_23, %c0_24] : memref<256x128xbf16, #tpu.memory_space<vmem>>, vector<256x128xbf16>
      %cst_25 = arith.constant dense<0.000000e+00> : vector<16x128xf32>
      %34 = tpu.matmul %32, %33, %cst_25 {dimension_numbers = #tpu.dot_dimension_numbers<[1], [0], [0], [1], [0, 0, 1, 1], [], []>} : vector<16x256xbf16>, vector<256x128xbf16>, vector<16x128xf32> -> vector<16x128xf32>
      %35 = vector.extract_strided_slice %34 {offsets = [0, 0], sizes = [16, 1], strides = [1, 1]} : vector<16x128xf32> to vector<16x1xf32>
      %c0_26 = arith.constant 0 : index
      %c0_27 = arith.constant 0 : index
      %36 = memref.load %arg8[%c0_26, %c0_27] : memref<1x1xf32, #tpu.memory_space<smem>>
      %37 = vector.broadcast %36 : f32 to vector<16x1xf32>
      %38 = arith.addf %35, %37 : vector<16x1xf32>
      %cst_28 = arith.constant 0.000000e+00 : f32
      %39 = vector.broadcast %cst_28 : f32 to vector<16x1xf32>
      %40 = arith.subf %39, %38 : vector<16x1xf32>
      %41 = math.exp %40 : vector<16x1xf32>
      %cst_29 = arith.constant 1.000000e+00 : f32
      %42 = vector.broadcast %cst_29 : f32 to vector<16x1xf32>
      %43 = arith.addf %42, %41 : vector<16x1xf32>
      %44 = tpu.reciprocal %43 {approx = true} : vector<16x1xf32> -> vector<16x1xf32>
      %c0_30 = arith.constant 0 : index
      %c0_31 = arith.constant 0 : index
      %45 = vector.load %arg9[%c0_30, %c0_31] : memref<16x1xf32, #tpu.memory_space<vmem>>, vector<16x1xf32>
      tpu.vector_store %arg9[%c0_30, %c0_31], %44 {strides = array<i32>} : memref<16x1xf32, #tpu.memory_space<vmem>>, vector<16x1xf32>,
    } else {
    }
    return
  }
  func.func @transform_0(%arg0: i32, %arg1: i32) -> (i32, i32) {
    %c0_i32 = arith.constant 0 : i32
    return %arg0, %arg1 : i32, i32
  }
  func.func @transform_1(%arg0: i32, %arg1: i32) -> (i32, i32) {
    %c0_i32 = arith.constant 0 : i32
    %c0_i32_0 = arith.constant 0 : i32
    return %arg1, %c0_i32 : i32, i32
  }
  func.func @transform_2(%arg0: i32, %arg1: i32) -> (i32, i32) {
    %c0_i32 = arith.constant 0 : i32
    %c0_i32_0 = arith.constant 0 : i32
    %c0_i32_1 = arith.constant 0 : i32
    return %c0_i32, %c0_i32_0 : i32, i32
  }
  func.func @transform_3(%arg0: i32, %arg1: i32) -> (i32, i32) {
    %c0_i32 = arith.constant 0 : i32
    %c0_i32_0 = arith.constant 0 : i32
    %c0_i32_1 = arith.constant 0 : i32
    return %c0_i32, %c0_i32_0 : i32, i32
  }
  func.func @transform_4(%arg0: i32, %arg1: i32) -> (i32, i32) {
    %c0_i32 = arith.constant 0 : i32
    %c0_i32_0 = arith.constant 0 : i32
    %c0_i32_1 = arith.constant 0 : i32
    return %c0_i32, %c0_i32_0 : i32, i32
  }
  func.func @transform_5(%arg0: i32, %arg1: i32) -> (i32, i32) {
    %c0_i32 = arith.constant 0 : i32
    %c0_i32_0 = arith.constant 0 : i32
    %c0_i32_1 = arith.constant 0 : i32
    return %c0_i32, %c0_i32_0 : i32, i32
  }
  func.func @transform_6(%arg0: i32, %arg1: i32) -> (i32, i32) {
    %c0_i32 = arith.constant 0 : i32
    %c0_i32_0 = arith.constant 0 : i32
    %c0_i32_1 = arith.constant 0 : i32
    return %c0_i32, %c0_i32_0 : i32, i32
  }
  func.func @transform_7(%arg0: i32, %arg1: i32) -> (i32, i32) {
    %c0_i32 = arith.constant 0 : i32
    %c0_i32_0 = arith.constant 0 : i32
    return %arg0, %c0_i32 : i32, i32
  }
}

module attributes {stable_mosaic.version = 11 : i64} {
  func.func @discriminator_kernel(%arg0: i32, %arg1: i32, %arg2: memref<16x1024xbf16, #tpu.memory_space<vmem>>, %arg3: memref<1024x512xbf16, #tpu.memory_space<vmem>>, %arg4: memref<1x512xf32, #tpu.memory_space<vmem>>, %arg5: memref<512x256xbf16, #tpu.memory_space<vmem>>, %arg6: memref<1x256xf32, #tpu.memory_space<vmem>>, %arg7: memref<256x128xbf16, #tpu.memory_space<vmem>>, %arg8: memref<1x1xf32, #tpu.memory_space<smem>>, %arg9: memref<16x1xf32, #tpu.memory_space<vmem>>, %arg10: memref<16x512xf32, #tpu.memory_space<vmem>>) attributes {dimension_semantics = [#tpu.dimension_semantics<parallel>, #tpu.dimension_semantics<arbitrary>], iteration_bounds = array<i64: 1, 1>, scalar_prefetch = 0 : i64, scratch_operands = 1 : i64, tpu.core_type = #tpu.core_type<tc>, window_params = [{transform_indices = @transform_0, window_bounds = array<i64: 16, 1024>}, {transform_indices = @transform_1, window_bounds = array<i64: 1024, 512>}, {pipeline_mode = #tpu.pipeline_mode<synchronous>, transform_indices = @transform_2, window_bounds = array<i64: 1, 512>}, {pipeline_mode = #tpu.pipeline_mode<synchronous>, transform_indices = @transform_3, window_bounds = array<i64: 512, 256>}, {pipeline_mode = #tpu.pipeline_mode<synchronous>, transform_indices = @transform_4, window_bounds = array<i64: 1, 256>}, {pipeline_mode = #tpu.pipeline_mode<synchronous>, transform_indices = @transform_5, window_bounds = array<i64: 256, 128>}, {transform_indices = @transform_6, window_bounds = array<i64: 1, 1>}, {transform_indices = @transform_7, window_bounds = array<i64: 16, 1>}]} {
    %c0_i32 = arith.constant 0 : i32
    %0 = arith.cmpi eq, %arg1, %c0_i32 : i32
    %1 = arith.extui %0 : i1 to i32
    %c0_i32_0 = arith.constant 0 : i32
    %2 = arith.cmpi ne, %1, %c0_i32_0 : i32
    scf.if %2 {
      %cst_10 = arith.constant 0.000000e+00 : f32
      %12 = vector.broadcast %cst_10 : f32 to vector<16x512xf32>
      %c0_11 = arith.constant 0 : index
      %c0_12 = arith.constant 0 : index
      %13 = vector.load %arg10[%c0_11, %c0_12] : memref<16x512xf32, #tpu.memory_space<vmem>>, vector<16x512xf32>
      tpu.vector_store %arg10[%c0_11, %c0_12], %12 {strides = array<i32>} : memref<16x512xf32, #tpu.memory_space<vmem>>, vector<16x512xf32>,
    } else {
    }
    %c0 = arith.constant 0 : index
    %c0_1 = arith.constant 0 : index
    %3 = vector.load %arg10[%c0, %c0_1] : memref<16x512xf32, #tpu.memory_space<vmem>>, vector<16x512xf32>
    %c0_2 = arith.constant 0 : index
    %c0_3 = arith.constant 0 : index
    %4 = vector.load %arg2[%c0_2, %c0_3] : memref<16x1024xbf16, #tpu.memory_space<vmem>>, vector<16x1024xbf16>
    %c0_4 = arith.constant 0 : index
    %c0_5 = arith.constant 0 : index
    %5 = vector.load %arg3[%c0_4, %c0_5] : memref<1024x512xbf16, #tpu.memory_space<vmem>>, vector<1024x512xbf16>
    %cst = arith.constant dense<0.000000e+00> : vector<16x512xf32>
    %6 = tpu.matmul %4, %5, %cst {dimension_numbers = #tpu.dot_dimension_numbers<[1], [0], [0], [1], [0, 0, 1, 1], [], []>} : vector<16x1024xbf16>, vector<1024x512xbf16>, vector<16x512xf32> -> vector<16x512xf32>
    %7 = arith.addf %3, %6 : vector<16x512xf32>
    %c0_6 = arith.constant 0 : index
    %c0_7 = arith.constant 0 : index
    %8 = vector.load %arg10[%c0_6, %c0_7] : memref<16x512xf32, #tpu.memory_space<vmem>>, vector<16x512xf32>
    tpu.vector_store %arg10[%c0_6, %c0_7], %7 {strides = array<i32>} : memref<16x512xf32, #tpu.memory_space<vmem>>, vector<16x512xf32>,
    %c0_i32_8 = arith.constant 0 : i32
    %9 = arith.cmpi eq, %arg1, %c0_i32_8 : i32
    %10 = arith.extui %9 : i1 to i32
    %c0_i32_9 = arith.constant 0 : i32
    %11 = arith.cmpi ne, %10, %c0_i32_9 : i32
    scf.if %11 {
      %c0_10 = arith.constant 0 : index
      %c0_11 = arith.constant 0 : index
      %12 = vector.load %arg10[%c0_10, %c0_11] : memref<16x512xf32, #tpu.memory_space<vmem>>, vector<16x512xf32>
      %c0_12 = arith.constant 0 : index
      %c0_13 = arith.constant 0 : index
      %13 = vector.load %arg4[%c0_12, %c0_13] : memref<1x512xf32, #tpu.memory_space<vmem>>, vector<1x512xf32>
      %14 = vector.broadcast %13 : vector<1x512xf32> to vector<16x512xf32>
      %15 = arith.addf %12, %14 : vector<16x512xf32>
      %cst_14 = arith.constant 0.000000e+00 : f32
      %16 = vector.broadcast %cst_14 : f32 to vector<16x512xf32>
      %17 = arith.cmpf ogt, %15, %16 : vector<16x512xf32>
      %cst_15 = arith.constant 2.000000e-01 : f32
      %18 = vector.broadcast %cst_15 : f32 to vector<16x512xf32>
      %19 = arith.mulf %18, %15 : vector<16x512xf32>
      %20 = arith.select %17, %15, %19 : vector<16x512xi1>, vector<16x512xf32>
      %21 = arith.truncf %20 : vector<16x512xf32> to vector<16x512xbf16>
      %c0_16 = arith.constant 0 : index
      %c0_17 = arith.constant 0 : index
      %22 = vector.load %arg5[%c0_16, %c0_17] : memref<512x256xbf16, #tpu.memory_space<vmem>>, vector<512x256xbf16>
      %cst_18 = arith.constant dense<0.000000e+00> : vector<16x256xf32>
      %23 = tpu.matmul %21, %22, %cst_18 {dimension_numbers = #tpu.dot_dimension_numbers<[1], [0], [0], [1], [0, 0, 1, 1], [], []>} : vector<16x512xbf16>, vector<512x256xbf16>, vector<16x256xf32> -> vector<16x256xf32>
      %c0_19 = arith.constant 0 : index
      %c0_20 = arith.constant 0 : index
      %24 = vector.load %arg6[%c0_19, %c0_20] : memref<1x256xf32, #tpu.memory_space<vmem>>, vector<1x256xf32>
      %25 = vector.broadcast %24 : vector<1x256xf32> to vector<16x256xf32>
      %26 = arith.addf %23, %25 : vector<16x256xf32>
      %cst_21 = arith.constant 0.000000e+00 : f32
      %27 = vector.broadcast %cst_21 : f32 to vector<16x256xf32>
      %28 = arith.cmpf ogt, %26, %27 : vector<16x256xf32>
      %cst_22 = arith.constant 2.000000e-01 : f32
      %29 = vector.broadcast %cst_22 : f32 to vector<16x256xf32>
      %30 = arith.mulf %29, %26 : vector<16x256xf32>
      %31 = arith.select %28, %26, %30 : vector<16x256xi1>, vector<16x256xf32>
      %32 = arith.truncf %31 : vector<16x256xf32> to vector<16x256xbf16>
      %c0_23 = arith.constant 0 : index
      %c0_24 = arith.constant 0 : index
      %33 = vector.load %arg7[%c0_23, %c0_24] : memref<256x128xbf16, #tpu.memory_space<vmem>>, vector<256x128xbf16>
      %cst_25 = arith.constant dense<0.000000e+00> : vector<16x128xf32>
      %34 = tpu.matmul %32, %33, %cst_25 {dimension_numbers = #tpu.dot_dimension_numbers<[1], [0], [0], [1], [0, 0, 1, 1], [], []>} : vector<16x256xbf16>, vector<256x128xbf16>, vector<16x128xf32> -> vector<16x128xf32>
      %35 = vector.extract_strided_slice %34 {offsets = [0, 0], sizes = [16, 1], strides = [1, 1]} : vector<16x128xf32> to vector<16x1xf32>
      %c0_26 = arith.constant 0 : index
      %c0_27 = arith.constant 0 : index
      %36 = memref.load %arg8[%c0_26, %c0_27] : memref<1x1xf32, #tpu.memory_space<smem>>
      %37 = vector.broadcast %36 : f32 to vector<16x1xf32>
      %38 = arith.addf %35, %37 : vector<16x1xf32>
      %cst_28 = arith.constant 0.000000e+00 : f32
      %39 = vector.broadcast %cst_28 : f32 to vector<16x1xf32>
      %40 = arith.subf %39, %38 : vector<16x1xf32>
      %41 = math.exp %40 : vector<16x1xf32>
      %cst_29 = arith.constant 1.000000e+00 : f32
      %42 = vector.broadcast %cst_29 : f32 to vector<16x1xf32>
      %43 = arith.addf %42, %41 : vector<16x1xf32>
      %44 = tpu.reciprocal %43 {approx = true} : vector<16x1xf32> -> vector<16x1xf32>
      %c0_30 = arith.constant 0 : index
      %c0_31 = arith.constant 0 : index
      %45 = vector.load %arg9[%c0_30, %c0_31] : memref<16x1xf32, #tpu.memory_space<vmem>>, vector<16x1xf32>
      tpu.vector_store %arg9[%c0_30, %c0_31], %44 {strides = array<i32>} : memref<16x1xf32, #tpu.memory_space<vmem>>, vector<16x1xf32>,
    } else {
    }
    return
  }
  func.func @transform_0(%arg0: i32, %arg1: i32) -> (i32, i32) {
    %c0_i32 = arith.constant 0 : i32
    return %arg0, %arg1 : i32, i32
  }
  func.func @transform_1(%arg0: i32, %arg1: i32) -> (i32, i32) {
    %c0_i32 = arith.constant 0 : i32
    %c0_i32_0 = arith.constant 0 : i32
    return %arg1, %c0_i32 : i32, i32
  }
  func.func @transform_2(%arg0: i32, %arg1: i32) -> (i32, i32) {
    %c0_i32 = arith.constant 0 : i32
    %c0_i32_0 = arith.constant 0 : i32
    %c0_i32_1 = arith.constant 0 : i32
    return %c0_i32, %c0_i32_0 : i32, i32
  }
  func.func @transform_3(%arg0: i32, %arg1: i32) -> (i32, i32) {
    %c0_i32 = arith.constant 0 : i32
    %c0_i32_0 = arith.constant 0 : i32
    %c0_i32_1 = arith.constant 0 : i32
    return %c0_i32, %c0_i32_0 : i32, i32
  }
  func.func @transform_4(%arg0: i32, %arg1: i32) -> (i32, i32) {
    %c0_i32 = arith.constant 0 : i32
    %c0_i32_0 = arith.constant 0 : i32
    %c0_i32_1 = arith.constant 0 : i32
    return %c0_i32, %c0_i32_0 : i32, i32
  }
  func.func @transform_5(%arg0: i32, %arg1: i32) -> (i32, i32) {
    %c0_i32 = arith.constant 0 : i32
    %c0_i32_0 = arith.constant 0 : i32
    %c0_i32_1 = arith.constant 0 : i32
    return %c0_i32, %c0_i32_0 : i32, i32
  }
  func.func @transform_6(%arg0: i32, %arg1: i32) -> (i32, i32) {
    %c0_i32 = arith.constant 0 : i32
    %c0_i32_0 = arith.constant 0 : i32
    %c0_i32_1 = arith.constant 0 : i32
    return %c0_i32, %c0_i32_0 : i32, i32
  }
  func.func @transform_7(%arg0: i32, %arg1: i32) -> (i32, i32) {
    %c0_i32 = arith.constant 0 : i32
    %c0_i32_0 = arith.constant 0 : i32
    return %arg0, %c0_i32 : i32, i32
  }
}

</mosaic_0001>

<llo_original>
// kernel: tpu_custom_call.1
$region0: #{tpu_custom_call.1}
  #allocation0 [shape = 'u32[]', space=smem, size = 0x4, offset = 0x4, fixed_abs, tag = 'smem constant byte address 0x4 - core index']
  #allocation1 [shape = 'u32[144,128]{1,0:T(1,128)}', space=vmem, size = 0x12000, scoped, tag = 'internal scratch']
  #allocation2 [shape = 'f32[16,512]{1,0:T(8,128)}', space=vmem, size = 0x8000, scoped, tag = 'scratch operand']
  #allocation3 [shape = 'f32[1,1]{1,0:T(1,128)S(6)}', space=smem, size = 0x200, scoped, tag = 'scoped memory for tpu_custom_call.1']
  %s0 = inlined_call_operand.hbm [shape: bf16[16,1024], index: 0, kind: input, shape index: {}]
  %s1 = inlined_call_operand.hbm [shape: bf16[1024,512], index: 1, kind: input, shape index: {}]
  %s2 = inlined_call_operand.vmem [shape: f32[1,512], index: 2, kind: input, shape index: {}]
  %s3 = inlined_call_operand.hbm [shape: bf16[512,256], index: 3, kind: input, shape index: {}]
  %s4 = inlined_call_operand.vmem [shape: f32[1,256], index: 4, kind: input, shape index: {}]
  %s5 = inlined_call_operand.hbm [shape: bf16[256,128], index: 5, kind: input, shape index: {}]
  %s6 = inlined_call_operand.<no memory space> [shape: f32[1,1], index: 6, kind: input, shape index: {}]
  %s7 = inlined_call_operand.vmem [shape: f32[16,1], index: 7, kind: output, shape index: {}]
  %s8 = sld [smem:[#allocation0]]
  $region62: #{tpu_custom_call.1} parent=0
    _
  %s10 = ssub.s32 1, %s8
  %s11 = scalar_select 0, %s10, %s8
  %12 = sst [smem:[#allocation3]] %s6
  $region1: #{tpu_custom_call.1} parent=0
    #allocation4 [shape = 'u8[32768]{0}', space=vmem, size = 0x8000, scoped, tag = 'input window, operand 0, single buffered']
    #allocation5 [shape = 's32[1]{0}', space=sflag, size = 0x4, scoped, tag = 'scoped memory for tpu_custom_call.1']
    #allocation6 [shape = 'u8[1048576]{0}', space=vmem, size = 0x100000, scoped, tag = 'input window, operand 1, single buffered']
    #allocation7 [shape = 's32[1]{0}', space=sflag, size = 0x4, scoped, tag = 'scoped memory for tpu_custom_call.1']
    #allocation8 [shape = 'u8[262144]{0}', space=vmem, size = 0x40000, scoped, tag = 'input window, operand 3, single buffered']
    #allocation9 [shape = 'u8[65536]{0}', space=vmem, size = 0x10000, scoped, tag = 'input window, operand 5, single buffered']
    #allocation10 [shape = 's32[1]{0}', space=sflag, size = 0x4, scoped, tag = 'scoped memory for tpu_custom_call.1']
    %13 = vsyncpa [#allocation5], 0
    %14 = vsyncpa [#allocation7], 0
    %15 = vsyncpa [#allocation10], 0
    // Predicated region
    $region2: #{tpu_custom_call.1} parent=1 // pred_check
      _
    $region3: #{tpu_custom_call.1} parent=1 // pred_check_branch
      %17 = sbr.rel (0) target = $region5
    $region4: #{tpu_custom_call.1} parent=1 // pred_region
      %s19 = ssub.s32 1024, 1024
      %20 = vsyncadd [#allocation5], %s19
      %s21 = sshll.u32 [#allocation4], 4
      %s22 = int_to_ptr.vmem [resolvable:$true] %s21
      %27 = dma.hbm_to_vmem [thread:$0]  %s0, 1024, %s22, [#allocation5], 512, 512, 32
    $region5: #{tpu_custom_call.1} parent=1 // pred_fallthru
      _
    // Predicated region
    $region6: #{tpu_custom_call.1} parent=1 // pred_check
      _
    $region7: #{tpu_custom_call.1} parent=1 // pred_check_branch
      %29 = sbr.rel (0) target = $region9
    $region8: #{tpu_custom_call.1} parent=1 // pred_region
      %s31 = ssub.s32 32768, 32768
      %32 = vsyncadd [#allocation7], %s31
      %s33 = sshll.u32 [#allocation6], 4
      %s34 = int_to_ptr.vmem [resolvable:$true] %s33
      %39 = dma.hbm_to_vmem [thread:$0]  %s1, 32768, %s34, [#allocation7], 256, 256, 16
    $region9: #{tpu_custom_call.1} parent=1 // pred_fallthru
      _
    // Predicated region
    $region10: #{tpu_custom_call.1} parent=1 // pred_check
      _
    $region11: #{tpu_custom_call.1} parent=1 // pred_check_branch
      %41 = sbr.rel (0) target = $region13
    $region12: #{tpu_custom_call.1} parent=1 // pred_region
      _
    $region13: #{tpu_custom_call.1} parent=1 // pred_fallthru
      _
    // Predicated region
    $region14: #{tpu_custom_call.1} parent=1 // pred_check
      _
    $region15: #{tpu_custom_call.1} parent=1 // pred_check_branch
      %43 = sbr.rel (0) target = $region17
    $region16: #{tpu_custom_call.1} parent=1 // pred_region
      %s45 = ssub.s32 8192, 8192
      %46 = vsyncadd [#allocation7], %s45
      %s47 = sshll.u32 [#allocation8], 4
      %s48 = int_to_ptr.vmem [resolvable:$true] %s47
      %53 = dma.hbm_to_vmem [thread:$0]  %s3, 8192, %s48, [#allocation7], 128, 128, 8
    $region17: #{tpu_custom_call.1} parent=1 // pred_fallthru
      _
    // Predicated region
    $region18: #{tpu_custom_call.1} parent=1 // pred_check
      _
    $region19: #{tpu_custom_call.1} parent=1 // pred_check_branch
      %55 = sbr.rel (0) target = $region21
    $region20: #{tpu_custom_call.1} parent=1 // pred_region
      _
    $region21: #{tpu_custom_call.1} parent=1 // pred_fallthru
      _
    // Predicated region
    $region22: #{tpu_custom_call.1} parent=1 // pred_check
      _
    $region23: #{tpu_custom_call.1} parent=1 // pred_check_branch
      %57 = sbr.rel (0) target = $region25
    $region24: #{tpu_custom_call.1} parent=1 // pred_region
      %s59 = ssub.s32 2048, 2048
      %60 = vsyncadd [#allocation10], %s59
      %s61 = sshll.u32 [#allocation9], 4
      %s62 = int_to_ptr.vmem [resolvable:$true] %s61
      %67 = dma.hbm_to_vmem [thread:$0]  %s5, 2048, %s62, [#allocation10], 64, 64, 4
    $region25: #{tpu_custom_call.1} parent=1 // pred_fallthru
      _
    // Predicated region
    $region26: #{tpu_custom_call.1} parent=1 // pred_check
      _
    $region27: #{tpu_custom_call.1} parent=1 // pred_check_branch
      %69 = sbr.rel (0) target = $region29
    $region28: #{tpu_custom_call.1} parent=1 // pred_region
      _
    $region29: #{tpu_custom_call.1} parent=1 // pred_fallthru
      _
    // Predicated region
    $region30: #{tpu_custom_call.1} parent=1 // pred_check
      _
    $region31: #{tpu_custom_call.1} parent=1 // pred_check_branch
      %71 = sbr.rel (0) target = $region33
    $region32: #{tpu_custom_call.1} parent=1 // pred_region
      %72 = dma.done [#allocation5], 1024
    $region33: #{tpu_custom_call.1} parent=1 // pred_fallthru
      _
    // Predicated region
    $region34: #{tpu_custom_call.1} parent=1 // pred_check
      _
    $region35: #{tpu_custom_call.1} parent=1 // pred_check_branch
      %74 = sbr.rel (0) target = $region37
    $region36: #{tpu_custom_call.1} parent=1 // pred_region
      %75 = dma.done [#allocation7], 32768
    $region37: #{tpu_custom_call.1} parent=1 // pred_fallthru
      _
    // Predicated region
    $region38: #{tpu_custom_call.1} parent=1 // pred_check
      _
    $region39: #{tpu_custom_call.1} parent=1 // pred_check_branch
      %77 = sbr.rel (0) target = $region41
    $region40: #{tpu_custom_call.1} parent=1 // pred_region
      %78 = dma.done [#allocation7], 8192
    $region41: #{tpu_custom_call.1} parent=1 // pred_fallthru
      _
    // Predicated region
    $region42: #{tpu_custom_call.1} parent=1 // pred_check
      _
    $region43: #{tpu_custom_call.1} parent=1 // pred_check_branch
      %80 = sbr.rel (0) target = $region45
    $region44: #{tpu_custom_call.1} parent=1 // pred_region
      %81 = dma.done [#allocation10], 2048
    $region45: #{tpu_custom_call.1} parent=1 // pred_fallthru
      _
    %p83 = scmp.eq.s32.totalorder 0, 0
    // Predicated region
    $region46: #{tpu_custom_call.1} parent=1 // pred_check
      %p84 = pneg %p83
    $region47: #{tpu_custom_call.1} parent=1 // pred_check_branch
      %86 = sbr.rel (%p84) target = $region49
    $region48: #{tpu_custom_call.1} parent=1 // pred_region
      %87 = vst [vmem:[#allocation2] sm:$0xff] 0.0
      %88 = vst [vmem:[#allocation2 + $0x8] sm:$0xff] 0.0
      %89 = vst [vmem:[#allocation2 + $0x10] sm:$0xff] 0.0
      %90 = vst [vmem:[#allocation2 + $0x18] sm:$0xff] 0.0
      %91 = vst [vmem:[#allocation2 + $0x20] sm:$0xff] 0.0
      %92 = vst [vmem:[#allocation2 + $0x28] sm:$0xff] 0.0
      %93 = vst [vmem:[#allocation2 + $0x30] sm:$0xff] 0.0
      %94 = vst [vmem:[#allocation2 + $0x38] sm:$0xff] 0.0
    $region49: #{tpu_custom_call.1} parent=1 // pred_fallthru
      _
    %v95 = vld [vmem:[#allocation2] sm:$0xff]
    %v96 = vld [vmem:[#allocation2 + $0x8] sm:$0xff]
    %v97 = vld [vmem:[#allocation2 + $0x10] sm:$0xff]
    %v98 = vld [vmem:[#allocation2 + $0x18] sm:$0xff]
    %v99 = vld [vmem:[#allocation2 + $0x20] sm:$0xff]
    %v100 = vld [vmem:[#allocation2 + $0x28] sm:$0xff]
    %v101 = vld [vmem:[#allocation2 + $0x30] sm:$0xff]
    %v102 = vld [vmem:[#allocation2 + $0x38] sm:$0xff]
    %v103 = vld [vmem:[#allocation4] sm:$0xff]
    %v104 = vld [vmem:[#allocation4 + $0x8] sm:$0xff]
    %v105 = vld [vmem:[#allocation4 + $0x10] sm:$0xff]
    %v106 = vld [vmem:[#allocation4 + $0x18] sm:$0xff]
    %v107 = vld [vmem:[#allocation4 + $0x20] sm:$0xff]
    %v108 = vld [vmem:[#allocation4 + $0x28] sm:$0xff]
    %v109 = vld [vmem:[#allocation4 + $0x30] sm:$0xff]
    %v110 = vld [vmem:[#allocation4 + $0x38] sm:$0xff]
    %v111 = vld [vmem:[#allocation6] sm:$0xff]
    %v112 = vld [vmem:[#allocation6 + $0x8] sm:$0xff]
    %v113 = vld [vmem:[#allocation6 + $0x10] sm:$0xff]
    %v114 = vld [vmem:[#allocation6 + $0x18] sm:$0xff]
    %v115 = vld [vmem:[#allocation6 + $0x20] sm:$0xff]
    %v116 = vld [vmem:[#allocation6 + $0x28] sm:$0xff]
    %v117 = vld [vmem:[#allocation6 + $0x30] sm:$0xff]
    %v118 = vld [vmem:[#allocation6 + $0x38] sm:$0xff]
    %v119 = vld [vmem:[#allocation6 + $0x40] sm:$0xff]
    %v120 = vld [vmem:[#allocation6 + $0x48] sm:$0xff]
    %v121 = vld [vmem:[#allocation6 + $0x50] sm:$0xff]
    %v122 = vld [vmem:[#allocation6 + $0x58] sm:$0xff]
    %v123 = vld [vmem:[#allocation6 + $0x60] sm:$0xff]
    %v124 = vld [vmem:[#allocation6 + $0x68] sm:$0xff]
    %v125 = vld [vmem:[#allocation6 + $0x70] sm:$0xff]
    %v126 = vld [vmem:[#allocation6 + $0x78] sm:$0xff]
    %v127 = vld [vmem:[#allocation6 + $0x80] sm:$0xff]
    %v128 = vld [vmem:[#allocation6 + $0x88] sm:$0xff]
    %v129 = vld [vmem:[#allocation6 + $0x90] sm:$0xff]
    %v130 = vld [vmem:[#allocation6 + $0x98] sm:$0xff]
    %v131 = vld [vmem:[#allocation6 + $0xa0] sm:$0xff]
    %v132 = vld [vmem:[#allocation6 + $0xa8] sm:$0xff]
    %v133 = vld [vmem:[#allocation6 + $0xb0] sm:$0xff]
    %v134 = vld [vmem:[#allocation6 + $0xb8] sm:$0xff]
    %v135 = vld [vmem:[#allocation6 + $0xc0] sm:$0xff]
    %v136 = vld [vmem:[#allocation6 + $0xc8] sm:$0xff]
    %v137 = vld [vmem:[#allocation6 + $0xd0] sm:$0xff]
    %v138 = vld [vmem:[#allocation6 + $0xd8] sm:$0xff]
    %v139 = vld [vmem:[#allocation6 + $0xe0] sm:$0xff]
    %v140 = vld [vmem:[#allocation6 + $0xe8] sm:$0xff]
    %v141 = vld [vmem:[#allocation6 + $0xf0] sm:$0xff]
    %v142 = vld [vmem:[#allocation6 + $0xf8] sm:$0xff]
    %v143 = vld [vmem:[#allocation6 + $0x100] sm:$0xff]
    %v144 = vld [vmem:[#allocation6 + $0x108] sm:$0xff]
    %v145 = vld [vmem:[#allocation6 + $0x110] sm:$0xff]
    %v146 = vld [vmem:[#allocation6 + $0x118] sm:$0xff]
    %v147 = vld [vmem:[#allocation6 + $0x120] sm:$0xff]
    %v148 = vld [vmem:[#allocation6 + $0x128] sm:$0xff]
    %v149 = vld [vmem:[#allocation6 + $0x130] sm:$0xff]
    %v150 = vld [vmem:[#allocation6 + $0x138] sm:$0xff]
    %v151 = vld [vmem:[#allocation6 + $0x140] sm:$0xff]
    %v152 = vld [vmem:[#allocation6 + $0x148] sm:$0xff]
    %v153 = vld [vmem:[#allocation6 + $0x150] sm:$0xff]
    %v154 = vld [vmem:[#allocation6 + $0x158] sm:$0xff]
    %v155 = vld [vmem:[#allocation6 + $0x160] sm:$0xff]
    %v156 = vld [vmem:[#allocation6 + $0x168] sm:$0xff]
    %v157 = vld [vmem:[#allocation6 + $0x170] sm:$0xff]
    %v158 = vld [vmem:[#allocation6 + $0x178] sm:$0xff]
    %v159 = vld [vmem:[#allocation6 + $0x180] sm:$0xff]
    %v160 = vld [vmem:[#allocation6 + $0x188] sm:$0xff]
    %v161 = vld [vmem:[#allocation6 + $0x190] sm:$0xff]
    %v162 = vld [vmem:[#allocation6 + $0x198] sm:$0xff]
    %v163 = vld [vmem:[#allocation6 + $0x1a0] sm:$0xff]
    %v164 = vld [vmem:[#allocation6 + $0x1a8] sm:$0xff]
    %v165 = vld [vmem:[#allocation6 + $0x1b0] sm:$0xff]
    %v166 = vld [vmem:[#allocation6 + $0x1b8] sm:$0xff]
    %v167 = vld [vmem:[#allocation6 + $0x1c0] sm:$0xff]
    %v168 = vld [vmem:[#allocation6 + $0x1c8] sm:$0xff]
    %v169 = vld [vmem:[#allocation6 + $0x1d0] sm:$0xff]
    %v170 = vld [vmem:[#allocation6 + $0x1d8] sm:$0xff]
    %v171 = vld [vmem:[#allocation6 + $0x1e0] sm:$0xff]
    %v172 = vld [vmem:[#allocation6 + $0x1e8] sm:$0xff]
    %v173 = vld [vmem:[#allocation6 + $0x1f0] sm:$0xff]
    %v174 = vld [vmem:[#allocation6 + $0x1f8] sm:$0xff]
    %v175 = vld [vmem:[#allocation6 + $0x200] sm:$0xff]
    %v176 = vld [vmem:[#allocation6 + $0x208] sm:$0xff]
    %v177 = vld [vmem:[#allocation6 + $0x210] sm:$0xff]
    %v178 = vld [vmem:[#allocation6 + $0x218] sm:$0xff]
    %v179 = vld [vmem:[#allocation6 + $0x220] sm:$0xff]
    %v180 = vld [vmem:[#allocation6 + $0x228] sm:$0xff]
    %v181 = vld [vmem:[#allocation6 + $0x230] sm:$0xff]
    %v182 = vld [vmem:[#allocation6 + $0x238] sm:$0xff]
    %v183 = vld [vmem:[#allocation6 + $0x240] sm:$0xff]
    %v184 = vld [vmem:[#allocation6 + $0x248] sm:$0xff]
    %v185 = vld [vmem:[#allocation6 + $0x250] sm:$0xff]
    %v186 = vld [vmem:[#allocation6 + $0x258] sm:$0xff]
    %v187 = vld [vmem:[#allocation6 + $0x260] sm:$0xff]
    %v188 = vld [vmem:[#allocation6 + $0x268] sm:$0xff]
    %v189 = vld [vmem:[#allocation6 + $0x270] sm:$0xff]
    %v190 = vld [vmem:[#allocation6 + $0x278] sm:$0xff]
    %v191 = vld [vmem:[#allocation6 + $0x280] sm:$0xff]
    %v192 = vld [vmem:[#allocation6 + $0x288] sm:$0xff]
    %v193 = vld [vmem:[#allocation6 + $0x290] sm:$0xff]
    %v194 = vld [vmem:[#allocation6 + $0x298] sm:$0xff]
    %v195 = vld [vmem:[#allocation6 + $0x2a0] sm:$0xff]
    %v196 = vld [vmem:[#allocation6 + $0x2a8] sm:$0xff]
    %v197 = vld [vmem:[#allocation6 + $0x2b0] sm:$0xff]
    %v198 = vld [vmem:[#allocation6 + $0x2b8] sm:$0xff]
    %v199 = vld [vmem:[#allocation6 + $0x2c0] sm:$0xff]
    %v200 = vld [vmem:[#allocation6 + $0x2c8] sm:$0xff]
    %v201 = vld [vmem:[#allocation6 + $0x2d0] sm:$0xff]
    %v202 = vld [vmem:[#allocation6 + $0x2d8] sm:$0xff]
    %v203 = vld [vmem:[#allocation6 + $0x2e0] sm:$0xff]
    %v204 = vld [vmem:[#allocation6 + $0x2e8] sm:$0xff]
    %v205 = vld [vmem:[#allocation6 + $0x2f0] sm:$0xff]
    %v206 = vld [vmem:[#allocation6 + $0x2f8] sm:$0xff]
    %v207 = vld [vmem:[#allocation6 + $0x300] sm:$0xff]
    %v208 = vld [vmem:[#allocation6 + $0x308] sm:$0xff]
    %v209 = vld [vmem:[#allocation6 + $0x310] sm:$0xff]
    %v210 = vld [vmem:[#allocation6 + $0x318] sm:$0xff]
    %v211 = vld [vmem:[#allocation6 + $0x320] sm:$0xff]
    %v212 = vld [vmem:[#allocation6 + $0x328] sm:$0xff]
    %v213 = vld [vmem:[#allocation6 + $0x330] sm:$0xff]
    %v214 = vld [vmem:[#allocation6 + $0x338] sm:$0xff]
    %v215 = vld [vmem:[#allocation6 + $0x340] sm:$0xff]
    %v216 = vld [vmem:[#allocation6 + $0x348] sm:$0xff]
    %v217 = vld [vmem:[#allocation6 + $0x350] sm:$0xff]
    %v218 = vld [vmem:[#allocation6 + $0x358] sm:$0xff]
    %v219 = vld [vmem:[#allocation6 + $0x360] sm:$0xff]
    %v220 = vld [vmem:[#allocation6 + $0x368] sm:$0xff]
    %v221 = vld [vmem:[#allocation6 + $0x370] sm:$0xff]
    %v222 = vld [vmem:[#allocation6 + $0x378] sm:$0xff]
    %v223 = vld [vmem:[#allocation6 + $0x380] sm:$0xff]
    %v224 = vld [vmem:[#allocation6 + $0x388] sm:$0xff]
    %v225 = vld [vmem:[#allocation6 + $0x390] sm:$0xff]
    %v226 = vld [vmem:[#allocation6 + $0x398] sm:$0xff]
    %v227 = vld [vmem:[#allocation6 + $0x3a0] sm:$0xff]
    %v228 = vld [vmem:[#allocation6 + $0x3a8] sm:$0xff]
    %v229 = vld [vmem:[#allocation6 + $0x3b0] sm:$0xff]
    %v230 = vld [vmem:[#allocation6 + $0x3b8] sm:$0xff]
    %v231 = vld [vmem:[#allocation6 + $0x3c0] sm:$0xff]
    %v232 = vld [vmem:[#allocation6 + $0x3c8] sm:$0xff]
    %v233 = vld [vmem:[#allocation6 + $0x3d0] sm:$0xff]
    %v234 = vld [vmem:[#allocation6 + $0x3d8] sm:$0xff]
    %v235 = vld [vmem:[#allocation6 + $0x3e0] sm:$0xff]
    %v236 = vld [vmem:[#allocation6 + $0x3e8] sm:$0xff]
    %v237 = vld [vmem:[#allocation6 + $0x3f0] sm:$0xff]
    %v238 = vld [vmem:[#allocation6 + $0x3f8] sm:$0xff]
    %v239 = vld [vmem:[#allocation6 + $0x400] sm:$0xff]
    %v240 = vld [vmem:[#allocation6 + $0x408] sm:$0xff]
    %v241 = vld [vmem:[#allocation6 + $0x410] sm:$0xff]
    %v242 = vld [vmem:[#allocation6 + $0x418] sm:$0xff]
    %v243 = vld [vmem:[#allocation6 + $0x420] sm:$0xff]
    %v244 = vld [vmem:[#allocation6 + $0x428] sm:$0xff]
    %v245 = vld [vmem:[#allocation6 + $0x430] sm:$0xff]
    %v246 = vld [vmem:[#allocation6 + $0x438] sm:$0xff]
    %v247 = vld [vmem:[#allocation6 + $0x440] sm:$0xff]
    %v248 = vld [vmem:[#allocation6 + $0x448] sm:$0xff]
    %v249 = vld [vmem:[#allocation6 + $0x450] sm:$0xff]
    %v250 = vld [vmem:[#allocation6 + $0x458] sm:$0xff]
    %v251 = vld [vmem:[#allocation6 + $0x460] sm:$0xff]
    %v252 = vld [vmem:[#allocation6 + $0x468] sm:$0xff]
    %v253 = vld [vmem:[#allocation6 + $0x470] sm:$0xff]
    %v254 = vld [vmem:[#allocation6 + $0x478] sm:$0xff]
    %v255 = vld [vmem:[#allocation6 + $0x480] sm:$0xff]
    %v256 = vld [vmem:[#allocation6 + $0x488] sm:$0xff]
    %v257 = vld [vmem:[#allocation6 + $0x490] sm:$0xff]
    %v258 = vld [vmem:[#allocation6 + $0x498] sm:$0xff]
    %v259 = vld [vmem:[#allocation6 + $0x4a0] sm:$0xff]
    %v260 = vld [vmem:[#allocation6 + $0x4a8] sm:$0xff]
    %v261 = vld [vmem:[#allocation6 + $0x4b0] sm:$0xff]
    %v262 = vld [vmem:[#allocation6 + $0x4b8] sm:$0xff]
    %v263 = vld [vmem:[#allocation6 + $0x4c0] sm:$0xff]
    %v264 = vld [vmem:[#allocation6 + $0x4c8] sm:$0xff]
    %v265 = vld [vmem:[#allocation6 + $0x4d0] sm:$0xff]
    %v266 = vld [vmem:[#allocation6 + $0x4d8] sm:$0xff]
    %v267 = vld [vmem:[#allocation6 + $0x4e0] sm:$0xff]
    %v268 = vld [vmem:[#allocation6 + $0x4e8] sm:$0xff]
    %v269 = vld [vmem:[#allocation6 + $0x4f0] sm:$0xff]
    %v270 = vld [vmem:[#allocation6 + $0x4f8] sm:$0xff]
    %v271 = vld [vmem:[#allocation6 + $0x500] sm:$0xff]
    %v272 = vld [vmem:[#allocation6 + $0x508] sm:$0xff]
    %v273 = vld [vmem:[#allocation6 + $0x510] sm:$0xff]
    %v274 = vld [vmem:[#allocation6 + $0x518] sm:$0xff]
    %v275 = vld [vmem:[#allocation6 + $0x520] sm:$0xff]
    %v276 = vld [vmem:[#allocation6 + $0x528] sm:$0xff]
    %v277 = vld [vmem:[#allocation6 + $0x530] sm:$0xff]
    %v278 = vld [vmem:[#allocation6 + $0x538] sm:$0xff]
    %v279 = vld [vmem:[#allocation6 + $0x540] sm:$0xff]
    %v280 = vld [vmem:[#allocation6 + $0x548] sm:$0xff]
    %v281 = vld [vmem:[#allocation6 + $0x550] sm:$0xff]
    %v282 = vld [vmem:[#allocation6 + $0x558] sm:$0xff]
    %v283 = vld [vmem:[#allocation6 + $0x560] sm:$0xff]
    %v284 = vld [vmem:[#allocation6 + $0x568] sm:$0xff]
    %v285 = vld [vmem:[#allocation6 + $0x570] sm:$0xff]
    %v286 = vld [vmem:[#allocation6 + $0x578] sm:$0xff]
    %v287 = vld [vmem:[#allocation6 + $0x580] sm:$0xff]
    %v288 = vld [vmem:[#allocation6 + $0x588] sm:$0xff]
    %v289 = vld [vmem:[#allocation6 + $0x590] sm:$0xff]
    %v290 = vld [vmem:[#allocation6 + $0x598] sm:$0xff]
    %v291 = vld [vmem:[#allocation6 + $0x5a0] sm:$0xff]
    %v292 = vld [vmem:[#allocation6 + $0x5a8] sm:$0xff]
    %v293 = vld [vmem:[#allocation6 + $0x5b0] sm:$0xff]
    %v294 = vld [vmem:[#allocation6 + $0x5b8] sm:$0xff]
    %v295 = vld [vmem:[#allocation6 + $0x5c0] sm:$0xff]
    %v296 = vld [vmem:[#allocation6 + $0x5c8] sm:$0xff]
    %v297 = vld [vmem:[#allocation6 + $0x5d0] sm:$0xff]
    %v298 = vld [vmem:[#allocation6 + $0x5d8] sm:$0xff]
    %v299 = vld [vmem:[#allocation6 + $0x5e0] sm:$0xff]
    %v300 = vld [vmem:[#allocation6 + $0x5e8] sm:$0xff]
    %v301 = vld [vmem:[#allocation6 + $0x5f0] sm:$0xff]
    %v302 = vld [vmem:[#allocation6 + $0x5f8] sm:$0xff]
    %v303 = vld [vmem:[#allocation6 + $0x600] sm:$0xff]
    %v304 = vld [vmem:[#allocation6 + $0x608] sm:$0xff]
    %v305 = vld [vmem:[#allocation6 + $0x610] sm:$0xff]
    %v306 = vld [vmem:[#allocation6 + $0x618] sm:$0xff]
    %v307 = vld [vmem:[#allocation6 + $0x620] sm:$0xff]
    %v308 = vld [vmem:[#allocation6 + $0x628] sm:$0xff]
    %v309 = vld [vmem:[#allocation6 + $0x630] sm:$0xff]
    %v310 = vld [vmem:[#allocation6 + $0x638] sm:$0xff]
    %v311 = vld [vmem:[#allocation6 + $0x640] sm:$0xff]
    %v312 = vld [vmem:[#allocation6 + $0x648] sm:$0xff]
    %v313 = vld [vmem:[#allocation6 + $0x650] sm:$0xff]
    %v314 = vld [vmem:[#allocation6 + $0x658] sm:$0xff]
    %v315 = vld [vmem:[#allocation6 + $0x660] sm:$0xff]
    %v316 = vld [vmem:[#allocation6 + $0x668] sm:$0xff]
    %v317 = vld [vmem:[#allocation6 + $0x670] sm:$0xff]
    %v318 = vld [vmem:[#allocation6 + $0x678] sm:$0xff]
    %v319 = vld [vmem:[#allocation6 + $0x680] sm:$0xff]
    %v320 = vld [vmem:[#allocation6 + $0x688] sm:$0xff]
    %v321 = vld [vmem:[#allocation6 + $0x690] sm:$0xff]
    %v322 = vld [vmem:[#allocation6 + $0x698] sm:$0xff]
    %v323 = vld [vmem:[#allocation6 + $0x6a0] sm:$0xff]
    %v324 = vld [vmem:[#allocation6 + $0x6a8] sm:$0xff]
    %v325 = vld [vmem:[#allocation6 + $0x6b0] sm:$0xff]
    %v326 = vld [vmem:[#allocation6 + $0x6b8] sm:$0xff]
    %v327 = vld [vmem:[#allocation6 + $0x6c0] sm:$0xff]
    %v328 = vld [vmem:[#allocation6 + $0x6c8] sm:$0xff]
    %v329 = vld [vmem:[#allocation6 + $0x6d0] sm:$0xff]
    %v330 = vld [vmem:[#allocation6 + $0x6d8] sm:$0xff]
    %v331 = vld [vmem:[#allocation6 + $0x6e0] sm:$0xff]
    %v332 = vld [vmem:[#allocation6 + $0x6e8] sm:$0xff]
    %v333 = vld [vmem:[#allocation6 + $0x6f0] sm:$0xff]
    %v334 = vld [vmem:[#allocation6 + $0x6f8] sm:$0xff]
    %v335 = vld [vmem:[#allocation6 + $0x700] sm:$0xff]
    %v336 = vld [vmem:[#allocation6 + $0x708] sm:$0xff]
    %v337 = vld [vmem:[#allocation6 + $0x710] sm:$0xff]
    %v338 = vld [vmem:[#allocation6 + $0x718] sm:$0xff]
    %v339 = vld [vmem:[#allocation6 + $0x720] sm:$0xff]
    %v340 = vld [vmem:[#allocation6 + $0x728] sm:$0xff]
    %v341 = vld [vmem:[#allocation6 + $0x730] sm:$0xff]
    %v342 = vld [vmem:[#allocation6 + $0x738] sm:$0xff]
    %v343 = vld [vmem:[#allocation6 + $0x740] sm:$0xff]
    %v344 = vld [vmem:[#allocation6 + $0x748] sm:$0xff]
    %v345 = vld [vmem:[#allocation6 + $0x750] sm:$0xff]
    %v346 = vld [vmem:[#allocation6 + $0x758] sm:$0xff]
    %v347 = vld [vmem:[#allocation6 + $0x760] sm:$0xff]
    %v348 = vld [vmem:[#allocation6 + $0x768] sm:$0xff]
    %v349 = vld [vmem:[#allocation6 + $0x770] sm:$0xff]
    %v350 = vld [vmem:[#allocation6 + $0x778] sm:$0xff]
    %v351 = vld [vmem:[#allocation6 + $0x780] sm:$0xff]
    %v352 = vld [vmem:[#allocation6 + $0x788] sm:$0xff]
    %v353 = vld [vmem:[#allocation6 + $0x790] sm:$0xff]
    %v354 = vld [vmem:[#allocation6 + $0x798] sm:$0xff]
    %v355 = vld [vmem:[#allocation6 + $0x7a0] sm:$0xff]
    %v356 = vld [vmem:[#allocation6 + $0x7a8] sm:$0xff]
    %v357 = vld [vmem:[#allocation6 + $0x7b0] sm:$0xff]
    %v358 = vld [vmem:[#allocation6 + $0x7b8] sm:$0xff]
    %v359 = vld [vmem:[#allocation6 + $0x7c0] sm:$0xff]
    %v360 = vld [vmem:[#allocation6 + $0x7c8] sm:$0xff]
    %v361 = vld [vmem:[#allocation6 + $0x7d0] sm:$0xff]
    %v362 = vld [vmem:[#allocation6 + $0x7d8] sm:$0xff]
    %v363 = vld [vmem:[#allocation6 + $0x7e0] sm:$0xff]
    %v364 = vld [vmem:[#allocation6 + $0x7e8] sm:$0xff]
    %v365 = vld [vmem:[#allocation6 + $0x7f0] sm:$0xff]
    %v366 = vld [vmem:[#allocation6 + $0x7f8] sm:$0xff]
    %v375 = vunpack.c.l.b16 %v103
    %v376 = vunpack.c.h.b16 %v103
    %v377 = vunpack.c.l.b16 %v104
    %v378 = vunpack.c.h.b16 %v104
    %v379 = vunpack.c.l.b16 %v105
    %v380 = vunpack.c.h.b16 %v105
    %v381 = vunpack.c.l.b16 %v106
    %v382 = vunpack.c.h.b16 %v106
    %v383 = vunpack.c.l.b16 %v107
    %v384 = vunpack.c.h.b16 %v107
    %v385 = vunpack.c.l.b16 %v108
    %v386 = vunpack.c.h.b16 %v108
    %v387 = vunpack.c.l.b16 %v109
    %v388 = vunpack.c.h.b16 %v109
    %v389 = vunpack.c.l.b16 %v110
    %v390 = vunpack.c.h.b16 %v110
    %v391 = vpack.c.b16 %v383, %v375
    %v392 = vpack.c.b16 %v384, %v376
    %v393 = vpack.c.b16 %v385, %v377
    %v394 = vpack.c.b16 %v386, %v378
    %v395 = vpack.c.b16 %v387, %v379
    %v396 = vpack.c.b16 %v388, %v380
    %v397 = vpack.c.b16 %v389, %v381
    %v398 = vpack.c.b16 %v390, %v382
    %v663 = vunpack.c.l.b16 %v111
    %v664 = vunpack.c.h.b16 %v111
    %v665 = vunpack.c.l.b16 %v112
    %v666 = vunpack.c.h.b16 %v112
    %v667 = vunpack.c.l.b16 %v113
    %v668 = vunpack.c.h.b16 %v113
    %v669 = vunpack.c.l.b16 %v114
    %v670 = vunpack.c.h.b16 %v114
    %v671 = vunpack.c.l.b16 %v115
    %v672 = vunpack.c.h.b16 %v115
    %v673 = vunpack.c.l.b16 %v116
    %v674 = vunpack.c.h.b16 %v116
    %v675 = vunpack.c.l.b16 %v117
    %v676 = vunpack.c.h.b16 %v117
    %v677 = vunpack.c.l.b16 %v118
    %v678 = vunpack.c.h.b16 %v118
    %v679 = vunpack.c.l.b16 %v119
    %v680 = vunpack.c.h.b16 %v119
    %v681 = vunpack.c.l.b16 %v120
    %v682 = vunpack.c.h.b16 %v120
    %v683 = vunpack.c.l.b16 %v121
    %v684 = vunpack.c.h.b16 %v121
    %v685 = vunpack.c.l.b16 %v122
    %v686 = vunpack.c.h.b16 %v122
    %v687 = vunpack.c.l.b16 %v123
    %v688 = vunpack.c.h.b16 %v123
    %v689 = vunpack.c.l.b16 %v124
    %v690 = vunpack.c.h.b16 %v124
    %v691 = vunpack.c.l.b16 %v125
    %v692 = vunpack.c.h.b16 %v125
    %v693 = vunpack.c.l.b16 %v126
    %v694 = vunpack.c.h.b16 %v126
    %v695 = vunpack.c.l.b16 %v127
    %v696 = vunpack.c.h.b16 %v127
    %v697 = vunpack.c.l.b16 %v128
    %v698 = vunpack.c.h.b16 %v128
    %v699 = vunpack.c.l.b16 %v129
    %v700 = vunpack.c.h.b16 %v129
    %v701 = vunpack.c.l.b16 %v130
    %v702 = vunpack.c.h.b16 %v130
    %v703 = vunpack.c.l.b16 %v131
    %v704 = vunpack.c.h.b16 %v131
    %v705 = vunpack.c.l.b16 %v132
    %v706 = vunpack.c.h.b16 %v132
    %v707 = vunpack.c.l.b16 %v133
    %v708 = vunpack.c.h.b16 %v133
    %v709 = vunpack.c.l.b16 %v134
    %v710 = vunpack.c.h.b16 %v134
    %v711 = vunpack.c.l.b16 %v135
    %v712 = vunpack.c.h.b16 %v135
    %v713 = vunpack.c.l.b16 %v136
    %v714 = vunpack.c.h.b16 %v136
    %v715 = vunpack.c.l.b16 %v137
    %v716 = vunpack.c.h.b16 %v137
    %v717 = vunpack.c.l.b16 %v138
    %v718 = vunpack.c.h.b16 %v138
    %v719 = vunpack.c.l.b16 %v139
    %v720 = vunpack.c.h.b16 %v139
    %v721 = vunpack.c.l.b16 %v140
    %v722 = vunpack.c.h.b16 %v140
    %v723 = vunpack.c.l.b16 %v141
    %v724 = vunpack.c.h.b16 %v141
    %v725 = vunpack.c.l.b16 %v142
    %v726 = vunpack.c.h.b16 %v142
    %v727 = vunpack.c.l.b16 %v143
    %v728 = vunpack.c.h.b16 %v143
    %v729 = vunpack.c.l.b16 %v144
    %v730 = vunpack.c.h.b16 %v144
    %v731 = vunpack.c.l.b16 %v145
    %v732 = vunpack.c.h.b16 %v145
    %v733 = vunpack.c.l.b16 %v146
    %v734 = vunpack.c.h.b16 %v146
    %v735 = vunpack.c.l.b16 %v147
    %v736 = vunpack.c.h.b16 %v147
    %v737 = vunpack.c.l.b16 %v148
    %v738 = vunpack.c.h.b16 %v148
    %v739 = vunpack.c.l.b16 %v149
    %v740 = vunpack.c.h.b16 %v149
    %v741 = vunpack.c.l.b16 %v150
    %v742 = vunpack.c.h.b16 %v150
    %v743 = vunpack.c.l.b16 %v151
    %v744 = vunpack.c.h.b16 %v151
    %v745 = vunpack.c.l.b16 %v152
    %v746 = vunpack.c.h.b16 %v152
    %v747 = vunpack.c.l.b16 %v153
    %v748 = vunpack.c.h.b16 %v153
    %v749 = vunpack.c.l.b16 %v154
    %v750 = vunpack.c.h.b16 %v154
    %v751 = vunpack.c.l.b16 %v155
    %v752 = vunpack.c.h.b16 %v155
    %v753 = vunpack.c.l.b16 %v156
    %v754 = vunpack.c.h.b16 %v156
    %v755 = vunpack.c.l.b16 %v157
    %v756 = vunpack.c.h.b16 %v157
    %v757 = vunpack.c.l.b16 %v158
    %v758 = vunpack.c.h.b16 %v158
    %v759 = vunpack.c.l.b16 %v159
    %v760 = vunpack.c.h.b16 %v159
    %v761 = vunpack.c.l.b16 %v160
    %v762 = vunpack.c.h.b16 %v160
    %v763 = vunpack.c.l.b16 %v161
    %v764 = vunpack.c.h.b16 %v161
    %v765 = vunpack.c.l.b16 %v162
    %v766 = vunpack.c.h.b16 %v162
    %v767 = vunpack.c.l.b16 %v163
    %v768 = vunpack.c.h.b16 %v163
    %v769 = vunpack.c.l.b16 %v164
    %v770 = vunpack.c.h.b16 %v164
    %v771 = vunpack.c.l.b16 %v165
    %v772 = vunpack.c.h.b16 %v165
    %v773 = vunpack.c.l.b16 %v166
    %v774 = vunpack.c.h.b16 %v166
    %v775 = vunpack.c.l.b16 %v167
    %v776 = vunpack.c.h.b16 %v167
    %v777 = vunpack.c.l.b16 %v168
    %v778 = vunpack.c.h.b16 %v168
    %v779 = vunpack.c.l.b16 %v169
    %v780 = vunpack.c.h.b16 %v169
    %v781 = vunpack.c.l.b16 %v170
    %v782 = vunpack.c.h.b16 %v170
    %v783 = vunpack.c.l.b16 %v171
    %v784 = vunpack.c.h.b16 %v171
    %v785 = vunpack.c.l.b16 %v172
    %v786 = vunpack.c.h.b16 %v172
    %v787 = vunpack.c.l.b16 %v173
    %v788 = vunpack.c.h.b16 %v173
    %v789 = vunpack.c.l.b16 %v174
    %v790 = vunpack.c.h.b16 %v174
    %v791 = vunpack.c.l.b16 %v175
    %v792 = vunpack.c.h.b16 %v175
    %v793 = vunpack.c.l.b16 %v176
    %v794 = vunpack.c.h.b16 %v176
    %v795 = vunpack.c.l.b16 %v177
    %v796 = vunpack.c.h.b16 %v177
    %v797 = vunpack.c.l.b16 %v178
    %v798 = vunpack.c.h.b16 %v178
    %v799 = vunpack.c.l.b16 %v179
    %v800 = vunpack.c.h.b16 %v179
    %v801 = vunpack.c.l.b16 %v180
    %v802 = vunpack.c.h.b16 %v180
    %v803 = vunpack.c.l.b16 %v181
    %v804 = vunpack.c.h.b16 %v181
    %v805 = vunpack.c.l.b16 %v182
    %v806 = vunpack.c.h.b16 %v182
    %v807 = vunpack.c.l.b16 %v183
    %v808 = vunpack.c.h.b16 %v183
    %v809 = vunpack.c.l.b16 %v184
    %v810 = vunpack.c.h.b16 %v184
    %v811 = vunpack.c.l.b16 %v185
    %v812 = vunpack.c.h.b16 %v185
    %v813 = vunpack.c.l.b16 %v186
    %v814 = vunpack.c.h.b16 %v186
    %v815 = vunpack.c.l.b16 %v187
    %v816 = vunpack.c.h.b16 %v187
    %v817 = vunpack.c.l.b16 %v188
    %v818 = vunpack.c.h.b16 %v188
    %v819 = vunpack.c.l.b16 %v189
    %v820 = vunpack.c.h.b16 %v189
    %v821 = vunpack.c.l.b16 %v190
    %v822 = vunpack.c.h.b16 %v190
    %v823 = vunpack.c.l.b16 %v191
    %v824 = vunpack.c.h.b16 %v191
    %v825 = vunpack.c.l.b16 %v192
    %v826 = vunpack.c.h.b16 %v192
    %v827 = vunpack.c.l.b16 %v193
    %v828 = vunpack.c.h.b16 %v193
    %v829 = vunpack.c.l.b16 %v194
    %v830 = vunpack.c.h.b16 %v194
    %v831 = vunpack.c.l.b16 %v195
    %v832 = vunpack.c.h.b16 %v195
    %v833 = vunpack.c.l.b16 %v196
    %v834 = vunpack.c.h.b16 %v196
    %v835 = vunpack.c.l.b16 %v197
    %v836 = vunpack.c.h.b16 %v197
    %v837 = vunpack.c.l.b16 %v198
    %v838 = vunpack.c.h.b16 %v198
    %v839 = vunpack.c.l.b16 %v199
    %v840 = vunpack.c.h.b16 %v199
    %v841 = vunpack.c.l.b16 %v200
    %v842 = vunpack.c.h.b16 %v200
    %v843 = vunpack.c.l.b16 %v201
    %v844 = vunpack.c.h.b16 %v201
    %v845 = vunpack.c.l.b16 %v202
    %v846 = vunpack.c.h.b16 %v202
    %v847 = vunpack.c.l.b16 %v203
    %v848 = vunpack.c.h.b16 %v203
    %v849 = vunpack.c.l.b16 %v204
    %v850 = vunpack.c.h.b16 %v204
    %v851 = vunpack.c.l.b16 %v205
    %v852 = vunpack.c.h.b16 %v205
    %v853 = vunpack.c.l.b16 %v206
    %v854 = vunpack.c.h.b16 %v206
    %v855 = vunpack.c.l.b16 %v207
    %v856 = vunpack.c.h.b16 %v207
    %v857 = vunpack.c.l.b16 %v208
    %v858 = vunpack.c.h.b16 %v208
    %v859 = vunpack.c.l.b16 %v209
    %v860 = vunpack.c.h.b16 %v209
    %v861 = vunpack.c.l.b16 %v210
    %v862 = vunpack.c.h.b16 %v210
    %v863 = vunpack.c.l.b16 %v211
    %v864 = vunpack.c.h.b16 %v211
    %v865 = vunpack.c.l.b16 %v212
    %v866 = vunpack.c.h.b16 %v212
    %v867 = vunpack.c.l.b16 %v213
    %v868 = vunpack.c.h.b16 %v213
    %v869 = vunpack.c.l.b16 %v214
    %v870 = vunpack.c.h.b16 %v214
    %v871 = vunpack.c.l.b16 %v215
    %v872 = vunpack.c.h.b16 %v215
    %v873 = vunpack.c.l.b16 %v216
    %v874 = vunpack.c.h.b16 %v216
    %v875 = vunpack.c.l.b16 %v217
    %v876 = vunpack.c.h.b16 %v217
    %v877 = vunpack.c.l.b16 %v218
    %v878 = vunpack.c.h.b16 %v218
    %v879 = vunpack.c.l.b16 %v219
    %v880 = vunpack.c.h.b16 %v219
    %v881 = vunpack.c.l.b16 %v220
    %v882 = vunpack.c.h.b16 %v220
    %v883 = vunpack.c.l.b16 %v221
    %v884 = vunpack.c.h.b16 %v221
    %v885 = vunpack.c.l.b16 %v222
    %v886 = vunpack.c.h.b16 %v222
    %v887 = vunpack.c.l.b16 %v223
    %v888 = vunpack.c.h.b16 %v223
    %v889 = vunpack.c.l.b16 %v224
    %v890 = vunpack.c.h.b16 %v224
    %v891 = vunpack.c.l.b16 %v225
    %v892 = vunpack.c.h.b16 %v225
    %v893 = vunpack.c.l.b16 %v226
    %v894 = vunpack.c.h.b16 %v226
    %v895 = vunpack.c.l.b16 %v227
    %v896 = vunpack.c.h.b16 %v227
    %v897 = vunpack.c.l.b16 %v228
    %v898 = vunpack.c.h.b16 %v228
    %v899 = vunpack.c.l.b16 %v229
    %v900 = vunpack.c.h.b16 %v229
    %v901 = vunpack.c.l.b16 %v230
    %v902 = vunpack.c.h.b16 %v230
    %v903 = vunpack.c.l.b16 %v231
    %v904 = vunpack.c.h.b16 %v231
    %v905 = vunpack.c.l.b16 %v232
    %v906 = vunpack.c.h.b16 %v232
    %v907 = vunpack.c.l.b16 %v233
    %v908 = vunpack.c.h.b16 %v233
    %v909 = vunpack.c.l.b16 %v234
    %v910 = vunpack.c.h.b16 %v234
    %v911 = vunpack.c.l.b16 %v235
    %v912 = vunpack.c.h.b16 %v235
    %v913 = vunpack.c.l.b16 %v236
    %v914 = vunpack.c.h.b16 %v236
    %v915 = vunpack.c.l.b16 %v237
    %v916 = vunpack.c.h.b16 %v237
    %v917 = vunpack.c.l.b16 %v238
    %v918 = vunpack.c.h.b16 %v238
    %v919 = vunpack.c.l.b16 %v239
    %v920 = vunpack.c.h.b16 %v239
    %v921 = vunpack.c.l.b16 %v240
    %v922 = vunpack.c.h.b16 %v240
    %v923 = vunpack.c.l.b16 %v241
    %v924 = vunpack.c.h.b16 %v241
    %v925 = vunpack.c.l.b16 %v242
    %v926 = vunpack.c.h.b16 %v242
    %v927 = vunpack.c.l.b16 %v243
    %v928 = vunpack.c.h.b16 %v243
    %v929 = vunpack.c.l.b16 %v244
    %v930 = vunpack.c.h.b16 %v244
    %v931 = vunpack.c.l.b16 %v245
    %v932 = vunpack.c.h.b16 %v245
    %v933 = vunpack.c.l.b16 %v246
    %v934 = vunpack.c.h.b16 %v246
    %v935 = vunpack.c.l.b16 %v247
    %v936 = vunpack.c.h.b16 %v247
    %v937 = vunpack.c.l.b16 %v248
    %v938 = vunpack.c.h.b16 %v248
    %v939 = vunpack.c.l.b16 %v249
    %v940 = vunpack.c.h.b16 %v249
    %v941 = vunpack.c.l.b16 %v250
    %v942 = vunpack.c.h.b16 %v250
    %v943 = vunpack.c.l.b16 %v251
    %v944 = vunpack.c.h.b16 %v251
    %v945 = vunpack.c.l.b16 %v252
    %v946 = vunpack.c.h.b16 %v252
    %v947 = vunpack.c.l.b16 %v253
    %v948 = vunpack.c.h.b16 %v253
    %v949 = vunpack.c.l.b16 %v254
    %v950 = vunpack.c.h.b16 %v254
    %v951 = vunpack.c.l.b16 %v255
    %v952 = vunpack.c.h.b16 %v255
    %v953 = vunpack.c.l.b16 %v256
    %v954 = vunpack.c.h.b16 %v256
    %v955 = vunpack.c.l.b16 %v257
    %v956 = vunpack.c.h.b16 %v257
    %v957 = vunpack.c.l.b16 %v258
    %v958 = vunpack.c.h.b16 %v258
    %v959 = vunpack.c.l.b16 %v259
    %v960 = vunpack.c.h.b16 %v259
    %v961 = vunpack.c.l.b16 %v260
    %v962 = vunpack.c.h.b16 %v260
    %v963 = vunpack.c.l.b16 %v261
    %v964 = vunpack.c.h.b16 %v261
    %v965 = vunpack.c.l.b16 %v262
    %v966 = vunpack.c.h.b16 %v262
    %v967 = vunpack.c.l.b16 %v263
    %v968 = vunpack.c.h.b16 %v263
    %v969 = vunpack.c.l.b16 %v264
    %v970 = vunpack.c.h.b16 %v264
    %v971 = vunpack.c.l.b16 %v265
    %v972 = vunpack.c.h.b16 %v265
    %v973 = vunpack.c.l.b16 %v266
    %v974 = vunpack.c.h.b16 %v266
    %v975 = vunpack.c.l.b16 %v267
    %v976 = vunpack.c.h.b16 %v267
    %v977 = vunpack.c.l.b16 %v268
    %v978 = vunpack.c.h.b16 %v268
    %v979 = vunpack.c.l.b16 %v269
    %v980 = vunpack.c.h.b16 %v269
    %v981 = vunpack.c.l.b16 %v270
    %v982 = vunpack.c.h.b16 %v270
    %v983 = vunpack.c.l.b16 %v271
    %v984 = vunpack.c.h.b16 %v271
    %v985 = vunpack.c.l.b16 %v272
    %v986 = vunpack.c.h.b16 %v272
    %v987 = vunpack.c.l.b16 %v273
    %v988 = vunpack.c.h.b16 %v273
    %v989 = vunpack.c.l.b16 %v274
    %v990 = vunpack.c.h.b16 %v274
    %v991 = vunpack.c.l.b16 %v275
    %v992 = vunpack.c.h.b16 %v275
    %v993 = vunpack.c.l.b16 %v276
    %v994 = vunpack.c.h.b16 %v276
    %v995 = vunpack.c.l.b16 %v277
    %v996 = vunpack.c.h.b16 %v277
    %v997 = vunpack.c.l.b16 %v278
    %v998 = vunpack.c.h.b16 %v278
    %v999 = vunpack.c.l.b16 %v279
    %v1000 = vunpack.c.h.b16 %v279
    %v1001 = vunpack.c.l.b16 %v280
    %v1002 = vunpack.c.h.b16 %v280
    %v1003 = vunpack.c.l.b16 %v281
    %v1004 = vunpack.c.h.b16 %v281
    %v1005 = vunpack.c.l.b16 %v282
    %v1006 = vunpack.c.h.b16 %v282
    %v1007 = vunpack.c.l.b16 %v283
    %v1008 = vunpack.c.h.b16 %v283
    %v1009 = vunpack.c.l.b16 %v284
    %v1010 = vunpack.c.h.b16 %v284
    %v1011 = vunpack.c.l.b16 %v285
    %v1012 = vunpack.c.h.b16 %v285
    %v1013 = vunpack.c.l.b16 %v286
    %v1014 = vunpack.c.h.b16 %v286
    %v1015 = vunpack.c.l.b16 %v287
    %v1016 = vunpack.c.h.b16 %v287
    %v1017 = vunpack.c.l.b16 %v288
    %v1018 = vunpack.c.h.b16 %v288
    %v1019 = vunpack.c.l.b16 %v289
    %v1020 = vunpack.c.h.b16 %v289
    %v1021 = vunpack.c.l.b16 %v290
    %v1022 = vunpack.c.h.b16 %v290
    %v1023 = vunpack.c.l.b16 %v291
    %v1024 = vunpack.c.h.b16 %v291
    %v1025 = vunpack.c.l.b16 %v292
    %v1026 = vunpack.c.h.b16 %v292
    %v1027 = vunpack.c.l.b16 %v293
    %v1028 = vunpack.c.h.b16 %v293
    %v1029 = vunpack.c.l.b16 %v294
    %v1030 = vunpack.c.h.b16 %v294
    %v1031 = vunpack.c.l.b16 %v295
    %v1032 = vunpack.c.h.b16 %v295
    %v1033 = vunpack.c.l.b16 %v296
    %v1034 = vunpack.c.h.b16 %v296
    %v1035 = vunpack.c.l.b16 %v297
    %v1036 = vunpack.c.h.b16 %v297
    %v1037 = vunpack.c.l.b16 %v298
    %v1038 = vunpack.c.h.b16 %v298
    %v1039 = vunpack.c.l.b16 %v299
    %v1040 = vunpack.c.h.b16 %v299
    %v1041 = vunpack.c.l.b16 %v300
    %v1042 = vunpack.c.h.b16 %v300
    %v1043 = vunpack.c.l.b16 %v301
    %v1044 = vunpack.c.h.b16 %v301
    %v1045 = vunpack.c.l.b16 %v302
    %v1046 = vunpack.c.h.b16 %v302
    %v1047 = vunpack.c.l.b16 %v303
    %v1048 = vunpack.c.h.b16 %v303
    %v1049 = vunpack.c.l.b16 %v304
    %v1050 = vunpack.c.h.b16 %v304
    %v1051 = vunpack.c.l.b16 %v305
    %v1052 = vunpack.c.h.b16 %v305
    %v1053 = vunpack.c.l.b16 %v306
    %v1054 = vunpack.c.h.b16 %v306
    %v1055 = vunpack.c.l.b16 %v307
    %v1056 = vunpack.c.h.b16 %v307
    %v1057 = vunpack.c.l.b16 %v308
    %v1058 = vunpack.c.h.b16 %v308
    %v1059 = vunpack.c.l.b16 %v309
    %v1060 = vunpack.c.h.b16 %v309
    %v1061 = vunpack.c.l.b16 %v310
    %v1062 = vunpack.c.h.b16 %v310
    %v1063 = vunpack.c.l.b16 %v311
    %v1064 = vunpack.c.h.b16 %v311
    %v1065 = vunpack.c.l.b16 %v312
    %v1066 = vunpack.c.h.b16 %v312
    %v1067 = vunpack.c.l.b16 %v313
    %v1068 = vunpack.c.h.b16 %v313
    %v1069 = vunpack.c.l.b16 %v314
    %v1070 = vunpack.c.h.b16 %v314
    %v1071 = vunpack.c.l.b16 %v315
    %v1072 = vunpack.c.h.b16 %v315
    %v1073 = vunpack.c.l.b16 %v316
    %v1074 = vunpack.c.h.b16 %v316
    %v1075 = vunpack.c.l.b16 %v317
    %v1076 = vunpack.c.h.b16 %v317
    %v1077 = vunpack.c.l.b16 %v318
    %v1078 = vunpack.c.h.b16 %v318
    %v1079 = vunpack.c.l.b16 %v319
    %v1080 = vunpack.c.h.b16 %v319
    %v1081 = vunpack.c.l.b16 %v320
    %v1082 = vunpack.c.h.b16 %v320
    %v1083 = vunpack.c.l.b16 %v321
    %v1084 = vunpack.c.h.b16 %v321
    %v1085 = vunpack.c.l.b16 %v322
    %v1086 = vunpack.c.h.b16 %v322
    %v1087 = vunpack.c.l.b16 %v323
    %v1088 = vunpack.c.h.b16 %v323
    %v1089 = vunpack.c.l.b16 %v324
    %v1090 = vunpack.c.h.b16 %v324
    %v1091 = vunpack.c.l.b16 %v325
    %v1092 = vunpack.c.h.b16 %v325
    %v1093 = vunpack.c.l.b16 %v326
    %v1094 = vunpack.c.h.b16 %v326
    %v1095 = vunpack.c.l.b16 %v327
    %v1096 = vunpack.c.h.b16 %v327
    %v1097 = vunpack.c.l.b16 %v328
    %v1098 = vunpack.c.h.b16 %v328
    %v1099 = vunpack.c.l.b16 %v329
    %v1100 = vunpack.c.h.b16 %v329
    %v1101 = vunpack.c.l.b16 %v330
    %v1102 = vunpack.c.h.b16 %v330
    %v1103 = vunpack.c.l.b16 %v331
    %v1104 = vunpack.c.h.b16 %v331
    %v1105 = vunpack.c.l.b16 %v332
    %v1106 = vunpack.c.h.b16 %v332
    %v1107 = vunpack.c.l.b16 %v333
    %v1108 = vunpack.c.h.b16 %v333
    %v1109 = vunpack.c.l.b16 %v334
    %v1110 = vunpack.c.h.b16 %v334
    %v1111 = vunpack.c.l.b16 %v335
    %v1112 = vunpack.c.h.b16 %v335
    %v1113 = vunpack.c.l.b16 %v336
    %v1114 = vunpack.c.h.b16 %v336
    %v1115 = vunpack.c.l.b16 %v337
    %v1116 = vunpack.c.h.b16 %v337
    %v1117 = vunpack.c.l.b16 %v338
    %v1118 = vunpack.c.h.b16 %v338
    %v1119 = vunpack.c.l.b16 %v339
    %v1120 = vunpack.c.h.b16 %v339
    %v1121 = vunpack.c.l.b16 %v340
    %v1122 = vunpack.c.h.b16 %v340
    %v1123 = vunpack.c.l.b16 %v341
    %v1124 = vunpack.c.h.b16 %v341
    %v1125 = vunpack.c.l.b16 %v342
    %v1126 = vunpack.c.h.b16 %v342
    %v1127 = vunpack.c.l.b16 %v343
    %v1128 = vunpack.c.h.b16 %v343
    %v1129 = vunpack.c.l.b16 %v344
    %v1130 = vunpack.c.h.b16 %v344
    %v1131 = vunpack.c.l.b16 %v345
    %v1132 = vunpack.c.h.b16 %v345
    %v1133 = vunpack.c.l.b16 %v346
    %v1134 = vunpack.c.h.b16 %v346
    %v1135 = vunpack.c.l.b16 %v347
    %v1136 = vunpack.c.h.b16 %v347
    %v1137 = vunpack.c.l.b16 %v348
    %v1138 = vunpack.c.h.b16 %v348
    %v1139 = vunpack.c.l.b16 %v349
    %v1140 = vunpack.c.h.b16 %v349
    %v1141 = vunpack.c.l.b16 %v350
    %v1142 = vunpack.c.h.b16 %v350
    %v1143 = vunpack.c.l.b16 %v351
    %v1144 = vunpack.c.h.b16 %v351
    %v1145 = vunpack.c.l.b16 %v352
    %v1146 = vunpack.c.h.b16 %v352
    %v1147 = vunpack.c.l.b16 %v353
    %v1148 = vunpack.c.h.b16 %v353
    %v1149 = vunpack.c.l.b16 %v354
    %v1150 = vunpack.c.h.b16 %v354
    %v1151 = vunpack.c.l.b16 %v355
    %v1152 = vunpack.c.h.b16 %v355
    %v1153 = vunpack.c.l.b16 %v356
    %v1154 = vunpack.c.h.b16 %v356
    %v1155 = vunpack.c.l.b16 %v357
    %v1156 = vunpack.c.h.b16 %v357
    %v1157 = vunpack.c.l.b16 %v358
    %v1158 = vunpack.c.h.b16 %v358
    %v1159 = vunpack.c.l.b16 %v359
    %v1160 = vunpack.c.h.b16 %v359
    %v1161 = vunpack.c.l.b16 %v360
    %v1162 = vunpack.c.h.b16 %v360
    %v1163 = vunpack.c.l.b16 %v361
    %v1164 = vunpack.c.h.b16 %v361
    %v1165 = vunpack.c.l.b16 %v362
    %v1166 = vunpack.c.h.b16 %v362
    %v1167 = vunpack.c.l.b16 %v363
    %v1168 = vunpack.c.h.b16 %v363
    %v1169 = vunpack.c.l.b16 %v364
    %v1170 = vunpack.c.h.b16 %v364
    %v1171 = vunpack.c.l.b16 %v365
    %v1172 = vunpack.c.h.b16 %v365
    %v1173 = vunpack.c.l.b16 %v366
    %v1174 = vunpack.c.h.b16 %v366
    %v1175 = vpack.c.b16 %v667, %v663
    %v1176 = vpack.c.b16 %v668, %v664
    %v1177 = vpack.c.b16 %v669, %v665
    %v1178 = vpack.c.b16 %v670, %v666
    %v1179 = vpack.c.b16 %v675, %v671
    %v1180 = vpack.c.b16 %v676, %v672
    %v1181 = vpack.c.b16 %v677, %v673
    %v1182 = vpack.c.b16 %v678, %v674
    %v1183 = vpack.c.b16 %v683, %v679
    %v1184 = vpack.c.b16 %v684, %v680
    %v1185 = vpack.c.b16 %v685, %v681
    %v1186 = vpack.c.b16 %v686, %v682
    %v1187 = vpack.c.b16 %v691, %v687
    %v1188 = vpack.c.b16 %v692, %v688
    %v1189 = vpack.c.b16 %v693, %v689
    %v1190 = vpack.c.b16 %v694, %v690
    %v1191 = vpack.c.b16 %v699, %v695
    %v1192 = vpack.c.b16 %v700, %v696
    %v1193 = vpack.c.b16 %v701, %v697
    %v1194 = vpack.c.b16 %v702, %v698
    %v1195 = vpack.c.b16 %v707, %v703
    %v1196 = vpack.c.b16 %v708, %v704
    %v1197 = vpack.c.b16 %v709, %v705
    %v1198 = vpack.c.b16 %v710, %v706
    %v1199 = vpack.c.b16 %v715, %v711
    %v1200 = vpack.c.b16 %v716, %v712
    %v1201 = vpack.c.b16 %v717, %v713
    %v1202 = vpack.c.b16 %v718, %v714
    %v1203 = vpack.c.b16 %v723, %v719
    %v1204 = vpack.c.b16 %v724, %v720
    %v1205 = vpack.c.b16 %v725, %v721
    %v1206 = vpack.c.b16 %v726, %v722
    %v1207 = vpack.c.b16 %v731, %v727
    %v1208 = vpack.c.b16 %v732, %v728
    %v1209 = vpack.c.b16 %v733, %v729
    %v1210 = vpack.c.b16 %v734, %v730
    %v1211 = vpack.c.b16 %v739, %v735
    %v1212 = vpack.c.b16 %v740, %v736
    %v1213 = vpack.c.b16 %v741, %v737
    %v1214 = vpack.c.b16 %v742, %v738
    %v1215 = vpack.c.b16 %v747, %v743
    %v1216 = vpack.c.b16 %v748, %v744
    %v1217 = vpack.c.b16 %v749, %v745
    %v1218 = vpack.c.b16 %v750, %v746
    %v1219 = vpack.c.b16 %v755, %v751
    %v1220 = vpack.c.b16 %v756, %v752
    %v1221 = vpack.c.b16 %v757, %v753
    %v1222 = vpack.c.b16 %v758, %v754
    %v1223 = vpack.c.b16 %v763, %v759
    %v1224 = vpack.c.b16 %v764, %v760
    %v1225 = vpack.c.b16 %v765, %v761
    %v1226 = vpack.c.b16 %v766, %v762
    %v1227 = vpack.c.b16 %v771, %v767
    %v1228 = vpack.c.b16 %v772, %v768
    %v1229 = vpack.c.b16 %v773, %v769
    %v1230 = vpack.c.b16 %v774, %v770
    %v1231 = vpack.c.b16 %v779, %v775
    %v1232 = vpack.c.b16 %v780, %v776
    %v1233 = vpack.c.b16 %v781, %v777
    %v1234 = vpack.c.b16 %v782, %v778
    %v1235 = vpack.c.b16 %v787, %v783
    %v1236 = vpack.c.b16 %v788, %v784
    %v1237 = vpack.c.b16 %v789, %v785
    %v1238 = vpack.c.b16 %v790, %v786
    %v1239 = vpack.c.b16 %v795, %v791
    %v1240 = vpack.c.b16 %v796, %v792
    %v1241 = vpack.c.b16 %v797, %v793
    %v1242 = vpack.c.b16 %v798, %v794
    %v1243 = vpack.c.b16 %v803, %v799
    %v1244 = vpack.c.b16 %v804, %v800
    %v1245 = vpack.c.b16 %v805, %v801
    %v1246 = vpack.c.b16 %v806, %v802
    %v1247 = vpack.c.b16 %v811, %v807
    %v1248 = vpack.c.b16 %v812, %v808
    %v1249 = vpack.c.b16 %v813, %v809
    %v1250 = vpack.c.b16 %v814, %v810
    %v1251 = vpack.c.b16 %v819, %v815
    %v1252 = vpack.c.b16 %v820, %v816
    %v1253 = vpack.c.b16 %v821, %v817
    %v1254 = vpack.c.b16 %v822, %v818
    %v1255 = vpack.c.b16 %v827, %v823
    %v1256 = vpack.c.b16 %v828, %v824
    %v1257 = vpack.c.b16 %v829, %v825
    %v1258 = vpack.c.b16 %v830, %v826
    %v1259 = vpack.c.b16 %v835, %v831
    %v1260 = vpack.c.b16 %v836, %v832
    %v1261 = vpack.c.b16 %v837, %v833
    %v1262 = vpack.c.b16 %v838, %v834
    %v1263 = vpack.c.b16 %v843, %v839
    %v1264 = vpack.c.b16 %v844, %v840
    %v1265 = vpack.c.b16 %v845, %v841
    %v1266 = vpack.c.b16 %v846, %v842
    %v1267 = vpack.c.b16 %v851, %v847
    %v1268 = vpack.c.b16 %v852, %v848
    %v1269 = vpack.c.b16 %v853, %v849
    %v1270 = vpack.c.b16 %v854, %v850
    %v1271 = vpack.c.b16 %v859, %v855
    %v1272 = vpack.c.b16 %v860, %v856
    %v1273 = vpack.c.b16 %v861, %v857
    %v1274 = vpack.c.b16 %v862, %v858
    %v1275 = vpack.c.b16 %v867, %v863
    %v1276 = vpack.c.b16 %v868, %v864
    %v1277 = vpack.c.b16 %v869, %v865
    %v1278 = vpack.c.b16 %v870, %v866
    %v1279 = vpack.c.b16 %v875, %v871
    %v1280 = vpack.c.b16 %v876, %v872
    %v1281 = vpack.c.b16 %v877, %v873
    %v1282 = vpack.c.b16 %v878, %v874
    %v1283 = vpack.c.b16 %v883, %v879
    %v1284 = vpack.c.b16 %v884, %v880
    %v1285 = vpack.c.b16 %v885, %v881
    %v1286 = vpack.c.b16 %v886, %v882
    %v1287 = vpack.c.b16 %v891, %v887
    %v1288 = vpack.c.b16 %v892, %v888
    %v1289 = vpack.c.b16 %v893, %v889
    %v1290 = vpack.c.b16 %v894, %v890
    %v1291 = vpack.c.b16 %v899, %v895
    %v1292 = vpack.c.b16 %v900, %v896
    %v1293 = vpack.c.b16 %v901, %v897
    %v1294 = vpack.c.b16 %v902, %v898
    %v1295 = vpack.c.b16 %v907, %v903
    %v1296 = vpack.c.b16 %v908, %v904
    %v1297 = vpack.c.b16 %v909, %v905
    %v1298 = vpack.c.b16 %v910, %v906
    %v1299 = vpack.c.b16 %v915, %v911
    %v1300 = vpack.c.b16 %v916, %v912
    %v1301 = vpack.c.b16 %v917, %v913
    %v1302 = vpack.c.b16 %v918, %v914
    %v1303 = vpack.c.b16 %v923, %v919
    %v1304 = vpack.c.b16 %v924, %v920
    %v1305 = vpack.c.b16 %v925, %v921
    %v1306 = vpack.c.b16 %v926, %v922
    %v1307 = vpack.c.b16 %v931, %v927
    %v1308 = vpack.c.b16 %v932, %v928
    %v1309 = vpack.c.b16 %v933, %v929
    %v1310 = vpack.c.b16 %v934, %v930
    %v1311 = vpack.c.b16 %v939, %v935
    %v1312 = vpack.c.b16 %v940, %v936
    %v1313 = vpack.c.b16 %v941, %v937
    %v1314 = vpack.c.b16 %v942, %v938
    %v1315 = vpack.c.b16 %v947, %v943
    %v1316 = vpack.c.b16 %v948, %v944
    %v1317 = vpack.c.b16 %v949, %v945
    %v1318 = vpack.c.b16 %v950, %v946
    %v1319 = vpack.c.b16 %v955, %v951
    %v1320 = vpack.c.b16 %v956, %v952
    %v1321 = vpack.c.b16 %v957, %v953
    %v1322 = vpack.c.b16 %v958, %v954
    %v1323 = vpack.c.b16 %v963, %v959
    %v1324 = vpack.c.b16 %v964, %v960
    %v1325 = vpack.c.b16 %v965, %v961
    %v1326 = vpack.c.b16 %v966, %v962
    %v1327 = vpack.c.b16 %v971, %v967
    %v1328 = vpack.c.b16 %v972, %v968
    %v1329 = vpack.c.b16 %v973, %v969
    %v1330 = vpack.c.b16 %v974, %v970
    %v1331 = vpack.c.b16 %v979, %v975
    %v1332 = vpack.c.b16 %v980, %v976
    %v1333 = vpack.c.b16 %v981, %v977
    %v1334 = vpack.c.b16 %v982, %v978
    %v1335 = vpack.c.b16 %v987, %v983
    %v1336 = vpack.c.b16 %v988, %v984
    %v1337 = vpack.c.b16 %v989, %v985
    %v1338 = vpack.c.b16 %v990, %v986
    %v1339 = vpack.c.b16 %v995, %v991
    %v1340 = vpack.c.b16 %v996, %v992
    %v1341 = vpack.c.b16 %v997, %v993
    %v1342 = vpack.c.b16 %v998, %v994
    %v1343 = vpack.c.b16 %v1003, %v999
    %v1344 = vpack.c.b16 %v1004, %v1000
    %v1345 = vpack.c.b16 %v1005, %v1001
    %v1346 = vpack.c.b16 %v1006, %v1002
    %v1347 = vpack.c.b16 %v1011, %v1007
    %v1348 = vpack.c.b16 %v1012, %v1008
    %v1349 = vpack.c.b16 %v1013, %v1009
    %v1350 = vpack.c.b16 %v1014, %v1010
    %v1351 = vpack.c.b16 %v1019, %v1015
    %v1352 = vpack.c.b16 %v1020, %v1016
    %v1353 = vpack.c.b16 %v1021, %v1017
    %v1354 = vpack.c.b16 %v1022, %v1018
    %v1355 = vpack.c.b16 %v1027, %v1023
    %v1356 = vpack.c.b16 %v1028, %v1024
    %v1357 = vpack.c.b16 %v1029, %v1025
    %v1358 = vpack.c.b16 %v1030, %v1026
    %v1359 = vpack.c.b16 %v1035, %v1031
    %v1360 = vpack.c.b16 %v1036, %v1032
    %v1361 = vpack.c.b16 %v1037, %v1033
    %v1362 = vpack.c.b16 %v1038, %v1034
    %v1363 = vpack.c.b16 %v1043, %v1039
    %v1364 = vpack.c.b16 %v1044, %v1040
    %v1365 = vpack.c.b16 %v1045, %v1041
    %v1366 = vpack.c.b16 %v1046, %v1042
    %v1367 = vpack.c.b16 %v1051, %v1047
    %v1368 = vpack.c.b16 %v1052, %v1048
    %v1369 = vpack.c.b16 %v1053, %v1049
    %v1370 = vpack.c.b16 %v1054, %v1050
    %v1371 = vpack.c.b16 %v1059, %v1055
    %v1372 = vpack.c.b16 %v1060, %v1056
    %v1373 = vpack.c.b16 %v1061, %v1057
    %v1374 = vpack.c.b16 %v1062, %v1058
    %v1375 = vpack.c.b16 %v1067, %v1063
    %v1376 = vpack.c.b16 %v1068, %v1064
    %v1377 = vpack.c.b16 %v1069, %v1065
    %v1378 = vpack.c.b16 %v1070, %v1066
    %v1379 = vpack.c.b16 %v1075, %v1071
    %v1380 = vpack.c.b16 %v1076, %v1072
    %v1381 = vpack.c.b16 %v1077, %v1073
    %v1382 = vpack.c.b16 %v1078, %v1074
    %v1383 = vpack.c.b16 %v1083, %v1079
    %v1384 = vpack.c.b16 %v1084, %v1080
    %v1385 = vpack.c.b16 %v1085, %v1081
    %v1386 = vpack.c.b16 %v1086, %v1082
    %v1387 = vpack.c.b16 %v1091, %v1087
    %v1388 = vpack.c.b16 %v1092, %v1088
    %v1389 = vpack.c.b16 %v1093, %v1089
    %v1390 = vpack.c.b16 %v1094, %v1090
    %v1391 = vpack.c.b16 %v1099, %v1095
    %v1392 = vpack.c.b16 %v1100, %v1096
    %v1393 = vpack.c.b16 %v1101, %v1097
    %v1394 = vpack.c.b16 %v1102, %v1098
    %v1395 = vpack.c.b16 %v1107, %v1103
    %v1396 = vpack.c.b16 %v1108, %v1104
    %v1397 = vpack.c.b16 %v1109, %v1105
    %v1398 = vpack.c.b16 %v1110, %v1106
    %v1399 = vpack.c.b16 %v1115, %v1111
    %v1400 = vpack.c.b16 %v1116, %v1112
    %v1401 = vpack.c.b16 %v1117, %v1113
    %v1402 = vpack.c.b16 %v1118, %v1114
    %v1403 = vpack.c.b16 %v1123, %v1119
    %v1404 = vpack.c.b16 %v1124, %v1120
    %v1405 = vpack.c.b16 %v1125, %v1121
    %v1406 = vpack.c.b16 %v1126, %v1122
    %v1407 = vpack.c.b16 %v1131, %v1127
    %v1408 = vpack.c.b16 %v1132, %v1128
    %v1409 = vpack.c.b16 %v1133, %v1129
    %v1410 = vpack.c.b16 %v1134, %v1130
    %v1411 = vpack.c.b16 %v1139, %v1135
    %v1412 = vpack.c.b16 %v1140, %v1136
    %v1413 = vpack.c.b16 %v1141, %v1137
    %v1414 = vpack.c.b16 %v1142, %v1138
    %v1415 = vpack.c.b16 %v1147, %v1143
    %v1416 = vpack.c.b16 %v1148, %v1144
    %v1417 = vpack.c.b16 %v1149, %v1145
    %v1418 = vpack.c.b16 %v1150, %v1146
    %v1419 = vpack.c.b16 %v1155, %v1151
    %v1420 = vpack.c.b16 %v1156, %v1152
    %v1421 = vpack.c.b16 %v1157, %v1153
    %v1422 = vpack.c.b16 %v1158, %v1154
    %v1423 = vpack.c.b16 %v1163, %v1159
    %v1424 = vpack.c.b16 %v1164, %v1160
    %v1425 = vpack.c.b16 %v1165, %v1161
    %v1426 = vpack.c.b16 %v1166, %v1162
    %v1427 = vpack.c.b16 %v1171, %v1167
    %v1428 = vpack.c.b16 %v1172, %v1168
    %v1429 = vpack.c.b16 %v1173, %v1169
    %v1430 = vpack.c.b16 %v1174, %v1170
    %1687 = vmatprep.subr.bf16.mxu0 %v1176
    %1688 = vmatpush1.bf16.msra.mxu0 %v1175
    %1689 = vmatprep.subr.bf16.mxu0 %v1180
    %1690 = vmatpush1.bf16.msra.mxu0 %v1179
    %1691 = vmatprep.subr.bf16.mxu0 %v1184
    %1692 = vmatpush1.bf16.msra.mxu0 %v1183
    %1693 = vmatprep.subr.bf16.mxu0 %v1188
    %1694 = vmatpush1.bf16.msra.mxu0 %v1187
    %1695 = vmatprep.subr.bf16.mxu0 %v1192
    %1696 = vmatpush1.bf16.msra.mxu0 %v1191
    %1697 = vmatprep.subr.bf16.mxu0 %v1196
    %1698 = vmatpush1.bf16.msra.mxu0 %v1195
    %1699 = vmatprep.subr.bf16.mxu0 %v1200
    %1700 = vmatpush1.bf16.msra.mxu0 %v1199
    %1701 = vmatprep.subr.bf16.mxu0 %v1204
    %1702 = vmatpush1.bf16.msra.mxu0 %v1203
    %1703 = vmatprep.subr.bf16.mxu0 %v1208
    %1704 = vmatpush1.bf16.msra.mxu0 %v1207
    %1705 = vmatprep.subr.bf16.mxu0 %v1212
    %1706 = vmatpush1.bf16.msra.mxu0 %v1211
    %1707 = vmatprep.subr.bf16.mxu0 %v1216
    %1708 = vmatpush1.bf16.msra.mxu0 %v1215
    %1709 = vmatprep.subr.bf16.mxu0 %v1220
    %1710 = vmatpush1.bf16.msra.mxu0 %v1219
    %1711 = vmatprep.subr.bf16.mxu0 %v1224
    %1712 = vmatpush1.bf16.msra.mxu0 %v1223
    %1713 = vmatprep.subr.bf16.mxu0 %v1228
    %1714 = vmatpush1.bf16.msra.mxu0 %v1227
    %1715 = vmatprep.subr.bf16.mxu0 %v1232
    %1716 = vmatpush1.bf16.msra.mxu0 %v1231
    %1717 = vmatprep.subr.bf16.mxu0 %v1236
    %1718 = vmatpush1.bf16.msra.mxu0 %v1235
    %1719 = vmatprep.mubr.bf16.mxu0 %v392
    %1720 = vmatmul.mubr.bf16.gmra.mrb[0].mxu0 %v391
    %v1721 = vpop.f32.mrb[0].mxu0
    %v1722 = vadd.f32 0.0, %v1721
    %v1723 = vpop.f32.mrb[0].mxu0
    %v1724 = vadd.f32 0.0, %v1723
    %v1725 = vpop.f32.mrb[0].mxu0
    %v1726 = vadd.f32 0.0, %v1725
    %v1727 = vpop.f32.mrb[0].mxu0
    %v1728 = vadd.f32 0.0, %v1727
    %1729 = vdwg.mxu0
    %1730 = vmatprep.subr.bf16.mxu0 %v1240
    %1731 = vmatpush1.bf16.msra.mxu0 %v1239
    %1732 = vmatprep.subr.bf16.mxu0 %v1244
    %1733 = vmatpush1.bf16.msra.mxu0 %v1243
    %1734 = vmatprep.subr.bf16.mxu0 %v1248
    %1735 = vmatpush1.bf16.msra.mxu0 %v1247
    %1736 = vmatprep.subr.bf16.mxu0 %v1252
    %1737 = vmatpush1.bf16.msra.mxu0 %v1251
    %1738 = vmatprep.subr.bf16.mxu0 %v1256
    %1739 = vmatpush1.bf16.msra.mxu0 %v1255
    %1740 = vmatprep.subr.bf16.mxu0 %v1260
    %1741 = vmatpush1.bf16.msra.mxu0 %v1259
    %1742 = vmatprep.subr.bf16.mxu0 %v1264
    %1743 = vmatpush1.bf16.msra.mxu0 %v1263
    %1744 = vmatprep.subr.bf16.mxu0 %v1268
    %1745 = vmatpush1.bf16.msra.mxu0 %v1267
    %1746 = vmatprep.subr.bf16.mxu0 %v1272
    %1747 = vmatpush1.bf16.msra.mxu0 %v1271
    %1748 = vmatprep.subr.bf16.mxu0 %v1276
    %1749 = vmatpush1.bf16.msra.mxu0 %v1275
    %1750 = vmatprep.subr.bf16.mxu0 %v1280
    %1751 = vmatpush1.bf16.msra.mxu0 %v1279
    %1752 = vmatprep.subr.bf16.mxu0 %v1284
    %1753 = vmatpush1.bf16.msra.mxu0 %v1283
    %1754 = vmatprep.subr.bf16.mxu0 %v1288
    %1755 = vmatpush1.bf16.msra.mxu0 %v1287
    %1756 = vmatprep.subr.bf16.mxu0 %v1292
    %1757 = vmatpush1.bf16.msra.mxu0 %v1291
    %1758 = vmatprep.subr.bf16.mxu0 %v1296
    %1759 = vmatpush1.bf16.msra.mxu0 %v1295
    %1760 = vmatprep.subr.bf16.mxu0 %v1300
    %1761 = vmatpush1.bf16.msra.mxu0 %v1299
    %1762 = vmatprep.mubr.bf16.mxu0 %v394
    %1763 = vmatmul.mubr.bf16.gmra.mrb[0].mxu0 %v393
    %v1764 = vpop.f32.mrb[0].mxu0
    %v1765 = vadd.f32 %v1722, %v1764
    %v1766 = vpop.f32.mrb[0].mxu0
    %v1767 = vadd.f32 %v1724, %v1766
    %v1768 = vpop.f32.mrb[0].mxu0
    %v1769 = vadd.f32 %v1726, %v1768
    %v1770 = vpop.f32.mrb[0].mxu0
    %v1771 = vadd.f32 %v1728, %v1770
    %1772 = vdwg.mxu0
    %1773 = vmatprep.subr.bf16.mxu0 %v1304
    %1774 = vmatpush1.bf16.msra.mxu0 %v1303
    %1775 = vmatprep.subr.bf16.mxu0 %v1308
    %1776 = vmatpush1.bf16.msra.mxu0 %v1307
    %1777 = vmatprep.subr.bf16.mxu0 %v1312
    %1778 = vmatpush1.bf16.msra.mxu0 %v1311
    %1779 = vmatprep.subr.bf16.mxu0 %v1316
    %1780 = vmatpush1.bf16.msra.mxu0 %v1315
    %1781 = vmatprep.subr.bf16.mxu0 %v1320
    %1782 = vmatpush1.bf16.msra.mxu0 %v1319
    %1783 = vmatprep.subr.bf16.mxu0 %v1324
    %1784 = vmatpush1.bf16.msra.mxu0 %v1323
    %1785 = vmatprep.subr.bf16.mxu0 %v1328
    %1786 = vmatpush1.bf16.msra.mxu0 %v1327
    %1787 = vmatprep.subr.bf16.mxu0 %v1332
    %1788 = vmatpush1.bf16.msra.mxu0 %v1331
    %1789 = vmatprep.subr.bf16.mxu0 %v1336
    %1790 = vmatpush1.bf16.msra.mxu0 %v1335
    %1791 = vmatprep.subr.bf16.mxu0 %v1340
    %1792 = vmatpush1.bf16.msra.mxu0 %v1339
    %1793 = vmatprep.subr.bf16.mxu0 %v1344
    %1794 = vmatpush1.bf16.msra.mxu0 %v1343
    %1795 = vmatprep.subr.bf16.mxu0 %v1348
    %1796 = vmatpush1.bf16.msra.mxu0 %v1347
    %1797 = vmatprep.subr.bf16.mxu0 %v1352
    %1798 = vmatpush1.bf16.msra.mxu0 %v1351
    %1799 = vmatprep.subr.bf16.mxu0 %v1356
    %1800 = vmatpush1.bf16.msra.mxu0 %v1355
    %1801 = vmatprep.subr.bf16.mxu0 %v1360
    %1802 = vmatpush1.bf16.msra.mxu0 %v1359
    %1803 = vmatprep.subr.bf16.mxu0 %v1364
    %1804 = vmatpush1.bf16.msra.mxu0 %v1363
    %1805 = vmatprep.mubr.bf16.mxu0 %v396
    %1806 = vmatmul.mubr.bf16.gmra.mrb[0].mxu0 %v395
    %v1807 = vpop.f32.mrb[0].mxu0
    %v1808 = vadd.f32 %v1765, %v1807
    %v1809 = vpop.f32.mrb[0].mxu0
    %v1810 = vadd.f32 %v1767, %v1809
    %v1811 = vpop.f32.mrb[0].mxu0
    %v1812 = vadd.f32 %v1769, %v1811
    %v1813 = vpop.f32.mrb[0].mxu0
    %v1814 = vadd.f32 %v1771, %v1813
    %1815 = vdwg.mxu0
    %1816 = vmatprep.subr.bf16.mxu0 %v1368
    %1817 = vmatpush1.bf16.msra.mxu0 %v1367
    %1818 = vmatprep.subr.bf16.mxu0 %v1372
    %1819 = vmatpush1.bf16.msra.mxu0 %v1371
    %1820 = vmatprep.subr.bf16.mxu0 %v1376
    %1821 = vmatpush1.bf16.msra.mxu0 %v1375
    %1822 = vmatprep.subr.bf16.mxu0 %v1380
    %1823 = vmatpush1.bf16.msra.mxu0 %v1379
    %1824 = vmatprep.subr.bf16.mxu0 %v1384
    %1825 = vmatpush1.bf16.msra.mxu0 %v1383
    %1826 = vmatprep.subr.bf16.mxu0 %v1388
    %1827 = vmatpush1.bf16.msra.mxu0 %v1387
    %1828 = vmatprep.subr.bf16.mxu0 %v1392
    %1829 = vmatpush1.bf16.msra.mxu0 %v1391
    %1830 = vmatprep.subr.bf16.mxu0 %v1396
    %1831 = vmatpush1.bf16.msra.mxu0 %v1395
    %1832 = vmatprep.subr.bf16.mxu0 %v1400
    %1833 = vmatpush1.bf16.msra.mxu0 %v1399
    %1834 = vmatprep.subr.bf16.mxu0 %v1404
    %1835 = vmatpush1.bf16.msra.mxu0 %v1403
    %1836 = vmatprep.subr.bf16.mxu0 %v1408
    %1837 = vmatpush1.bf16.msra.mxu0 %v1407
    %1838 = vmatprep.subr.bf16.mxu0 %v1412
    %1839 = vmatpush1.bf16.msra.mxu0 %v1411
    %1840 = vmatprep.subr.bf16.mxu0 %v1416
    %1841 = vmatpush1.bf16.msra.mxu0 %v1415
    %1842 = vmatprep.subr.bf16.mxu0 %v1420
    %1843 = vmatpush1.bf16.msra.mxu0 %v1419
    %1844 = vmatprep.subr.bf16.mxu0 %v1424
    %1845 = vmatpush1.bf16.msra.mxu0 %v1423
    %1846 = vmatprep.subr.bf16.mxu0 %v1428
    %1847 = vmatpush1.bf16.msra.mxu0 %v1427
    %1848 = vmatprep.mubr.bf16.mxu0 %v398
    %1849 = vmatmul.mubr.bf16.gmra.mrb[0].mxu0 %v397
    %v1850 = vpop.f32.mrb[0].mxu0
    %v1851 = vadd.f32 %v1808, %v1850
    %v1852 = vpop.f32.mrb[0].mxu0
    %v1853 = vadd.f32 %v1810, %v1852
    %v1854 = vpop.f32.mrb[0].mxu0
    %v1855 = vadd.f32 %v1812, %v1854
    %v1856 = vpop.f32.mrb[0].mxu0
    %v1857 = vadd.f32 %v1814, %v1856
    %1858 = vdwg.mxu0
    %1859 = vmatprep.subr.bf16.mxu0 %v1178
    %1860 = vmatpush1.bf16.msra.mxu0 %v1177
    %1861 = vmatprep.subr.bf16.mxu0 %v1182
    %1862 = vmatpush1.bf16.msra.mxu0 %v1181
    %1863 = vmatprep.subr.bf16.mxu0 %v1186
    %1864 = vmatpush1.bf16.msra.mxu0 %v1185
    %1865 = vmatprep.subr.bf16.mxu0 %v1190
    %1866 = vmatpush1.bf16.msra.mxu0 %v1189
    %1867 = vmatprep.subr.bf16.mxu0 %v1194
    %1868 = vmatpush1.bf16.msra.mxu0 %v1193
    %1869 = vmatprep.subr.bf16.mxu0 %v1198
    %1870 = vmatpush1.bf16.msra.mxu0 %v1197
    %1871 = vmatprep.subr.bf16.mxu0 %v1202
    %1872 = vmatpush1.bf16.msra.mxu0 %v1201
    %1873 = vmatprep.subr.bf16.mxu0 %v1206
    %1874 = vmatpush1.bf16.msra.mxu0 %v1205
    %1875 = vmatprep.subr.bf16.mxu0 %v1210
    %1876 = vmatpush1.bf16.msra.mxu0 %v1209
    %1877 = vmatprep.subr.bf16.mxu0 %v1214
    %1878 = vmatpush1.bf16.msra.mxu0 %v1213
    %1879 = vmatprep.subr.bf16.mxu0 %v1218
    %1880 = vmatpush1.bf16.msra.mxu0 %v1217
    %1881 = vmatprep.subr.bf16.mxu0 %v1222
    %1882 = vmatpush1.bf16.msra.mxu0 %v1221
    %1883 = vmatprep.subr.bf16.mxu0 %v1226
    %1884 = vmatpush1.bf16.msra.mxu0 %v1225
    %1885 = vmatprep.subr.bf16.mxu0 %v1230
    %1886 = vmatpush1.bf16.msra.mxu0 %v1229
    %1887 = vmatprep.subr.bf16.mxu0 %v1234
    %1888 = vmatpush1.bf16.msra.mxu0 %v1233
    %1889 = vmatprep.subr.bf16.mxu0 %v1238
    %1890 = vmatpush1.bf16.msra.mxu0 %v1237
    %1891 = vmatprep.mubr.bf16.mxu0 %v392
    %1892 = vmatmul.mubr.bf16.gmra.mrb[0].mxu0 %v391
    %v1893 = vpop.f32.mrb[0].mxu0
    %v1894 = vadd.f32 0.0, %v1893
    %v1895 = vpop.f32.mrb[0].mxu0
    %v1896 = vadd.f32 0.0, %v1895
    %v1897 = vpop.f32.mrb[0].mxu0
    %v1898 = vadd.f32 0.0, %v1897
    %v1899 = vpop.f32.mrb[0].mxu0
    %v1900 = vadd.f32 0.0, %v1899
    %1901 = vdwg.mxu0
    %1902 = vmatprep.subr.bf16.mxu0 %v1242
    %1903 = vmatpush1.bf16.msra.mxu0 %v1241
    %1904 = vmatprep.subr.bf16.mxu0 %v1246
    %1905 = vmatpush1.bf16.msra.mxu0 %v1245
    %1906 = vmatprep.subr.bf16.mxu0 %v1250
    %1907 = vmatpush1.bf16.msra.mxu0 %v1249
    %1908 = vmatprep.subr.bf16.mxu0 %v1254
    %1909 = vmatpush1.bf16.msra.mxu0 %v1253
    %1910 = vmatprep.subr.bf16.mxu0 %v1258
    %1911 = vmatpush1.bf16.msra.mxu0 %v1257
    %1912 = vmatprep.subr.bf16.mxu0 %v1262
    %1913 = vmatpush1.bf16.msra.mxu0 %v1261
    %1914 = vmatprep.subr.bf16.mxu0 %v1266
    %1915 = vmatpush1.bf16.msra.mxu0 %v1265
    %1916 = vmatprep.subr.bf16.mxu0 %v1270
    %1917 = vmatpush1.bf16.msra.mxu0 %v1269
    %1918 = vmatprep.subr.bf16.mxu0 %v1274
    %1919 = vmatpush1.bf16.msra.mxu0 %v1273
    %1920 = vmatprep.subr.bf16.mxu0 %v1278
    %1921 = vmatpush1.bf16.msra.mxu0 %v1277
    %1922 = vmatprep.subr.bf16.mxu0 %v1282
    %1923 = vmatpush1.bf16.msra.mxu0 %v1281
    %1924 = vmatprep.subr.bf16.mxu0 %v1286
    %1925 = vmatpush1.bf16.msra.mxu0 %v1285
    %1926 = vmatprep.subr.bf16.mxu0 %v1290
    %1927 = vmatpush1.bf16.msra.mxu0 %v1289
    %1928 = vmatprep.subr.bf16.mxu0 %v1294
    %1929 = vmatpush1.bf16.msra.mxu0 %v1293
    %1930 = vmatprep.subr.bf16.mxu0 %v1298
    %1931 = vmatpush1.bf16.msra.mxu0 %v1297
    %1932 = vmatprep.subr.bf16.mxu0 %v1302
    %1933 = vmatpush1.bf16.msra.mxu0 %v1301
    %1934 = vmatprep.mubr.bf16.mxu0 %v394
    %1935 = vmatmul.mubr.bf16.gmra.mrb[0].mxu0 %v393
    %v1936 = vpop.f32.mrb[0].mxu0
    %v1937 = vadd.f32 %v1894, %v1936
    %v1938 = vpop.f32.mrb[0].mxu0
    %v1939 = vadd.f32 %v1896, %v1938
    %v1940 = vpop.f32.mrb[0].mxu0
    %v1941 = vadd.f32 %v1898, %v1940
    %v1942 = vpop.f32.mrb[0].mxu0
    %v1943 = vadd.f32 %v1900, %v1942
    %1944 = vdwg.mxu0
    %1945 = vmatprep.subr.bf16.mxu0 %v1306
    %1946 = vmatpush1.bf16.msra.mxu0 %v1305
    %1947 = vmatprep.subr.bf16.mxu0 %v1310
    %1948 = vmatpush1.bf16.msra.mxu0 %v1309
    %1949 = vmatprep.subr.bf16.mxu0 %v1314
    %1950 = vmatpush1.bf16.msra.mxu0 %v1313
    %1951 = vmatprep.subr.bf16.mxu0 %v1318
    %1952 = vmatpush1.bf16.msra.mxu0 %v1317
    %1953 = vmatprep.subr.bf16.mxu0 %v1322
    %1954 = vmatpush1.bf16.msra.mxu0 %v1321
    %1955 = vmatprep.subr.bf16.mxu0 %v1326
    %1956 = vmatpush1.bf16.msra.mxu0 %v1325
    %1957 = vmatprep.subr.bf16.mxu0 %v1330
    %1958 = vmatpush1.bf16.msra.mxu0 %v1329
    %1959 = vmatprep.subr.bf16.mxu0 %v1334
    %1960 = vmatpush1.bf16.msra.mxu0 %v1333
    %1961 = vmatprep.subr.bf16.mxu0 %v1338
    %1962 = vmatpush1.bf16.msra.mxu0 %v1337
    %1963 = vmatprep.subr.bf16.mxu0 %v1342
    %1964 = vmatpush1.bf16.msra.mxu0 %v1341
    %1965 = vmatprep.subr.bf16.mxu0 %v1346
    %1966 = vmatpush1.bf16.msra.mxu0 %v1345
    %1967 = vmatprep.subr.bf16.mxu0 %v1350
    %1968 = vmatpush1.bf16.msra.mxu0 %v1349
    %1969 = vmatprep.subr.bf16.mxu0 %v1354
    %1970 = vmatpush1.bf16.msra.mxu0 %v1353
    %1971 = vmatprep.subr.bf16.mxu0 %v1358
    %1972 = vmatpush1.bf16.msra.mxu0 %v1357
    %1973 = vmatprep.subr.bf16.mxu0 %v1362
    %1974 = vmatpush1.bf16.msra.mxu0 %v1361
    %1975 = vmatprep.subr.bf16.mxu0 %v1366
    %1976 = vmatpush1.bf16.msra.mxu0 %v1365
    %1977 = vmatprep.mubr.bf16.mxu0 %v396
    %1978 = vmatmul.mubr.bf16.gmra.mrb[0].mxu0 %v395
    %v1979 = vpop.f32.mrb[0].mxu0
    %v1980 = vadd.f32 %v1937, %v1979
    %v1981 = vpop.f32.mrb[0].mxu0
    %v1982 = vadd.f32 %v1939, %v1981
    %v1983 = vpop.f32.mrb[0].mxu0
    %v1984 = vadd.f32 %v1941, %v1983
    %v1985 = vpop.f32.mrb[0].mxu0
    %v1986 = vadd.f32 %v1943, %v1985
    %1987 = vdwg.mxu0
    %1988 = vmatprep.subr.bf16.mxu0 %v1370
    %1989 = vmatpush1.bf16.msra.mxu0 %v1369
    %1990 = vmatprep.subr.bf16.mxu0 %v1374
    %1991 = vmatpush1.bf16.msra.mxu0 %v1373
    %1992 = vmatprep.subr.bf16.mxu0 %v1378
    %1993 = vmatpush1.bf16.msra.mxu0 %v1377
    %1994 = vmatprep.subr.bf16.mxu0 %v1382
    %1995 = vmatpush1.bf16.msra.mxu0 %v1381
    %1996 = vmatprep.subr.bf16.mxu0 %v1386
    %1997 = vmatpush1.bf16.msra.mxu0 %v1385
    %1998 = vmatprep.subr.bf16.mxu0 %v1390
    %1999 = vmatpush1.bf16.msra.mxu0 %v1389
    %2000 = vmatprep.subr.bf16.mxu0 %v1394
    %2001 = vmatpush1.bf16.msra.mxu0 %v1393
    %2002 = vmatprep.subr.bf16.mxu0 %v1398
    %2003 = vmatpush1.bf16.msra.mxu0 %v1397
    %2004 = vmatprep.subr.bf16.mxu0 %v1402
    %2005 = vmatpush1.bf16.msra.mxu0 %v1401
    %2006 = vmatprep.subr.bf16.mxu0 %v1406
    %2007 = vmatpush1.bf16.msra.mxu0 %v1405
    %2008 = vmatprep.subr.bf16.mxu0 %v1410
    %2009 = vmatpush1.bf16.msra.mxu0 %v1409
    %2010 = vmatprep.subr.bf16.mxu0 %v1414
    %2011 = vmatpush1.bf16.msra.mxu0 %v1413
    %2012 = vmatprep.subr.bf16.mxu0 %v1418
    %2013 = vmatpush1.bf16.msra.mxu0 %v1417
    %2014 = vmatprep.subr.bf16.mxu0 %v1422
    %2015 = vmatpush1.bf16.msra.mxu0 %v1421
    %2016 = vmatprep.subr.bf16.mxu0 %v1426
    %2017 = vmatpush1.bf16.msra.mxu0 %v1425
    %2018 = vmatprep.subr.bf16.mxu0 %v1430
    %2019 = vmatpush1.bf16.msra.mxu0 %v1429
    %2020 = vmatprep.mubr.bf16.mxu0 %v398
    %2021 = vmatmul.mubr.bf16.gmra.mrb[0].mxu0 %v397
    %v2022 = vpop.f32.mrb[0].mxu0
    %v2023 = vadd.f32 %v1980, %v2022
    %v2024 = vpop.f32.mrb[0].mxu0
    %v2025 = vadd.f32 %v1982, %v2024
    %v2026 = vpop.f32.mrb[0].mxu0
    %v2027 = vadd.f32 %v1984, %v2026
    %v2028 = vpop.f32.mrb[0].mxu0
    %v2029 = vadd.f32 %v1986, %v2028
    %2030 = vdwg.mxu0
    %v2031 = vadd.f32 %v95, %v1851
    %v2032 = vadd.f32 %v96, %v1853
    %v2033 = vadd.f32 %v97, %v2023
    %v2034 = vadd.f32 %v98, %v2025
    %v2035 = vadd.f32 %v99, %v1855
    %v2036 = vadd.f32 %v100, %v1857
    %v2037 = vadd.f32 %v101, %v2027
    %v2038 = vadd.f32 %v102, %v2029
    %2039 = vst [vmem:[#allocation2] sm:$0xff] %v2031
    %2040 = vst [vmem:[#allocation2 + $0x8] sm:$0xff] %v2032
    %2041 = vst [vmem:[#allocation2 + $0x10] sm:$0xff] %v2033
    %2042 = vst [vmem:[#allocation2 + $0x18] sm:$0xff] %v2034
    %2043 = vst [vmem:[#allocation2 + $0x20] sm:$0xff] %v2035
    %2044 = vst [vmem:[#allocation2 + $0x28] sm:$0xff] %v2036
    %2045 = vst [vmem:[#allocation2 + $0x30] sm:$0xff] %v2037
    %2046 = vst [vmem:[#allocation2 + $0x38] sm:$0xff] %v2038
    // Predicated region
    $region50: #{tpu_custom_call.1} parent=1 // pred_check
      %p2047 = pneg %p83
    $region51: #{tpu_custom_call.1} parent=1 // pred_check_branch
      %2049 = sbr.rel (%p2047) target = $region53
    $region52: #{tpu_custom_call.1} parent=1 // pred_region
      %v2050 = vld [vmem:[#allocation2] sm:$0xff]
      %v2051 = vld [vmem:[#allocation2 + $0x8] sm:$0xff]
      %v2052 = vld [vmem:[#allocation2 + $0x10] sm:$0xff]
      %v2053 = vld [vmem:[#allocation2 + $0x18] sm:$0xff]
      %v2054 = vld [vmem:[#allocation2 + $0x20] sm:$0xff]
      %v2055 = vld [vmem:[#allocation2 + $0x28] sm:$0xff]
      %v2056 = vld [vmem:[#allocation2 + $0x30] sm:$0xff]
      %v2057 = vld [vmem:[#allocation2 + $0x38] sm:$0xff]
      %v2058 = vld [vmem:[%s2] sm:$0xf]
      %v2060 = vlaneseq
      %v2061 = vshrl.u32 %v2060, 7
      %v2062 = vsub.s32 0, %v2061
      %v2063 = vrot.slane %v2058, %v2062
      %v2064 = vlaneseq
      %v2065 = vshrl.u32 %v2064, 7
      %v2066 = vsub.s32 1, %v2065
      %v2067 = vrot.slane %v2058, %v2066
      %v2068 = vlaneseq
      %v2069 = vshrl.u32 %v2068, 7
      %v2070 = vsub.s32 2, %v2069
      %v2071 = vrot.slane %v2058, %v2070
      %v2072 = vlaneseq
      %v2073 = vshrl.u32 %v2072, 7
      %v2074 = vsub.s32 3, %v2073
      %v2075 = vrot.slane %v2058, %v2074
      %v2080 = vadd.f32 %v2050, %v2063
      %v2081 = vadd.f32 %v2051, %v2067
      %v2082 = vadd.f32 %v2052, %v2071
      %v2083 = vadd.f32 %v2053, %v2075
      %v2084 = vadd.f32 %v2054, %v2063
      %v2085 = vadd.f32 %v2055, %v2067
      %v2086 = vadd.f32 %v2056, %v2071
      %v2087 = vadd.f32 %v2057, %v2075
      %vm2088 = vcmp.gt.f32.partialorder %v2080, 0.0
      %vm2089 = vcmp.gt.f32.partialorder %v2081, 0.0
      %vm2090 = vcmp.gt.f32.partialorder %v2082, 0.0
      %vm2091 = vcmp.gt.f32.partialorder %v2083, 0.0
      %vm2092 = vcmp.gt.f32.partialorder %v2084, 0.0
      %vm2093 = vcmp.gt.f32.partialorder %v2085, 0.0
      %vm2094 = vcmp.gt.f32.partialorder %v2086, 0.0
      %vm2095 = vcmp.gt.f32.partialorder %v2087, 0.0
      %v2096 = vmul.f32 %v2080, 0.2
      %v2097 = vmul.f32 %v2081, 0.2
      %v2098 = vmul.f32 %v2082, 0.2
      %v2099 = vmul.f32 %v2083, 0.2
      %v2100 = vmul.f32 %v2084, 0.2
      %v2101 = vmul.f32 %v2085, 0.2
      %v2102 = vmul.f32 %v2086, 0.2
      %v2103 = vmul.f32 %v2087, 0.2
      %v2104 = vsel %vm2088, %v2080, %v2096
      %v2105 = vsel %vm2089, %v2081, %v2097
      %v2106 = vsel %vm2090, %v2082, %v2098
      %v2107 = vsel %vm2091, %v2083, %v2099
      %v2108 = vsel %vm2092, %v2084, %v2100
      %v2109 = vsel %vm2093, %v2085, %v2101
      %v2110 = vsel %vm2094, %v2086, %v2102
      %v2111 = vsel %vm2095, %v2087, %v2103
      %v2112 = vpack.c.bf16 %v2108, %v2104
      %v2113 = vpack.c.bf16 %v2109, %v2105
      %v2114 = vpack.c.bf16 %v2110, %v2106
      %v2115 = vpack.c.bf16 %v2111, %v2107
      %v2116 = vld [vmem:[#allocation8] sm:$0xff]
      %v2117 = vld [vmem:[#allocation8 + $0x8] sm:$0xff]
      %v2118 = vld [vmem:[#allocation8 + $0x10] sm:$0xff]
      %v2119 = vld [vmem:[#allocation8 + $0x18] sm:$0xff]
      %v2120 = vld [vmem:[#allocation8 + $0x20] sm:$0xff]
      %v2121 = vld [vmem:[#allocation8 + $0x28] sm:$0xff]
      %v2122 = vld [vmem:[#allocation8 + $0x30] sm:$0xff]
      %v2123 = vld [vmem:[#allocation8 + $0x38] sm:$0xff]
      %v2124 = vld [vmem:[#allocation8 + $0x40] sm:$0xff]
      %v2125 = vld [vmem:[#allocation8 + $0x48] sm:$0xff]
      %v2126 = vld [vmem:[#allocation8 + $0x50] sm:$0xff]
      %v2127 = vld [vmem:[#allocation8 + $0x58] sm:$0xff]
      %v2128 = vld [vmem:[#allocation8 + $0x60] sm:$0xff]
      %v2129 = vld [vmem:[#allocation8 + $0x68] sm:$0xff]
      %v2130 = vld [vmem:[#allocation8 + $0x70] sm:$0xff]
      %v2131 = vld [vmem:[#allocation8 + $0x78] sm:$0xff]
      %v2132 = vld [vmem:[#allocation8 + $0x80] sm:$0xff]
      %v2133 = vld [vmem:[#allocation8 + $0x88] sm:$0xff]
      %v2134 = vld [vmem:[#allocation8 + $0x90] sm:$0xff]
      %v2135 = vld [vmem:[#allocation8 + $0x98] sm:$0xff]
      %v2136 = vld [vmem:[#allocation8 + $0xa0] sm:$0xff]
      %v2137 = vld [vmem:[#allocation8 + $0xa8] sm:$0xff]
      %v2138 = vld [vmem:[#allocation8 + $0xb0] sm:$0xff]
      %v2139 = vld [vmem:[#allocation8 + $0xb8] sm:$0xff]
      %v2140 = vld [vmem:[#allocation8 + $0xc0] sm:$0xff]
      %v2141 = vld [vmem:[#allocation8 + $0xc8] sm:$0xff]
      %v2142 = vld [vmem:[#allocation8 + $0xd0] sm:$0xff]
      %v2143 = vld [vmem:[#allocation8 + $0xd8] sm:$0xff]
      %v2144 = vld [vmem:[#allocation8 + $0xe0] sm:$0xff]
      %v2145 = vld [vmem:[#allocation8 + $0xe8] sm:$0xff]
      %v2146 = vld [vmem:[#allocation8 + $0xf0] sm:$0xff]
      %v2147 = vld [vmem:[#allocation8 + $0xf8] sm:$0xff]
      %v2148 = vld [vmem:[#allocation8 + $0x100] sm:$0xff]
      %v2149 = vld [vmem:[#allocation8 + $0x108] sm:$0xff]
      %v2150 = vld [vmem:[#allocation8 + $0x110] sm:$0xff]
      %v2151 = vld [vmem:[#allocation8 + $0x118] sm:$0xff]
      %v2152 = vld [vmem:[#allocation8 + $0x120] sm:$0xff]
      %v2153 = vld [vmem:[#allocation8 + $0x128] sm:$0xff]
      %v2154 = vld [vmem:[#allocation8 + $0x130] sm:$0xff]
      %v2155 = vld [vmem:[#allocation8 + $0x138] sm:$0xff]
      %v2156 = vld [vmem:[#allocation8 + $0x140] sm:$0xff]
      %v2157 = vld [vmem:[#allocation8 + $0x148] sm:$0xff]
      %v2158 = vld [vmem:[#allocation8 + $0x150] sm:$0xff]
      %v2159 = vld [vmem:[#allocation8 + $0x158] sm:$0xff]
      %v2160 = vld [vmem:[#allocation8 + $0x160] sm:$0xff]
      %v2161 = vld [vmem:[#allocation8 + $0x168] sm:$0xff]
      %v2162 = vld [vmem:[#allocation8 + $0x170] sm:$0xff]
      %v2163 = vld [vmem:[#allocation8 + $0x178] sm:$0xff]
      %v2164 = vld [vmem:[#allocation8 + $0x180] sm:$0xff]
      %v2165 = vld [vmem:[#allocation8 + $0x188] sm:$0xff]
      %v2166 = vld [vmem:[#allocation8 + $0x190] sm:$0xff]
      %v2167 = vld [vmem:[#allocation8 + $0x198] sm:$0xff]
      %v2168 = vld [vmem:[#allocation8 + $0x1a0] sm:$0xff]
      %v2169 = vld [vmem:[#allocation8 + $0x1a8] sm:$0xff]
      %v2170 = vld [vmem:[#allocation8 + $0x1b0] sm:$0xff]
      %v2171 = vld [vmem:[#allocation8 + $0x1b8] sm:$0xff]
      %v2172 = vld [vmem:[#allocation8 + $0x1c0] sm:$0xff]
      %v2173 = vld [vmem:[#allocation8 + $0x1c8] sm:$0xff]
      %v2174 = vld [vmem:[#allocation8 + $0x1d0] sm:$0xff]
      %v2175 = vld [vmem:[#allocation8 + $0x1d8] sm:$0xff]
      %v2176 = vld [vmem:[#allocation8 + $0x1e0] sm:$0xff]
      %v2177 = vld [vmem:[#allocation8 + $0x1e8] sm:$0xff]
      %v2178 = vld [vmem:[#allocation8 + $0x1f0] sm:$0xff]
      %v2179 = vld [vmem:[#allocation8 + $0x1f8] sm:$0xff]
      %v2180 = vld [vmem:[%s4] sm:$0x3]
      %v2182 = vlaneseq
      %v2183 = vshrl.u32 %v2182, 7
      %v2184 = vsub.s32 0, %v2183
      %v2185 = vrot.slane %v2180, %v2184
      %v2186 = vlaneseq
      %v2187 = vshrl.u32 %v2186, 7
      %v2188 = vsub.s32 1, %v2187
      %v2189 = vrot.slane %v2180, %v2188
      %v2256 = vunpack.c.l.b16 %v2116
      %v2257 = vunpack.c.h.b16 %v2116
      %v2258 = vunpack.c.l.b16 %v2117
      %v2259 = vunpack.c.h.b16 %v2117
      %v2260 = vunpack.c.l.b16 %v2118
      %v2261 = vunpack.c.h.b16 %v2118
      %v2262 = vunpack.c.l.b16 %v2119
      %v2263 = vunpack.c.h.b16 %v2119
      %v2264 = vunpack.c.l.b16 %v2120
      %v2265 = vunpack.c.h.b16 %v2120
      %v2266 = vunpack.c.l.b16 %v2121
      %v2267 = vunpack.c.h.b16 %v2121
      %v2268 = vunpack.c.l.b16 %v2122
      %v2269 = vunpack.c.h.b16 %v2122
      %v2270 = vunpack.c.l.b16 %v2123
      %v2271 = vunpack.c.h.b16 %v2123
      %v2272 = vunpack.c.l.b16 %v2124
      %v2273 = vunpack.c.h.b16 %v2124
      %v2274 = vunpack.c.l.b16 %v2125
      %v2275 = vunpack.c.h.b16 %v2125
      %v2276 = vunpack.c.l.b16 %v2126
      %v2277 = vunpack.c.h.b16 %v2126
      %v2278 = vunpack.c.l.b16 %v2127
      %v2279 = vunpack.c.h.b16 %v2127
      %v2280 = vunpack.c.l.b16 %v2128
      %v2281 = vunpack.c.h.b16 %v2128
      %v2282 = vunpack.c.l.b16 %v2129
      %v2283 = vunpack.c.h.b16 %v2129
      %v2284 = vunpack.c.l.b16 %v2130
      %v2285 = vunpack.c.h.b16 %v2130
      %v2286 = vunpack.c.l.b16 %v2131
      %v2287 = vunpack.c.h.b16 %v2131
      %v2288 = vunpack.c.l.b16 %v2132
      %v2289 = vunpack.c.h.b16 %v2132
      %v2290 = vunpack.c.l.b16 %v2133
      %v2291 = vunpack.c.h.b16 %v2133
      %v2292 = vunpack.c.l.b16 %v2134
      %v2293 = vunpack.c.h.b16 %v2134
      %v2294 = vunpack.c.l.b16 %v2135
      %v2295 = vunpack.c.h.b16 %v2135
      %v2296 = vunpack.c.l.b16 %v2136
      %v2297 = vunpack.c.h.b16 %v2136
      %v2298 = vunpack.c.l.b16 %v2137
      %v2299 = vunpack.c.h.b16 %v2137
      %v2300 = vunpack.c.l.b16 %v2138
      %v2301 = vunpack.c.h.b16 %v2138
      %v2302 = vunpack.c.l.b16 %v2139
      %v2303 = vunpack.c.h.b16 %v2139
      %v2304 = vunpack.c.l.b16 %v2140
      %v2305 = vunpack.c.h.b16 %v2140
      %v2306 = vunpack.c.l.b16 %v2141
      %v2307 = vunpack.c.h.b16 %v2141
      %v2308 = vunpack.c.l.b16 %v2142
      %v2309 = vunpack.c.h.b16 %v2142
      %v2310 = vunpack.c.l.b16 %v2143
      %v2311 = vunpack.c.h.b16 %v2143
      %v2312 = vunpack.c.l.b16 %v2144
      %v2313 = vunpack.c.h.b16 %v2144
      %v2314 = vunpack.c.l.b16 %v2145
      %v2315 = vunpack.c.h.b16 %v2145
      %v2316 = vunpack.c.l.b16 %v2146
      %v2317 = vunpack.c.h.b16 %v2146
      %v2318 = vunpack.c.l.b16 %v2147
      %v2319 = vunpack.c.h.b16 %v2147
      %v2320 = vunpack.c.l.b16 %v2148
      %v2321 = vunpack.c.h.b16 %v2148
      %v2322 = vunpack.c.l.b16 %v2149
      %v2323 = vunpack.c.h.b16 %v2149
      %v2324 = vunpack.c.l.b16 %v2150
      %v2325 = vunpack.c.h.b16 %v2150
      %v2326 = vunpack.c.l.b16 %v2151
      %v2327 = vunpack.c.h.b16 %v2151
      %v2328 = vunpack.c.l.b16 %v2152
      %v2329 = vunpack.c.h.b16 %v2152
      %v2330 = vunpack.c.l.b16 %v2153
      %v2331 = vunpack.c.h.b16 %v2153
      %v2332 = vunpack.c.l.b16 %v2154
      %v2333 = vunpack.c.h.b16 %v2154
      %v2334 = vunpack.c.l.b16 %v2155
      %v2335 = vunpack.c.h.b16 %v2155
      %v2336 = vunpack.c.l.b16 %v2156
      %v2337 = vunpack.c.h.b16 %v2156
      %v2338 = vunpack.c.l.b16 %v2157
      %v2339 = vunpack.c.h.b16 %v2157
      %v2340 = vunpack.c.l.b16 %v2158
      %v2341 = vunpack.c.h.b16 %v2158
      %v2342 = vunpack.c.l.b16 %v2159
      %v2343 = vunpack.c.h.b16 %v2159
      %v2344 = vunpack.c.l.b16 %v2160
      %v2345 = vunpack.c.h.b16 %v2160
      %v2346 = vunpack.c.l.b16 %v2161
      %v2347 = vunpack.c.h.b16 %v2161
      %v2348 = vunpack.c.l.b16 %v2162
      %v2349 = vunpack.c.h.b16 %v2162
      %v2350 = vunpack.c.l.b16 %v2163
      %v2351 = vunpack.c.h.b16 %v2163
      %v2352 = vunpack.c.l.b16 %v2164
      %v2353 = vunpack.c.h.b16 %v2164
      %v2354 = vunpack.c.l.b16 %v2165
      %v2355 = vunpack.c.h.b16 %v2165
      %v2356 = vunpack.c.l.b16 %v2166
      %v2357 = vunpack.c.h.b16 %v2166
      %v2358 = vunpack.c.l.b16 %v2167
      %v2359 = vunpack.c.h.b16 %v2167
      %v2360 = vunpack.c.l.b16 %v2168
      %v2361 = vunpack.c.h.b16 %v2168
      %v2362 = vunpack.c.l.b16 %v2169
      %v2363 = vunpack.c.h.b16 %v2169
      %v2364 = vunpack.c.l.b16 %v2170
      %v2365 = vunpack.c.h.b16 %v2170
      %v2366 = vunpack.c.l.b16 %v2171
      %v2367 = vunpack.c.h.b16 %v2171
      %v2368 = vunpack.c.l.b16 %v2172
      %v2369 = vunpack.c.h.b16 %v2172
      %v2370 = vunpack.c.l.b16 %v2173
      %v2371 = vunpack.c.h.b16 %v2173
      %v2372 = vunpack.c.l.b16 %v2174
      %v2373 = vunpack.c.h.b16 %v2174
      %v2374 = vunpack.c.l.b16 %v2175
      %v2375 = vunpack.c.h.b16 %v2175
      %v2376 = vunpack.c.l.b16 %v2176
      %v2377 = vunpack.c.h.b16 %v2176
      %v2378 = vunpack.c.l.b16 %v2177
      %v2379 = vunpack.c.h.b16 %v2177
      %v2380 = vunpack.c.l.b16 %v2178
      %v2381 = vunpack.c.h.b16 %v2178
      %v2382 = vunpack.c.l.b16 %v2179
      %v2383 = vunpack.c.h.b16 %v2179
      %v2384 = vpack.c.b16 %v2258, %v2256
      %v2385 = vpack.c.b16 %v2259, %v2257
      %v2386 = vpack.c.b16 %v2262, %v2260
      %v2387 = vpack.c.b16 %v2263, %v2261
      %v2388 = vpack.c.b16 %v2266, %v2264
      %v2389 = vpack.c.b16 %v2267, %v2265
      %v2390 = vpack.c.b16 %v2270, %v2268
      %v2391 = vpack.c.b16 %v2271, %v2269
      %v2392 = vpack.c.b16 %v2274, %v2272
      %v2393 = vpack.c.b16 %v2275, %v2273
      %v2394 = vpack.c.b16 %v2278, %v2276
      %v2395 = vpack.c.b16 %v2279, %v2277
      %v2396 = vpack.c.b16 %v2282, %v2280
      %v2397 = vpack.c.b16 %v2283, %v2281
      %v2398 = vpack.c.b16 %v2286, %v2284
      %v2399 = vpack.c.b16 %v2287, %v2285
      %v2400 = vpack.c.b16 %v2290, %v2288
      %v2401 = vpack.c.b16 %v2291, %v2289
      %v2402 = vpack.c.b16 %v2294, %v2292
      %v2403 = vpack.c.b16 %v2295, %v2293
      %v2404 = vpack.c.b16 %v2298, %v2296
      %v2405 = vpack.c.b16 %v2299, %v2297
      %v2406 = vpack.c.b16 %v2302, %v2300
      %v2407 = vpack.c.b16 %v2303, %v2301
      %v2408 = vpack.c.b16 %v2306, %v2304
      %v2409 = vpack.c.b16 %v2307, %v2305
      %v2410 = vpack.c.b16 %v2310, %v2308
      %v2411 = vpack.c.b16 %v2311, %v2309
      %v2412 = vpack.c.b16 %v2314, %v2312
      %v2413 = vpack.c.b16 %v2315, %v2313
      %v2414 = vpack.c.b16 %v2318, %v2316
      %v2415 = vpack.c.b16 %v2319, %v2317
      %v2416 = vpack.c.b16 %v2322, %v2320
      %v2417 = vpack.c.b16 %v2323, %v2321
      %v2418 = vpack.c.b16 %v2326, %v2324
      %v2419 = vpack.c.b16 %v2327, %v2325
      %v2420 = vpack.c.b16 %v2330, %v2328
      %v2421 = vpack.c.b16 %v2331, %v2329
      %v2422 = vpack.c.b16 %v2334, %v2332
      %v2423 = vpack.c.b16 %v2335, %v2333
      %v2424 = vpack.c.b16 %v2338, %v2336
      %v2425 = vpack.c.b16 %v2339, %v2337
      %v2426 = vpack.c.b16 %v2342, %v2340
      %v2427 = vpack.c.b16 %v2343, %v2341
      %v2428 = vpack.c.b16 %v2346, %v2344
      %v2429 = vpack.c.b16 %v2347, %v2345
      %v2430 = vpack.c.b16 %v2350, %v2348
      %v2431 = vpack.c.b16 %v2351, %v2349
      %v2432 = vpack.c.b16 %v2354, %v2352
      %v2433 = vpack.c.b16 %v2355, %v2353
      %v2434 = vpack.c.b16 %v2358, %v2356
      %v2435 = vpack.c.b16 %v2359, %v2357
      %v2436 = vpack.c.b16 %v2362, %v2360
      %v2437 = vpack.c.b16 %v2363, %v2361
      %v2438 = vpack.c.b16 %v2366, %v2364
      %v2439 = vpack.c.b16 %v2367, %v2365
      %v2440 = vpack.c.b16 %v2370, %v2368
      %v2441 = vpack.c.b16 %v2371, %v2369
      %v2442 = vpack.c.b16 %v2374, %v2372
      %v2443 = vpack.c.b16 %v2375, %v2373
      %v2444 = vpack.c.b16 %v2378, %v2376
      %v2445 = vpack.c.b16 %v2379, %v2377
      %v2446 = vpack.c.b16 %v2382, %v2380
      %v2447 = vpack.c.b16 %v2383, %v2381
      %2512 = vmatprep.subr.bf16.mxu0 %v2385
      %2513 = vmatpush1.bf16.msra.mxu0 %v2384
      %2514 = vmatprep.subr.bf16.mxu0 %v2387
      %2515 = vmatpush1.bf16.msra.mxu0 %v2386
      %2516 = vmatprep.subr.bf16.mxu0 %v2389
      %2517 = vmatpush1.bf16.msra.mxu0 %v2388
      %2518 = vmatprep.subr.bf16.mxu0 %v2391
      %2519 = vmatpush1.bf16.msra.mxu0 %v2390
      %2520 = vmatprep.subr.bf16.mxu0 %v2393
      %2521 = vmatpush1.bf16.msra.mxu0 %v2392
      %2522 = vmatprep.subr.bf16.mxu0 %v2395
      %2523 = vmatpush1.bf16.msra.mxu0 %v2394
      %2524 = vmatprep.subr.bf16.mxu0 %v2397
      %2525 = vmatpush1.bf16.msra.mxu0 %v2396
      %2526 = vmatprep.subr.bf16.mxu0 %v2399
      %2527 = vmatpush1.bf16.msra.mxu0 %v2398
      %2528 = vmatprep.subr.bf16.mxu0 %v2401
      %2529 = vmatpush1.bf16.msra.mxu0 %v2400
      %2530 = vmatprep.subr.bf16.mxu0 %v2403
      %2531 = vmatpush1.bf16.msra.mxu0 %v2402
      %2532 = vmatprep.subr.bf16.mxu0 %v2405
      %2533 = vmatpush1.bf16.msra.mxu0 %v2404
      %2534 = vmatprep.subr.bf16.mxu0 %v2407
      %2535 = vmatpush1.bf16.msra.mxu0 %v2406
      %2536 = vmatprep.subr.bf16.mxu0 %v2409
      %2537 = vmatpush1.bf16.msra.mxu0 %v2408
      %2538 = vmatprep.subr.bf16.mxu0 %v2411
      %2539 = vmatpush1.bf16.msra.mxu0 %v2410
      %2540 = vmatprep.subr.bf16.mxu0 %v2413
      %2541 = vmatpush1.bf16.msra.mxu0 %v2412
      %2542 = vmatprep.subr.bf16.mxu0 %v2415
      %2543 = vmatpush1.bf16.msra.mxu0 %v2414
      %2544 = vmatprep.mubr.bf16.mxu0 %v2113
      %2545 = vmatmul.mubr.bf16.gmra.mrb[0].mxu0 %v2112
      %v2546 = vpop.f32.mrb[0].mxu0
      %v2547 = vadd.f32 %v2185, %v2546
      %v2548 = vpop.f32.mrb[0].mxu0
      %v2549 = vadd.f32 %v2189, %v2548
      %v2550 = vpop.f32.mrb[0].mxu0
      %v2551 = vadd.f32 %v2185, %v2550
      %v2552 = vpop.f32.mrb[0].mxu0
      %v2553 = vadd.f32 %v2189, %v2552
      %2554 = vdwg.mxu0
      %2555 = vmatprep.subr.bf16.mxu0 %v2417
      %2556 = vmatpush1.bf16.msra.mxu0 %v2416
      %2557 = vmatprep.subr.bf16.mxu0 %v2419
      %2558 = vmatpush1.bf16.msra.mxu0 %v2418
      %2559 = vmatprep.subr.bf16.mxu0 %v2421
      %2560 = vmatpush1.bf16.msra.mxu0 %v2420
      %2561 = vmatprep.subr.bf16.mxu0 %v2423
      %2562 = vmatpush1.bf16.msra.mxu0 %v2422
      %2563 = vmatprep.subr.bf16.mxu0 %v2425
      %2564 = vmatpush1.bf16.msra.mxu0 %v2424
      %2565 = vmatprep.subr.bf16.mxu0 %v2427
      %2566 = vmatpush1.bf16.msra.mxu0 %v2426
      %2567 = vmatprep.subr.bf16.mxu0 %v2429
      %2568 = vmatpush1.bf16.msra.mxu0 %v2428
      %2569 = vmatprep.subr.bf16.mxu0 %v2431
      %2570 = vmatpush1.bf16.msra.mxu0 %v2430
      %2571 = vmatprep.subr.bf16.mxu0 %v2433
      %2572 = vmatpush1.bf16.msra.mxu0 %v2432
      %2573 = vmatprep.subr.bf16.mxu0 %v2435
      %2574 = vmatpush1.bf16.msra.mxu0 %v2434
      %2575 = vmatprep.subr.bf16.mxu0 %v2437
      %2576 = vmatpush1.bf16.msra.mxu0 %v2436
      %2577 = vmatprep.subr.bf16.mxu0 %v2439
      %2578 = vmatpush1.bf16.msra.mxu0 %v2438
      %2579 = vmatprep.subr.bf16.mxu0 %v2441
      %2580 = vmatpush1.bf16.msra.mxu0 %v2440
      %2581 = vmatprep.subr.bf16.mxu0 %v2443
      %2582 = vmatpush1.bf16.msra.mxu0 %v2442
      %2583 = vmatprep.subr.bf16.mxu0 %v2445
      %2584 = vmatpush1.bf16.msra.mxu0 %v2444
      %2585 = vmatprep.subr.bf16.mxu0 %v2447
      %2586 = vmatpush1.bf16.msra.mxu0 %v2446
      %2587 = vmatprep.mubr.bf16.mxu0 %v2115
      %2588 = vmatmul.mubr.bf16.gmra.mrb[0].mxu0 %v2114
      %v2589 = vpop.f32.mrb[0].mxu0
      %v2590 = vadd.f32 %v2547, %v2589
      %v2591 = vpop.f32.mrb[0].mxu0
      %v2592 = vadd.f32 %v2549, %v2591
      %v2593 = vpop.f32.mrb[0].mxu0
      %v2594 = vadd.f32 %v2551, %v2593
      %v2595 = vpop.f32.mrb[0].mxu0
      %v2596 = vadd.f32 %v2553, %v2595
      %2597 = vdwg.mxu0
      %vm2598 = vcmp.gt.f32.partialorder %v2590, 0.0
      %vm2599 = vcmp.gt.f32.partialorder %v2592, 0.0
      %vm2600 = vcmp.gt.f32.partialorder %v2594, 0.0
      %vm2601 = vcmp.gt.f32.partialorder %v2596, 0.0
      %v2602 = vmul.f32 %v2590, 0.2
      %v2603 = vmul.f32 %v2592, 0.2
      %v2604 = vmul.f32 %v2594, 0.2
      %v2605 = vmul.f32 %v2596, 0.2
      %v2606 = vsel %vm2598, %v2590, %v2602
      %v2607 = vsel %vm2599, %v2592, %v2603
      %v2608 = vsel %vm2600, %v2594, %v2604
      %v2609 = vsel %vm2601, %v2596, %v2605
      %v2610 = vpack.c.bf16 %v2608, %v2606
      %v2611 = vpack.c.bf16 %v2609, %v2607
      %v2612 = vld [vmem:[#allocation9] sm:$0xf]
      %v2613 = vld [vmem:[#allocation9 + $0x4] sm:$0xf]
      %v2614 = vld [vmem:[#allocation9 + $0x8] sm:$0xf]
      %v2615 = vld [vmem:[#allocation9 + $0xc] sm:$0xf]
      %v2616 = vld [vmem:[#allocation9 + $0x10] sm:$0xf]
      %v2617 = vld [vmem:[#allocation9 + $0x14] sm:$0xf]
      %v2618 = vld [vmem:[#allocation9 + $0x18] sm:$0xf]
      %v2619 = vld [vmem:[#allocation9 + $0x1c] sm:$0xf]
      %v2620 = vld [vmem:[#allocation9 + $0x20] sm:$0xf]
      %v2621 = vld [vmem:[#allocation9 + $0x24] sm:$0xf]
      %v2622 = vld [vmem:[#allocation9 + $0x28] sm:$0xf]
      %v2623 = vld [vmem:[#allocation9 + $0x2c] sm:$0xf]
      %v2624 = vld [vmem:[#allocation9 + $0x30] sm:$0xf]
      %v2625 = vld [vmem:[#allocation9 + $0x34] sm:$0xf]
      %v2626 = vld [vmem:[#allocation9 + $0x38] sm:$0xf]
      %v2627 = vld [vmem:[#allocation9 + $0x3c] sm:$0xf]
      %v2628 = vld [vmem:[#allocation9 + $0x40] sm:$0xf]
      %v2629 = vld [vmem:[#allocation9 + $0x44] sm:$0xf]
      %v2630 = vld [vmem:[#allocation9 + $0x48] sm:$0xf]
      %v2631 = vld [vmem:[#allocation9 + $0x4c] sm:$0xf]
      %v2632 = vld [vmem:[#allocation9 + $0x50] sm:$0xf]
      %v2633 = vld [vmem:[#allocation9 + $0x54] sm:$0xf]
      %v2634 = vld [vmem:[#allocation9 + $0x58] sm:$0xf]
      %v2635 = vld [vmem:[#allocation9 + $0x5c] sm:$0xf]
      %v2636 = vld [vmem:[#allocation9 + $0x60] sm:$0xf]
      %v2637 = vld [vmem:[#allocation9 + $0x64] sm:$0xf]
      %v2638 = vld [vmem:[#allocation9 + $0x68] sm:$0xf]
      %v2639 = vld [vmem:[#allocation9 + $0x6c] sm:$0xf]
      %v2640 = vld [vmem:[#allocation9 + $0x70] sm:$0xf]
      %v2641 = vld [vmem:[#allocation9 + $0x74] sm:$0xf]
      %v2642 = vld [vmem:[#allocation9 + $0x78] sm:$0xf]
      %v2643 = vld [vmem:[#allocation9 + $0x7c] sm:$0xf]
      %v2676 = vunpack.c.l.b16 %v2612
      %v2677 = vunpack.c.l.b16 %v2613
      %v2678 = vunpack.c.l.b16 %v2614
      %v2679 = vunpack.c.l.b16 %v2615
      %v2680 = vunpack.c.l.b16 %v2616
      %v2681 = vunpack.c.l.b16 %v2617
      %v2682 = vunpack.c.l.b16 %v2618
      %v2683 = vunpack.c.l.b16 %v2619
      %v2684 = vunpack.c.l.b16 %v2620
      %v2685 = vunpack.c.l.b16 %v2621
      %v2686 = vunpack.c.l.b16 %v2622
      %v2687 = vunpack.c.l.b16 %v2623
      %v2688 = vunpack.c.l.b16 %v2624
      %v2689 = vunpack.c.l.b16 %v2625
      %v2690 = vunpack.c.l.b16 %v2626
      %v2691 = vunpack.c.l.b16 %v2627
      %v2692 = vunpack.c.l.b16 %v2628
      %v2693 = vunpack.c.l.b16 %v2629
      %v2694 = vunpack.c.l.b16 %v2630
      %v2695 = vunpack.c.l.b16 %v2631
      %v2696 = vunpack.c.l.b16 %v2632
      %v2697 = vunpack.c.l.b16 %v2633
      %v2698 = vunpack.c.l.b16 %v2634
      %v2699 = vunpack.c.l.b16 %v2635
      %v2700 = vunpack.c.l.b16 %v2636
      %v2701 = vunpack.c.l.b16 %v2637
      %v2702 = vunpack.c.l.b16 %v2638
      %v2703 = vunpack.c.l.b16 %v2639
      %v2704 = vunpack.c.l.b16 %v2640
      %v2705 = vunpack.c.l.b16 %v2641
      %v2706 = vunpack.c.l.b16 %v2642
      %v2707 = vunpack.c.l.b16 %v2643
      %v2708 = vpack.c.b16 %v2677, %v2676
      %v2709 = vpack.c.b16 %v2679, %v2678
      %v2710 = vpack.c.b16 %v2681, %v2680
      %v2711 = vpack.c.b16 %v2683, %v2682
      %v2712 = vpack.c.b16 %v2685, %v2684
      %v2713 = vpack.c.b16 %v2687, %v2686
      %v2714 = vpack.c.b16 %v2689, %v2688
      %v2715 = vpack.c.b16 %v2691, %v2690
      %v2716 = vpack.c.b16 %v2693, %v2692
      %v2717 = vpack.c.b16 %v2695, %v2694
      %v2718 = vpack.c.b16 %v2697, %v2696
      %v2719 = vpack.c.b16 %v2699, %v2698
      %v2720 = vpack.c.b16 %v2701, %v2700
      %v2721 = vpack.c.b16 %v2703, %v2702
      %v2722 = vpack.c.b16 %v2705, %v2704
      %v2723 = vpack.c.b16 %v2707, %v2706
      %2740 = vmatprep.subr.bf16.mxu0 0
      %2741 = vmatpush1.bf16.msra.mxu0 %v2708
      %2742 = vmatprep.subr.bf16.mxu0 0
      %2743 = vmatpush1.bf16.msra.mxu0 %v2709
      %2744 = vmatprep.subr.bf16.mxu0 0
      %2745 = vmatpush1.bf16.msra.mxu0 %v2710
      %2746 = vmatprep.subr.bf16.mxu0 0
      %2747 = vmatpush1.bf16.msra.mxu0 %v2711
      %2748 = vmatprep.subr.bf16.mxu0 0
      %2749 = vmatpush1.bf16.msra.mxu0 %v2712
      %2750 = vmatprep.subr.bf16.mxu0 0
      %2751 = vmatpush1.bf16.msra.mxu0 %v2713
      %2752 = vmatprep.subr.bf16.mxu0 0
      %2753 = vmatpush1.bf16.msra.mxu0 %v2714
      %2754 = vmatprep.subr.bf16.mxu0 0
      %2755 = vmatpush1.bf16.msra.mxu0 %v2715
      %2756 = vmatprep.subr.bf16.mxu0 0
      %2757 = vmatpush1.bf16.msra.mxu0 %v2716
      %2758 = vmatprep.subr.bf16.mxu0 0
      %2759 = vmatpush1.bf16.msra.mxu0 %v2717
      %2760 = vmatprep.subr.bf16.mxu0 0
      %2761 = vmatpush1.bf16.msra.mxu0 %v2718
      %2762 = vmatprep.subr.bf16.mxu0 0
      %2763 = vmatpush1.bf16.msra.mxu0 %v2719
      %2764 = vmatprep.subr.bf16.mxu0 0
      %2765 = vmatpush1.bf16.msra.mxu0 %v2720
      %2766 = vmatprep.subr.bf16.mxu0 0
      %2767 = vmatpush1.bf16.msra.mxu0 %v2721
      %2768 = vmatprep.subr.bf16.mxu0 0
      %2769 = vmatpush1.bf16.msra.mxu0 %v2722
      %2770 = vmatprep.subr.bf16.mxu0 0
      %2771 = vmatpush1.bf16.msra.mxu0 %v2723
      %2772 = vmatprep.mubr.bf16.mxu0 %v2611
      %2773 = vmatmul.mubr.bf16.gmra.mrb[0].mxu0 %v2610
      %v2774 = vpop.f32.mrb[0].mxu0
      %v2775 = vadd.f32 0.0, %v2774
      %v2776 = vpop.f32.mrb[0].mxu0
      %v2777 = vpop.f32.mrb[0].mxu0
      %v2778 = vadd.f32 0.0, %v2777
      %v2779 = vpop.f32.mrb[0].mxu0
      %2780 = vdwg.mxu0
      %s2781 = sld [smem:[#allocation3]]
      %v2782 = vstv %s2781
      %v2783 = vadd.f32 %v2775, %v2782
      %v2784 = vadd.f32 %v2778, %v2782
      %v2785 = vsub.f32 0.0, %v2783
      %v2786 = vsub.f32 0.0, %v2784
      %v2787 = vmul.f32 %v2785, 1.442695
      %v2788 = vpow.pop %v2787
      %v2789 = vmul.f32 %v2786, 1.442695
      %v2790 = vpow.pop %v2789
      %v2791 = vadd.f32 %v2788, 1.0
      %v2792 = vadd.f32 %v2790, 1.0
      %v2793 = vrcp.pop %v2791
      %v2794 = vrcp.pop %v2792
      %vm2795 = vcmask 7168
      %2796 = vst.msk [vmem:[%s7] sm:$0xff] %vm2795, %v2793
      %2797 = vst.msk [vmem:[%s7 + $0x8] sm:$0xff] %vm2795, %v2794
    $region53: #{tpu_custom_call.1} parent=1 // pred_fallthru
      _
    // Predicated region
    $region54: #{tpu_custom_call.1} parent=1 // pred_check
      _
    $region55: #{tpu_custom_call.1} parent=1 // pred_check_branch
      %2799 = sbr.rel (0) target = $region57
    $region56: #{tpu_custom_call.1} parent=1 // pred_region
      _
    $region57: #{tpu_custom_call.1} parent=1 // pred_fallthru
      _
    // Predicated region
    $region58: #{tpu_custom_call.1} parent=1 // pred_check
      _
    $region59: #{tpu_custom_call.1} parent=1 // pred_check_branch
      %2801 = sbr.rel (0) target = $region61
    $region60: #{tpu_custom_call.1} parent=1 // pred_region
      _
    $region61: #{tpu_custom_call.1} parent=1 // pred_fallthru
      _
    %2802 = vsyncpa [#allocation5], 1
    %2803 = vsyncpa [#allocation7], 1
    %2804 = vsyncpa [#allocation10], 1

// kernel: tpu_custom_call.1
$region0: #{tpu_custom_call.1}
  #allocation0 [shape = 'u32[]', space=smem, size = 0x4, offset = 0x4, fixed_abs, tag = 'smem constant byte address 0x4 - core index']
  #allocation1 [shape = 'u32[144,128]{1,0:T(1,128)}', space=vmem, size = 0x12000, scoped, tag = 'internal scratch']
  #allocation2 [shape = 'f32[16,512]{1,0:T(8,128)}', space=vmem, size = 0x8000, scoped, tag = 'scratch operand']
  #allocation3 [shape = 'f32[1,1]{1,0:T(1,128)S(6)}', space=smem, size = 0x200, scoped, tag = 'scoped memory for tpu_custom_call.1']
  %s0 = inlined_call_operand.hbm [shape: bf16[16,1024], index: 0, kind: input, shape index: {}]
  %s1 = inlined_call_operand.hbm [shape: bf16[1024,512], index: 1, kind: input, shape index: {}]
  %s2 = inlined_call_operand.vmem [shape: f32[1,512], index: 2, kind: input, shape index: {}]
  %s3 = inlined_call_operand.hbm [shape: bf16[512,256], index: 3, kind: input, shape index: {}]
  %s4 = inlined_call_operand.vmem [shape: f32[1,256], index: 4, kind: input, shape index: {}]
  %s5 = inlined_call_operand.hbm [shape: bf16[256,128], index: 5, kind: input, shape index: {}]
  %s6 = inlined_call_operand.<no memory space> [shape: f32[1,1], index: 6, kind: input, shape index: {}]
  %s7 = inlined_call_operand.vmem [shape: f32[16,1], index: 7, kind: output, shape index: {}]
  %s8 = sld [smem:[#allocation0]]
  $region62: #{tpu_custom_call.1} parent=0
    _
  %s10 = ssub.s32 1, %s8
  %s11 = scalar_select 0, %s10, %s8
  %12 = sst [smem:[#allocation3]] %s6
  $region1: #{tpu_custom_call.1} parent=0
    #allocation4 [shape = 'u8[32768]{0}', space=vmem, size = 0x8000, scoped, tag = 'input window, operand 0, single buffered']
    #allocation5 [shape = 's32[1]{0}', space=sflag, size = 0x4, scoped, tag = 'scoped memory for tpu_custom_call.1']
    #allocation6 [shape = 'u8[1048576]{0}', space=vmem, size = 0x100000, scoped, tag = 'input window, operand 1, single buffered']
    #allocation7 [shape = 's32[1]{0}', space=sflag, size = 0x4, scoped, tag = 'scoped memory for tpu_custom_call.1']
    #allocation8 [shape = 'u8[262144]{0}', space=vmem, size = 0x40000, scoped, tag = 'input window, operand 3, single buffered']
    #allocation9 [shape = 'u8[65536]{0}', space=vmem, size = 0x10000, scoped, tag = 'input window, operand 5, single buffered']
    #allocation10 [shape = 's32[1]{0}', space=sflag, size = 0x4, scoped, tag = 'scoped memory for tpu_custom_call.1']
    %13 = vsyncpa [#allocation5], 0
    %14 = vsyncpa [#allocation7], 0
    %15 = vsyncpa [#allocation10], 0
    // Predicated region
    $region2: #{tpu_custom_call.1} parent=1 // pred_check
      _
    $region3: #{tpu_custom_call.1} parent=1 // pred_check_branch
      %17 = sbr.rel (0) target = $region5
    $region4: #{tpu_custom_call.1} parent=1 // pred_region
      %s19 = ssub.s32 1024, 1024
      %20 = vsyncadd [#allocation5], %s19
      %s21 = sshll.u32 [#allocation4], 4
      %s22 = int_to_ptr.vmem [resolvable:$true] %s21
      %27 = dma.hbm_to_vmem [thread:$0]  %s0, 1024, %s22, [#allocation5], 512, 512, 32
    $region5: #{tpu_custom_call.1} parent=1 // pred_fallthru
      _
    // Predicated region
    $region6: #{tpu_custom_call.1} parent=1 // pred_check
      _
    $region7: #{tpu_custom_call.1} parent=1 // pred_check_branch
      %29 = sbr.rel (0) target = $region9
    $region8: #{tpu_custom_call.1} parent=1 // pred_region
      %s31 = ssub.s32 32768, 32768
      %32 = vsyncadd [#allocation7], %s31
      %s33 = sshll.u32 [#allocation6], 4
      %s34 = int_to_ptr.vmem [resolvable:$true] %s33
      %39 = dma.hbm_to_vmem [thread:$0]  %s1, 32768, %s34, [#allocation7], 256, 256, 16
    $region9: #{tpu_custom_call.1} parent=1 // pred_fallthru
      _
    // Predicated region
    $region10: #{tpu_custom_call.1} parent=1 // pred_check
      _
    $region11: #{tpu_custom_call.1} parent=1 // pred_check_branch
      %41 = sbr.rel (0) target = $region13
    $region12: #{tpu_custom_call.1} parent=1 // pred_region
      _
    $region13: #{tpu_custom_call.1} parent=1 // pred_fallthru
      _
    // Predicated region
    $region14: #{tpu_custom_call.1} parent=1 // pred_check
      _
    $region15: #{tpu_custom_call.1} parent=1 // pred_check_branch
      %43 = sbr.rel (0) target = $region17
    $region16: #{tpu_custom_call.1} parent=1 // pred_region
      %s45 = ssub.s32 8192, 8192
      %46 = vsyncadd [#allocation7], %s45
      %s47 = sshll.u32 [#allocation8], 4
      %s48 = int_to_ptr.vmem [resolvable:$true] %s47
      %53 = dma.hbm_to_vmem [thread:$0]  %s3, 8192, %s48, [#allocation7], 128, 128, 8
    $region17: #{tpu_custom_call.1} parent=1 // pred_fallthru
      _
    // Predicated region
    $region18: #{tpu_custom_call.1} parent=1 // pred_check
      _
    $region19: #{tpu_custom_call.1} parent=1 // pred_check_branch
      %55 = sbr.rel (0) target = $region21
    $region20: #{tpu_custom_call.1} parent=1 // pred_region
      _
    $region21: #{tpu_custom_call.1} parent=1 // pred_fallthru
      _
    // Predicated region
    $region22: #{tpu_custom_call.1} parent=1 // pred_check
      _
    $region23: #{tpu_custom_call.1} parent=1 // pred_check_branch
      %57 = sbr.rel (0) target = $region25
    $region24: #{tpu_custom_call.1} parent=1 // pred_region
      %s59 = ssub.s32 2048, 2048
      %60 = vsyncadd [#allocation10], %s59
      %s61 = sshll.u32 [#allocation9], 4
      %s62 = int_to_ptr.vmem [resolvable:$true] %s61
      %67 = dma.hbm_to_vmem [thread:$0]  %s5, 2048, %s62, [#allocation10], 64, 64, 4
    $region25: #{tpu_custom_call.1} parent=1 // pred_fallthru
      _
    // Predicated region
    $region26: #{tpu_custom_call.1} parent=1 // pred_check
      _
    $region27: #{tpu_custom_call.1} parent=1 // pred_check_branch
      %69 = sbr.rel (0) target = $region29
    $region28: #{tpu_custom_call.1} parent=1 // pred_region
      _
    $region29: #{tpu_custom_call.1} parent=1 // pred_fallthru
      _
    // Predicated region
    $region30: #{tpu_custom_call.1} parent=1 // pred_check
      _
    $region31: #{tpu_custom_call.1} parent=1 // pred_check_branch
      %71 = sbr.rel (0) target = $region33
    $region32: #{tpu_custom_call.1} parent=1 // pred_region
      %72 = dma.done [#allocation5], 1024
    $region33: #{tpu_custom_call.1} parent=1 // pred_fallthru
      _
    // Predicated region
    $region34: #{tpu_custom_call.1} parent=1 // pred_check
      _
    $region35: #{tpu_custom_call.1} parent=1 // pred_check_branch
      %74 = sbr.rel (0) target = $region37
    $region36: #{tpu_custom_call.1} parent=1 // pred_region
      %75 = dma.done [#allocation7], 32768
    $region37: #{tpu_custom_call.1} parent=1 // pred_fallthru
      _
    // Predicated region
    $region38: #{tpu_custom_call.1} parent=1 // pred_check
      _
    $region39: #{tpu_custom_call.1} parent=1 // pred_check_branch
      %77 = sbr.rel (0) target = $region41
    $region40: #{tpu_custom_call.1} parent=1 // pred_region
      %78 = dma.done [#allocation7], 8192
    $region41: #{tpu_custom_call.1} parent=1 // pred_fallthru
      _
    // Predicated region
    $region42: #{tpu_custom_call.1} parent=1 // pred_check
      _
    $region43: #{tpu_custom_call.1} parent=1 // pred_check_branch
      %80 = sbr.rel (0) target = $region45
    $region44: #{tpu_custom_call.1} parent=1 // pred_region
      %81 = dma.done [#allocation10], 2048
    $region45: #{tpu_custom_call.1} parent=1 // pred_fallthru
      _
    %p83 = scmp.eq.s32.totalorder 0, 0
    // Predicated region
    $region46: #{tpu_custom_call.1} parent=1 // pred_check
      %p84 = pneg %p83
    $region47: #{tpu_custom_call.1} parent=1 // pred_check_branch
      %86 = sbr.rel (%p84) target = $region49
    $region48: #{tpu_custom_call.1} parent=1 // pred_region
      %87 = vst [vmem:[#allocation2] sm:$0xff] 0.0
      %88 = vst [vmem:[#allocation2 + $0x8] sm:$0xff] 0.0
      %89 = vst [vmem:[#allocation2 + $0x10] sm:$0xff] 0.0
      %90 = vst [vmem:[#allocation2 + $0x18] sm:$0xff] 0.0
      %91 = vst [vmem:[#allocation2 + $0x20] sm:$0xff] 0.0
      %92 = vst [vmem:[#allocation2 + $0x28] sm:$0xff] 0.0
      %93 = vst [vmem:[#allocation2 + $0x30] sm:$0xff] 0.0
      %94 = vst [vmem:[#allocation2 + $0x38] sm:$0xff] 0.0
    $region49: #{tpu_custom_call.1} parent=1 // pred_fallthru
      _
    %v95 = vld [vmem:[#allocation2] sm:$0xff]
    %v96 = vld [vmem:[#allocation2 + $0x8] sm:$0xff]
    %v97 = vld [vmem:[#allocation2 + $0x10] sm:$0xff]
    %v98 = vld [vmem:[#allocation2 + $0x18] sm:$0xff]
    %v99 = vld [vmem:[#allocation2 + $0x20] sm:$0xff]
    %v100 = vld [vmem:[#allocation2 + $0x28] sm:$0xff]
    %v101 = vld [vmem:[#allocation2 + $0x30] sm:$0xff]
    %v102 = vld [vmem:[#allocation2 + $0x38] sm:$0xff]
    %v103 = vld [vmem:[#allocation4] sm:$0xff]
    %v104 = vld [vmem:[#allocation4 + $0x8] sm:$0xff]
    %v105 = vld [vmem:[#allocation4 + $0x10] sm:$0xff]
    %v106 = vld [vmem:[#allocation4 + $0x18] sm:$0xff]
    %v107 = vld [vmem:[#allocation4 + $0x20] sm:$0xff]
    %v108 = vld [vmem:[#allocation4 + $0x28] sm:$0xff]
    %v109 = vld [vmem:[#allocation4 + $0x30] sm:$0xff]
    %v110 = vld [vmem:[#allocation4 + $0x38] sm:$0xff]
    %v111 = vld [vmem:[#allocation6] sm:$0xff]
    %v112 = vld [vmem:[#allocation6 + $0x8] sm:$0xff]
    %v113 = vld [vmem:[#allocation6 + $0x10] sm:$0xff]
    %v114 = vld [vmem:[#allocation6 + $0x18] sm:$0xff]
    %v115 = vld [vmem:[#allocation6 + $0x20] sm:$0xff]
    %v116 = vld [vmem:[#allocation6 + $0x28] sm:$0xff]
    %v117 = vld [vmem:[#allocation6 + $0x30] sm:$0xff]
    %v118 = vld [vmem:[#allocation6 + $0x38] sm:$0xff]
    %v119 = vld [vmem:[#allocation6 + $0x40] sm:$0xff]
    %v120 = vld [vmem:[#allocation6 + $0x48] sm:$0xff]
    %v121 = vld [vmem:[#allocation6 + $0x50] sm:$0xff]
    %v122 = vld [vmem:[#allocation6 + $0x58] sm:$0xff]
    %v123 = vld [vmem:[#allocation6 + $0x60] sm:$0xff]
    %v124 = vld [vmem:[#allocation6 + $0x68] sm:$0xff]
    %v125 = vld [vmem:[#allocation6 + $0x70] sm:$0xff]
    %v126 = vld [vmem:[#allocation6 + $0x78] sm:$0xff]
    %v127 = vld [vmem:[#allocation6 + $0x80] sm:$0xff]
    %v128 = vld [vmem:[#allocation6 + $0x88] sm:$0xff]
    %v129 = vld [vmem:[#allocation6 + $0x90] sm:$0xff]
    %v130 = vld [vmem:[#allocation6 + $0x98] sm:$0xff]
    %v131 = vld [vmem:[#allocation6 + $0xa0] sm:$0xff]
    %v132 = vld [vmem:[#allocation6 + $0xa8] sm:$0xff]
    %v133 = vld [vmem:[#allocation6 + $0xb0] sm:$0xff]
    %v134 = vld [vmem:[#allocation6 + $0xb8] sm:$0xff]
    %v135 = vld [vmem:[#allocation6 + $0xc0] sm:$0xff]
    %v136 = vld [vmem:[#allocation6 + $0xc8] sm:$0xff]
    %v137 = vld [vmem:[#allocation6 + $0xd0] sm:$0xff]
    %v138 = vld [vmem:[#allocation6 + $0xd8] sm:$0xff]
    %v139 = vld [vmem:[#allocation6 + $0xe0] sm:$0xff]
    %v140 = vld [vmem:[#allocation6 + $0xe8] sm:$0xff]
    %v141 = vld [vmem:[#allocation6 + $0xf0] sm:$0xff]
    %v142 = vld [vmem:[#allocation6 + $0xf8] sm:$0xff]
    %v143 = vld [vmem:[#allocation6 + $0x100] sm:$0xff]
    %v144 = vld [vmem:[#allocation6 + $0x108] sm:$0xff]
    %v145 = vld [vmem:[#allocation6 + $0x110] sm:$0xff]
    %v146 = vld [vmem:[#allocation6 + $0x118] sm:$0xff]
    %v147 = vld [vmem:[#allocation6 + $0x120] sm:$0xff]
    %v148 = vld [vmem:[#allocation6 + $0x128] sm:$0xff]
    %v149 = vld [vmem:[#allocation6 + $0x130] sm:$0xff]
    %v150 = vld [vmem:[#allocation6 + $0x138] sm:$0xff]
    %v151 = vld [vmem:[#allocation6 + $0x140] sm:$0xff]
    %v152 = vld [vmem:[#allocation6 + $0x148] sm:$0xff]
    %v153 = vld [vmem:[#allocation6 + $0x150] sm:$0xff]
    %v154 = vld [vmem:[#allocation6 + $0x158] sm:$0xff]
    %v155 = vld [vmem:[#allocation6 + $0x160] sm:$0xff]
    %v156 = vld [vmem:[#allocation6 + $0x168] sm:$0xff]
    %v157 = vld [vmem:[#allocation6 + $0x170] sm:$0xff]
    %v158 = vld [vmem:[#allocation6 + $0x178] sm:$0xff]
    %v159 = vld [vmem:[#allocation6 + $0x180] sm:$0xff]
    %v160 = vld [vmem:[#allocation6 + $0x188] sm:$0xff]
    %v161 = vld [vmem:[#allocation6 + $0x190] sm:$0xff]
    %v162 = vld [vmem:[#allocation6 + $0x198] sm:$0xff]
    %v163 = vld [vmem:[#allocation6 + $0x1a0] sm:$0xff]
    %v164 = vld [vmem:[#allocation6 + $0x1a8] sm:$0xff]
    %v165 = vld [vmem:[#allocation6 + $0x1b0] sm:$0xff]
    %v166 = vld [vmem:[#allocation6 + $0x1b8] sm:$0xff]
    %v167 = vld [vmem:[#allocation6 + $0x1c0] sm:$0xff]
    %v168 = vld [vmem:[#allocation6 + $0x1c8] sm:$0xff]
    %v169 = vld [vmem:[#allocation6 + $0x1d0] sm:$0xff]
    %v170 = vld [vmem:[#allocation6 + $0x1d8] sm:$0xff]
    %v171 = vld [vmem:[#allocation6 + $0x1e0] sm:$0xff]
    %v172 = vld [vmem:[#allocation6 + $0x1e8] sm:$0xff]
    %v173 = vld [vmem:[#allocation6 + $0x1f0] sm:$0xff]
    %v174 = vld [vmem:[#allocation6 + $0x1f8] sm:$0xff]
    %v175 = vld [vmem:[#allocation6 + $0x200] sm:$0xff]
    %v176 = vld [vmem:[#allocation6 + $0x208] sm:$0xff]
    %v177 = vld [vmem:[#allocation6 + $0x210] sm:$0xff]
    %v178 = vld [vmem:[#allocation6 + $0x218] sm:$0xff]
    %v179 = vld [vmem:[#allocation6 + $0x220] sm:$0xff]
    %v180 = vld [vmem:[#allocation6 + $0x228] sm:$0xff]
    %v181 = vld [vmem:[#allocation6 + $0x230] sm:$0xff]
    %v182 = vld [vmem:[#allocation6 + $0x238] sm:$0xff]
    %v183 = vld [vmem:[#allocation6 + $0x240] sm:$0xff]
    %v184 = vld [vmem:[#allocation6 + $0x248] sm:$0xff]
    %v185 = vld [vmem:[#allocation6 + $0x250] sm:$0xff]
    %v186 = vld [vmem:[#allocation6 + $0x258] sm:$0xff]
    %v187 = vld [vmem:[#allocation6 + $0x260] sm:$0xff]
    %v188 = vld [vmem:[#allocation6 + $0x268] sm:$0xff]
    %v189 = vld [vmem:[#allocation6 + $0x270] sm:$0xff]
    %v190 = vld [vmem:[#allocation6 + $0x278] sm:$0xff]
    %v191 = vld [vmem:[#allocation6 + $0x280] sm:$0xff]
    %v192 = vld [vmem:[#allocation6 + $0x288] sm:$0xff]
    %v193 = vld [vmem:[#allocation6 + $0x290] sm:$0xff]
    %v194 = vld [vmem:[#allocation6 + $0x298] sm:$0xff]
    %v195 = vld [vmem:[#allocation6 + $0x2a0] sm:$0xff]
    %v196 = vld [vmem:[#allocation6 + $0x2a8] sm:$0xff]
    %v197 = vld [vmem:[#allocation6 + $0x2b0] sm:$0xff]
    %v198 = vld [vmem:[#allocation6 + $0x2b8] sm:$0xff]
    %v199 = vld [vmem:[#allocation6 + $0x2c0] sm:$0xff]
    %v200 = vld [vmem:[#allocation6 + $0x2c8] sm:$0xff]
    %v201 = vld [vmem:[#allocation6 + $0x2d0] sm:$0xff]
    %v202 = vld [vmem:[#allocation6 + $0x2d8] sm:$0xff]
    %v203 = vld [vmem:[#allocation6 + $0x2e0] sm:$0xff]
    %v204 = vld [vmem:[#allocation6 + $0x2e8] sm:$0xff]
    %v205 = vld [vmem:[#allocation6 + $0x2f0] sm:$0xff]
    %v206 = vld [vmem:[#allocation6 + $0x2f8] sm:$0xff]
    %v207 = vld [vmem:[#allocation6 + $0x300] sm:$0xff]
    %v208 = vld [vmem:[#allocation6 + $0x308] sm:$0xff]
    %v209 = vld [vmem:[#allocation6 + $0x310] sm:$0xff]
    %v210 = vld [vmem:[#allocation6 + $0x318] sm:$0xff]
    %v211 = vld [vmem:[#allocation6 + $0x320] sm:$0xff]
    %v212 = vld [vmem:[#allocation6 + $0x328] sm:$0xff]
    %v213 = vld [vmem:[#allocation6 + $0x330] sm:$0xff]
    %v214 = vld [vmem:[#allocation6 + $0x338] sm:$0xff]
    %v215 = vld [vmem:[#allocation6 + $0x340] sm:$0xff]
    %v216 = vld [vmem:[#allocation6 + $0x348] sm:$0xff]
    %v217 = vld [vmem:[#allocation6 + $0x350] sm:$0xff]
    %v218 = vld [vmem:[#allocation6 + $0x358] sm:$0xff]
    %v219 = vld [vmem:[#allocation6 + $0x360] sm:$0xff]
    %v220 = vld [vmem:[#allocation6 + $0x368] sm:$0xff]
    %v221 = vld [vmem:[#allocation6 + $0x370] sm:$0xff]
    %v222 = vld [vmem:[#allocation6 + $0x378] sm:$0xff]
    %v223 = vld [vmem:[#allocation6 + $0x380] sm:$0xff]
    %v224 = vld [vmem:[#allocation6 + $0x388] sm:$0xff]
    %v225 = vld [vmem:[#allocation6 + $0x390] sm:$0xff]
    %v226 = vld [vmem:[#allocation6 + $0x398] sm:$0xff]
    %v227 = vld [vmem:[#allocation6 + $0x3a0] sm:$0xff]
    %v228 = vld [vmem:[#allocation6 + $0x3a8] sm:$0xff]
    %v229 = vld [vmem:[#allocation6 + $0x3b0] sm:$0xff]
    %v230 = vld [vmem:[#allocation6 + $0x3b8] sm:$0xff]
    %v231 = vld [vmem:[#allocation6 + $0x3c0] sm:$0xff]
    %v232 = vld [vmem:[#allocation6 + $0x3c8] sm:$0xff]
    %v233 = vld [vmem:[#allocation6 + $0x3d0] sm:$0xff]
    %v234 = vld [vmem:[#allocation6 + $0x3d8] sm:$0xff]
    %v235 = vld [vmem:[#allocation6 + $0x3e0] sm:$0xff]
    %v236 = vld [vmem:[#allocation6 + $0x3e8] sm:$0xff]
    %v237 = vld [vmem:[#allocation6 + $0x3f0] sm:$0xff]
    %v238 = vld [vmem:[#allocation6 + $0x3f8] sm:$0xff]
    %v239 = vld [vmem:[#allocation6 + $0x400] sm:$0xff]
    %v240 = vld [vmem:[#allocation6 + $0x408] sm:$0xff]
    %v241 = vld [vmem:[#allocation6 + $0x410] sm:$0xff]
    %v242 = vld [vmem:[#allocation6 + $0x418] sm:$0xff]
    %v243 = vld [vmem:[#allocation6 + $0x420] sm:$0xff]
    %v244 = vld [vmem:[#allocation6 + $0x428] sm:$0xff]
    %v245 = vld [vmem:[#allocation6 + $0x430] sm:$0xff]
    %v246 = vld [vmem:[#allocation6 + $0x438] sm:$0xff]
    %v247 = vld [vmem:[#allocation6 + $0x440] sm:$0xff]
    %v248 = vld [vmem:[#allocation6 + $0x448] sm:$0xff]
    %v249 = vld [vmem:[#allocation6 + $0x450] sm:$0xff]
    %v250 = vld [vmem:[#allocation6 + $0x458] sm:$0xff]
    %v251 = vld [vmem:[#allocation6 + $0x460] sm:$0xff]
    %v252 = vld [vmem:[#allocation6 + $0x468] sm:$0xff]
    %v253 = vld [vmem:[#allocation6 + $0x470] sm:$0xff]
    %v254 = vld [vmem:[#allocation6 + $0x478] sm:$0xff]
    %v255 = vld [vmem:[#allocation6 + $0x480] sm:$0xff]
    %v256 = vld [vmem:[#allocation6 + $0x488] sm:$0xff]
    %v257 = vld [vmem:[#allocation6 + $0x490] sm:$0xff]
    %v258 = vld [vmem:[#allocation6 + $0x498] sm:$0xff]
    %v259 = vld [vmem:[#allocation6 + $0x4a0] sm:$0xff]
    %v260 = vld [vmem:[#allocation6 + $0x4a8] sm:$0xff]
    %v261 = vld [vmem:[#allocation6 + $0x4b0] sm:$0xff]
    %v262 = vld [vmem:[#allocation6 + $0x4b8] sm:$0xff]
    %v263 = vld [vmem:[#allocation6 + $0x4c0] sm:$0xff]
    %v264 = vld [vmem:[#allocation6 + $0x4c8] sm:$0xff]
    %v265 = vld [vmem:[#allocation6 + $0x4d0] sm:$0xff]
    %v266 = vld [vmem:[#allocation6 + $0x4d8] sm:$0xff]
    %v267 = vld [vmem:[#allocation6 + $0x4e0] sm:$0xff]
    %v268 = vld [vmem:[#allocation6 + $0x4e8] sm:$0xff]
    %v269 = vld [vmem:[#allocation6 + $0x4f0] sm:$0xff]
    %v270 = vld [vmem:[#allocation6 + $0x4f8] sm:$0xff]
    %v271 = vld [vmem:[#allocation6 + $0x500] sm:$0xff]
    %v272 = vld [vmem:[#allocation6 + $0x508] sm:$0xff]
    %v273 = vld [vmem:[#allocation6 + $0x510] sm:$0xff]
    %v274 = vld [vmem:[#allocation6 + $0x518] sm:$0xff]
    %v275 = vld [vmem:[#allocation6 + $0x520] sm:$0xff]
    %v276 = vld [vmem:[#allocation6 + $0x528] sm:$0xff]
    %v277 = vld [vmem:[#allocation6 + $0x530] sm:$0xff]
    %v278 = vld [vmem:[#allocation6 + $0x538] sm:$0xff]
    %v279 = vld [vmem:[#allocation6 + $0x540] sm:$0xff]
    %v280 = vld [vmem:[#allocation6 + $0x548] sm:$0xff]
    %v281 = vld [vmem:[#allocation6 + $0x550] sm:$0xff]
    %v282 = vld [vmem:[#allocation6 + $0x558] sm:$0xff]
    %v283 = vld [vmem:[#allocation6 + $0x560] sm:$0xff]
    %v284 = vld [vmem:[#allocation6 + $0x568] sm:$0xff]
    %v285 = vld [vmem:[#allocation6 + $0x570] sm:$0xff]
    %v286 = vld [vmem:[#allocation6 + $0x578] sm:$0xff]
    %v287 = vld [vmem:[#allocation6 + $0x580] sm:$0xff]
    %v288 = vld [vmem:[#allocation6 + $0x588] sm:$0xff]
    %v289 = vld [vmem:[#allocation6 + $0x590] sm:$0xff]
    %v290 = vld [vmem:[#allocation6 + $0x598] sm:$0xff]
    %v291 = vld [vmem:[#allocation6 + $0x5a0] sm:$0xff]
    %v292 = vld [vmem:[#allocation6 + $0x5a8] sm:$0xff]
    %v293 = vld [vmem:[#allocation6 + $0x5b0] sm:$0xff]
    %v294 = vld [vmem:[#allocation6 + $0x5b8] sm:$0xff]
    %v295 = vld [vmem:[#allocation6 + $0x5c0] sm:$0xff]
    %v296 = vld [vmem:[#allocation6 + $0x5c8] sm:$0xff]
    %v297 = vld [vmem:[#allocation6 + $0x5d0] sm:$0xff]
    %v298 = vld [vmem:[#allocation6 + $0x5d8] sm:$0xff]
    %v299 = vld [vmem:[#allocation6 + $0x5e0] sm:$0xff]
    %v300 = vld [vmem:[#allocation6 + $0x5e8] sm:$0xff]
    %v301 = vld [vmem:[#allocation6 + $0x5f0] sm:$0xff]
    %v302 = vld [vmem:[#allocation6 + $0x5f8] sm:$0xff]
    %v303 = vld [vmem:[#allocation6 + $0x600] sm:$0xff]
    %v304 = vld [vmem:[#allocation6 + $0x608] sm:$0xff]
    %v305 = vld [vmem:[#allocation6 + $0x610] sm:$0xff]
    %v306 = vld [vmem:[#allocation6 + $0x618] sm:$0xff]
    %v307 = vld [vmem:[#allocation6 + $0x620] sm:$0xff]
    %v308 = vld [vmem:[#allocation6 + $0x628] sm:$0xff]
    %v309 = vld [vmem:[#allocation6 + $0x630] sm:$0xff]
    %v310 = vld [vmem:[#allocation6 + $0x638] sm:$0xff]
    %v311 = vld [vmem:[#allocation6 + $0x640] sm:$0xff]
    %v312 = vld [vmem:[#allocation6 + $0x648] sm:$0xff]
    %v313 = vld [vmem:[#allocation6 + $0x650] sm:$0xff]
    %v314 = vld [vmem:[#allocation6 + $0x658] sm:$0xff]
    %v315 = vld [vmem:[#allocation6 + $0x660] sm:$0xff]
    %v316 = vld [vmem:[#allocation6 + $0x668] sm:$0xff]
    %v317 = vld [vmem:[#allocation6 + $0x670] sm:$0xff]
    %v318 = vld [vmem:[#allocation6 + $0x678] sm:$0xff]
    %v319 = vld [vmem:[#allocation6 + $0x680] sm:$0xff]
    %v320 = vld [vmem:[#allocation6 + $0x688] sm:$0xff]
    %v321 = vld [vmem:[#allocation6 + $0x690] sm:$0xff]
    %v322 = vld [vmem:[#allocation6 + $0x698] sm:$0xff]
    %v323 = vld [vmem:[#allocation6 + $0x6a0] sm:$0xff]
    %v324 = vld [vmem:[#allocation6 + $0x6a8] sm:$0xff]
    %v325 = vld [vmem:[#allocation6 + $0x6b0] sm:$0xff]
    %v326 = vld [vmem:[#allocation6 + $0x6b8] sm:$0xff]
    %v327 = vld [vmem:[#allocation6 + $0x6c0] sm:$0xff]
    %v328 = vld [vmem:[#allocation6 + $0x6c8] sm:$0xff]
    %v329 = vld [vmem:[#allocation6 + $0x6d0] sm:$0xff]
    %v330 = vld [vmem:[#allocation6 + $0x6d8] sm:$0xff]
    %v331 = vld [vmem:[#allocation6 + $0x6e0] sm:$0xff]
    %v332 = vld [vmem:[#allocation6 + $0x6e8] sm:$0xff]
    %v333 = vld [vmem:[#allocation6 + $0x6f0] sm:$0xff]
    %v334 = vld [vmem:[#allocation6 + $0x6f8] sm:$0xff]
    %v335 = vld [vmem:[#allocation6 + $0x700] sm:$0xff]
    %v336 = vld [vmem:[#allocation6 + $0x708] sm:$0xff]
    %v337 = vld [vmem:[#allocation6 + $0x710] sm:$0xff]
    %v338 = vld [vmem:[#allocation6 + $0x718] sm:$0xff]
    %v339 = vld [vmem:[#allocation6 + $0x720] sm:$0xff]
    %v340 = vld [vmem:[#allocation6 + $0x728] sm:$0xff]
    %v341 = vld [vmem:[#allocation6 + $0x730] sm:$0xff]
    %v342 = vld [vmem:[#allocation6 + $0x738] sm:$0xff]
    %v343 = vld [vmem:[#allocation6 + $0x740] sm:$0xff]
    %v344 = vld [vmem:[#allocation6 + $0x748] sm:$0xff]
    %v345 = vld [vmem:[#allocation6 + $0x750] sm:$0xff]
    %v346 = vld [vmem:[#allocation6 + $0x758] sm:$0xff]
    %v347 = vld [vmem:[#allocation6 + $0x760] sm:$0xff]
    %v348 = vld [vmem:[#allocation6 + $0x768] sm:$0xff]
    %v349 = vld [vmem:[#allocation6 + $0x770] sm:$0xff]
    %v350 = vld [vmem:[#allocation6 + $0x778] sm:$0xff]
    %v351 = vld [vmem:[#allocation6 + $0x780] sm:$0xff]
    %v352 = vld [vmem:[#allocation6 + $0x788] sm:$0xff]
    %v353 = vld [vmem:[#allocation6 + $0x790] sm:$0xff]
    %v354 = vld [vmem:[#allocation6 + $0x798] sm:$0xff]
    %v355 = vld [vmem:[#allocation6 + $0x7a0] sm:$0xff]
    %v356 = vld [vmem:[#allocation6 + $0x7a8] sm:$0xff]
    %v357 = vld [vmem:[#allocation6 + $0x7b0] sm:$0xff]
    %v358 = vld [vmem:[#allocation6 + $0x7b8] sm:$0xff]
    %v359 = vld [vmem:[#allocation6 + $0x7c0] sm:$0xff]
    %v360 = vld [vmem:[#allocation6 + $0x7c8] sm:$0xff]
    %v361 = vld [vmem:[#allocation6 + $0x7d0] sm:$0xff]
    %v362 = vld [vmem:[#allocation6 + $0x7d8] sm:$0xff]
    %v363 = vld [vmem:[#allocation6 + $0x7e0] sm:$0xff]
    %v364 = vld [vmem:[#allocation6 + $0x7e8] sm:$0xff]
    %v365 = vld [vmem:[#allocation6 + $0x7f0] sm:$0xff]
    %v366 = vld [vmem:[#allocation6 + $0x7f8] sm:$0xff]
    %v375 = vunpack.c.l.b16 %v103
    %v376 = vunpack.c.h.b16 %v103
    %v377 = vunpack.c.l.b16 %v104
    %v378 = vunpack.c.h.b16 %v104
    %v379 = vunpack.c.l.b16 %v105
    %v380 = vunpack.c.h.b16 %v105
    %v381 = vunpack.c.l.b16 %v106
    %v382 = vunpack.c.h.b16 %v106
    %v383 = vunpack.c.l.b16 %v107
    %v384 = vunpack.c.h.b16 %v107
    %v385 = vunpack.c.l.b16 %v108
    %v386 = vunpack.c.h.b16 %v108
    %v387 = vunpack.c.l.b16 %v109
    %v388 = vunpack.c.h.b16 %v109
    %v389 = vunpack.c.l.b16 %v110
    %v390 = vunpack.c.h.b16 %v110
    %v391 = vpack.c.b16 %v383, %v375
    %v392 = vpack.c.b16 %v384, %v376
    %v393 = vpack.c.b16 %v385, %v377
    %v394 = vpack.c.b16 %v386, %v378
    %v395 = vpack.c.b16 %v387, %v379
    %v396 = vpack.c.b16 %v388, %v380
    %v397 = vpack.c.b16 %v389, %v381
    %v398 = vpack.c.b16 %v390, %v382
    %v663 = vunpack.c.l.b16 %v111
    %v664 = vunpack.c.h.b16 %v111
    %v665 = vunpack.c.l.b16 %v112
    %v666 = vunpack.c.h.b16 %v112
    %v667 = vunpack.c.l.b16 %v113
    %v668 = vunpack.c.h.b16 %v113
    %v669 = vunpack.c.l.b16 %v114
    %v670 = vunpack.c.h.b16 %v114
    %v671 = vunpack.c.l.b16 %v115
    %v672 = vunpack.c.h.b16 %v115
    %v673 = vunpack.c.l.b16 %v116
    %v674 = vunpack.c.h.b16 %v116
    %v675 = vunpack.c.l.b16 %v117
    %v676 = vunpack.c.h.b16 %v117
    %v677 = vunpack.c.l.b16 %v118
    %v678 = vunpack.c.h.b16 %v118
    %v679 = vunpack.c.l.b16 %v119
    %v680 = vunpack.c.h.b16 %v119
    %v681 = vunpack.c.l.b16 %v120
    %v682 = vunpack.c.h.b16 %v120
    %v683 = vunpack.c.l.b16 %v121
    %v684 = vunpack.c.h.b16 %v121
    %v685 = vunpack.c.l.b16 %v122
    %v686 = vunpack.c.h.b16 %v122
    %v687 = vunpack.c.l.b16 %v123
    %v688 = vunpack.c.h.b16 %v123
    %v689 = vunpack.c.l.b16 %v124
    %v690 = vunpack.c.h.b16 %v124
    %v691 = vunpack.c.l.b16 %v125
    %v692 = vunpack.c.h.b16 %v125
    %v693 = vunpack.c.l.b16 %v126
    %v694 = vunpack.c.h.b16 %v126
    %v695 = vunpack.c.l.b16 %v127
    %v696 = vunpack.c.h.b16 %v127
    %v697 = vunpack.c.l.b16 %v128
    %v698 = vunpack.c.h.b16 %v128
    %v699 = vunpack.c.l.b16 %v129
    %v700 = vunpack.c.h.b16 %v129
    %v701 = vunpack.c.l.b16 %v130
    %v702 = vunpack.c.h.b16 %v130
    %v703 = vunpack.c.l.b16 %v131
    %v704 = vunpack.c.h.b16 %v131
    %v705 = vunpack.c.l.b16 %v132
    %v706 = vunpack.c.h.b16 %v132
    %v707 = vunpack.c.l.b16 %v133
    %v708 = vunpack.c.h.b16 %v133
    %v709 = vunpack.c.l.b16 %v134
    %v710 = vunpack.c.h.b16 %v134
    %v711 = vunpack.c.l.b16 %v135
    %v712 = vunpack.c.h.b16 %v135
    %v713 = vunpack.c.l.b16 %v136
    %v714 = vunpack.c.h.b16 %v136
    %v715 = vunpack.c.l.b16 %v137
    %v716 = vunpack.c.h.b16 %v137
    %v717 = vunpack.c.l.b16 %v138
    %v718 = vunpack.c.h.b16 %v138
    %v719 = vunpack.c.l.b16 %v139
    %v720 = vunpack.c.h.b16 %v139
    %v721 = vunpack.c.l.b16 %v140
    %v722 = vunpack.c.h.b16 %v140
    %v723 = vunpack.c.l.b16 %v141
    %v724 = vunpack.c.h.b16 %v141
    %v725 = vunpack.c.l.b16 %v142
    %v726 = vunpack.c.h.b16 %v142
    %v727 = vunpack.c.l.b16 %v143
    %v728 = vunpack.c.h.b16 %v143
    %v729 = vunpack.c.l.b16 %v144
    %v730 = vunpack.c.h.b16 %v144
    %v731 = vunpack.c.l.b16 %v145
    %v732 = vunpack.c.h.b16 %v145
    %v733 = vunpack.c.l.b16 %v146
    %v734 = vunpack.c.h.b16 %v146
    %v735 = vunpack.c.l.b16 %v147
    %v736 = vunpack.c.h.b16 %v147
    %v737 = vunpack.c.l.b16 %v148
    %v738 = vunpack.c.h.b16 %v148
    %v739 = vunpack.c.l.b16 %v149
    %v740 = vunpack.c.h.b16 %v149
    %v741 = vunpack.c.l.b16 %v150
    %v742 = vunpack.c.h.b16 %v150
    %v743 = vunpack.c.l.b16 %v151
    %v744 = vunpack.c.h.b16 %v151
    %v745 = vunpack.c.l.b16 %v152
    %v746 = vunpack.c.h.b16 %v152
    %v747 = vunpack.c.l.b16 %v153
    %v748 = vunpack.c.h.b16 %v153
    %v749 = vunpack.c.l.b16 %v154
    %v750 = vunpack.c.h.b16 %v154
    %v751 = vunpack.c.l.b16 %v155
    %v752 = vunpack.c.h.b16 %v155
    %v753 = vunpack.c.l.b16 %v156
    %v754 = vunpack.c.h.b16 %v156
    %v755 = vunpack.c.l.b16 %v157
    %v756 = vunpack.c.h.b16 %v157
    %v757 = vunpack.c.l.b16 %v158
    %v758 = vunpack.c.h.b16 %v158
    %v759 = vunpack.c.l.b16 %v159
    %v760 = vunpack.c.h.b16 %v159
    %v761 = vunpack.c.l.b16 %v160
    %v762 = vunpack.c.h.b16 %v160
    %v763 = vunpack.c.l.b16 %v161
    %v764 = vunpack.c.h.b16 %v161
    %v765 = vunpack.c.l.b16 %v162
    %v766 = vunpack.c.h.b16 %v162
    %v767 = vunpack.c.l.b16 %v163
    %v768 = vunpack.c.h.b16 %v163
    %v769 = vunpack.c.l.b16 %v164
    %v770 = vunpack.c.h.b16 %v164
    %v771 = vunpack.c.l.b16 %v165
    %v772 = vunpack.c.h.b16 %v165
    %v773 = vunpack.c.l.b16 %v166
    %v774 = vunpack.c.h.b16 %v166
    %v775 = vunpack.c.l.b16 %v167
    %v776 = vunpack.c.h.b16 %v167
    %v777 = vunpack.c.l.b16 %v168
    %v778 = vunpack.c.h.b16 %v168
    %v779 = vunpack.c.l.b16 %v169
    %v780 = vunpack.c.h.b16 %v169
    %v781 = vunpack.c.l.b16 %v170
    %v782 = vunpack.c.h.b16 %v170
    %v783 = vunpack.c.l.b16 %v171
    %v784 = vunpack.c.h.b16 %v171
    %v785 = vunpack.c.l.b16 %v172
    %v786 = vunpack.c.h.b16 %v172
    %v787 = vunpack.c.l.b16 %v173
    %v788 = vunpack.c.h.b16 %v173
    %v789 = vunpack.c.l.b16 %v174
    %v790 = vunpack.c.h.b16 %v174
    %v791 = vunpack.c.l.b16 %v175
    %v792 = vunpack.c.h.b16 %v175
    %v793 = vunpack.c.l.b16 %v176
    %v794 = vunpack.c.h.b16 %v176
    %v795 = vunpack.c.l.b16 %v177
    %v796 = vunpack.c.h.b16 %v177
    %v797 = vunpack.c.l.b16 %v178
    %v798 = vunpack.c.h.b16 %v178
    %v799 = vunpack.c.l.b16 %v179
    %v800 = vunpack.c.h.b16 %v179
    %v801 = vunpack.c.l.b16 %v180
    %v802 = vunpack.c.h.b16 %v180
    %v803 = vunpack.c.l.b16 %v181
    %v804 = vunpack.c.h.b16 %v181
    %v805 = vunpack.c.l.b16 %v182
    %v806 = vunpack.c.h.b16 %v182
    %v807 = vunpack.c.l.b16 %v183
    %v808 = vunpack.c.h.b16 %v183
    %v809 = vunpack.c.l.b16 %v184
    %v810 = vunpack.c.h.b16 %v184
    %v811 = vunpack.c.l.b16 %v185
    %v812 = vunpack.c.h.b16 %v185
    %v813 = vunpack.c.l.b16 %v186
    %v814 = vunpack.c.h.b16 %v186
    %v815 = vunpack.c.l.b16 %v187
    %v816 = vunpack.c.h.b16 %v187
    %v817 = vunpack.c.l.b16 %v188
    %v818 = vunpack.c.h.b16 %v188
    %v819 = vunpack.c.l.b16 %v189
    %v820 = vunpack.c.h.b16 %v189
    %v821 = vunpack.c.l.b16 %v190
    %v822 = vunpack.c.h.b16 %v190
    %v823 = vunpack.c.l.b16 %v191
    %v824 = vunpack.c.h.b16 %v191
    %v825 = vunpack.c.l.b16 %v192
    %v826 = vunpack.c.h.b16 %v192
    %v827 = vunpack.c.l.b16 %v193
    %v828 = vunpack.c.h.b16 %v193
    %v829 = vunpack.c.l.b16 %v194
    %v830 = vunpack.c.h.b16 %v194
    %v831 = vunpack.c.l.b16 %v195
    %v832 = vunpack.c.h.b16 %v195
    %v833 = vunpack.c.l.b16 %v196
    %v834 = vunpack.c.h.b16 %v196
    %v835 = vunpack.c.l.b16 %v197
    %v836 = vunpack.c.h.b16 %v197
    %v837 = vunpack.c.l.b16 %v198
    %v838 = vunpack.c.h.b16 %v198
    %v839 = vunpack.c.l.b16 %v199
    %v840 = vunpack.c.h.b16 %v199
    %v841 = vunpack.c.l.b16 %v200
    %v842 = vunpack.c.h.b16 %v200
    %v843 = vunpack.c.l.b16 %v201
    %v844 = vunpack.c.h.b16 %v201
    %v845 = vunpack.c.l.b16 %v202
    %v846 = vunpack.c.h.b16 %v202
    %v847 = vunpack.c.l.b16 %v203
    %v848 = vunpack.c.h.b16 %v203
    %v849 = vunpack.c.l.b16 %v204
    %v850 = vunpack.c.h.b16 %v204
    %v851 = vunpack.c.l.b16 %v205
    %v852 = vunpack.c.h.b16 %v205
    %v853 = vunpack.c.l.b16 %v206
    %v854 = vunpack.c.h.b16 %v206
    %v855 = vunpack.c.l.b16 %v207
    %v856 = vunpack.c.h.b16 %v207
    %v857 = vunpack.c.l.b16 %v208
    %v858 = vunpack.c.h.b16 %v208
    %v859 = vunpack.c.l.b16 %v209
    %v860 = vunpack.c.h.b16 %v209
    %v861 = vunpack.c.l.b16 %v210
    %v862 = vunpack.c.h.b16 %v210
    %v863 = vunpack.c.l.b16 %v211
    %v864 = vunpack.c.h.b16 %v211
    %v865 = vunpack.c.l.b16 %v212
    %v866 = vunpack.c.h.b16 %v212
    %v867 = vunpack.c.l.b16 %v213
    %v868 = vunpack.c.h.b16 %v213
    %v869 = vunpack.c.l.b16 %v214
    %v870 = vunpack.c.h.b16 %v214
    %v871 = vunpack.c.l.b16 %v215
    %v872 = vunpack.c.h.b16 %v215
    %v873 = vunpack.c.l.b16 %v216
    %v874 = vunpack.c.h.b16 %v216
    %v875 = vunpack.c.l.b16 %v217
    %v876 = vunpack.c.h.b16 %v217
    %v877 = vunpack.c.l.b16 %v218
    %v878 = vunpack.c.h.b16 %v218
    %v879 = vunpack.c.l.b16 %v219
    %v880 = vunpack.c.h.b16 %v219
    %v881 = vunpack.c.l.b16 %v220
    %v882 = vunpack.c.h.b16 %v220
    %v883 = vunpack.c.l.b16 %v221
    %v884 = vunpack.c.h.b16 %v221
    %v885 = vunpack.c.l.b16 %v222
    %v886 = vunpack.c.h.b16 %v222
    %v887 = vunpack.c.l.b16 %v223
    %v888 = vunpack.c.h.b16 %v223
    %v889 = vunpack.c.l.b16 %v224
    %v890 = vunpack.c.h.b16 %v224
    %v891 = vunpack.c.l.b16 %v225
    %v892 = vunpack.c.h.b16 %v225
    %v893 = vunpack.c.l.b16 %v226
    %v894 = vunpack.c.h.b16 %v226
    %v895 = vunpack.c.l.b16 %v227
    %v896 = vunpack.c.h.b16 %v227
    %v897 = vunpack.c.l.b16 %v228
    %v898 = vunpack.c.h.b16 %v228
    %v899 = vunpack.c.l.b16 %v229
    %v900 = vunpack.c.h.b16 %v229
    %v901 = vunpack.c.l.b16 %v230
    %v902 = vunpack.c.h.b16 %v230
    %v903 = vunpack.c.l.b16 %v231
    %v904 = vunpack.c.h.b16 %v231
    %v905 = vunpack.c.l.b16 %v232
    %v906 = vunpack.c.h.b16 %v232
    %v907 = vunpack.c.l.b16 %v233
    %v908 = vunpack.c.h.b16 %v233
    %v909 = vunpack.c.l.b16 %v234
    %v910 = vunpack.c.h.b16 %v234
    %v911 = vunpack.c.l.b16 %v235
    %v912 = vunpack.c.h.b16 %v235
    %v913 = vunpack.c.l.b16 %v236
    %v914 = vunpack.c.h.b16 %v236
    %v915 = vunpack.c.l.b16 %v237
    %v916 = vunpack.c.h.b16 %v237
    %v917 = vunpack.c.l.b16 %v238
    %v918 = vunpack.c.h.b16 %v238
    %v919 = vunpack.c.l.b16 %v239
    %v920 = vunpack.c.h.b16 %v239
    %v921 = vunpack.c.l.b16 %v240
    %v922 = vunpack.c.h.b16 %v240
    %v923 = vunpack.c.l.b16 %v241
    %v924 = vunpack.c.h.b16 %v241
    %v925 = vunpack.c.l.b16 %v242
    %v926 = vunpack.c.h.b16 %v242
    %v927 = vunpack.c.l.b16 %v243
    %v928 = vunpack.c.h.b16 %v243
    %v929 = vunpack.c.l.b16 %v244
    %v930 = vunpack.c.h.b16 %v244
    %v931 = vunpack.c.l.b16 %v245
    %v932 = vunpack.c.h.b16 %v245
    %v933 = vunpack.c.l.b16 %v246
    %v934 = vunpack.c.h.b16 %v246
    %v935 = vunpack.c.l.b16 %v247
    %v936 = vunpack.c.h.b16 %v247
    %v937 = vunpack.c.l.b16 %v248
    %v938 = vunpack.c.h.b16 %v248
    %v939 = vunpack.c.l.b16 %v249
    %v940 = vunpack.c.h.b16 %v249
    %v941 = vunpack.c.l.b16 %v250
    %v942 = vunpack.c.h.b16 %v250
    %v943 = vunpack.c.l.b16 %v251
    %v944 = vunpack.c.h.b16 %v251
    %v945 = vunpack.c.l.b16 %v252
    %v946 = vunpack.c.h.b16 %v252
    %v947 = vunpack.c.l.b16 %v253
    %v948 = vunpack.c.h.b16 %v253
    %v949 = vunpack.c.l.b16 %v254
    %v950 = vunpack.c.h.b16 %v254
    %v951 = vunpack.c.l.b16 %v255
    %v952 = vunpack.c.h.b16 %v255
    %v953 = vunpack.c.l.b16 %v256
    %v954 = vunpack.c.h.b16 %v256
    %v955 = vunpack.c.l.b16 %v257
    %v956 = vunpack.c.h.b16 %v257
    %v957 = vunpack.c.l.b16 %v258
    %v958 = vunpack.c.h.b16 %v258
    %v959 = vunpack.c.l.b16 %v259
    %v960 = vunpack.c.h.b16 %v259
    %v961 = vunpack.c.l.b16 %v260
    %v962 = vunpack.c.h.b16 %v260
    %v963 = vunpack.c.l.b16 %v261
    %v964 = vunpack.c.h.b16 %v261
    %v965 = vunpack.c.l.b16 %v262
    %v966 = vunpack.c.h.b16 %v262
    %v967 = vunpack.c.l.b16 %v263
    %v968 = vunpack.c.h.b16 %v263
    %v969 = vunpack.c.l.b16 %v264
    %v970 = vunpack.c.h.b16 %v264
    %v971 = vunpack.c.l.b16 %v265
    %v972 = vunpack.c.h.b16 %v265
    %v973 = vunpack.c.l.b16 %v266
    %v974 = vunpack.c.h.b16 %v266
    %v975 = vunpack.c.l.b16 %v267
    %v976 = vunpack.c.h.b16 %v267
    %v977 = vunpack.c.l.b16 %v268
    %v978 = vunpack.c.h.b16 %v268
    %v979 = vunpack.c.l.b16 %v269
    %v980 = vunpack.c.h.b16 %v269
    %v981 = vunpack.c.l.b16 %v270
    %v982 = vunpack.c.h.b16 %v270
    %v983 = vunpack.c.l.b16 %v271
    %v984 = vunpack.c.h.b16 %v271
    %v985 = vunpack.c.l.b16 %v272
    %v986 = vunpack.c.h.b16 %v272
    %v987 = vunpack.c.l.b16 %v273
    %v988 = vunpack.c.h.b16 %v273
    %v989 = vunpack.c.l.b16 %v274
    %v990 = vunpack.c.h.b16 %v274
    %v991 = vunpack.c.l.b16 %v275
    %v992 = vunpack.c.h.b16 %v275
    %v993 = vunpack.c.l.b16 %v276
    %v994 = vunpack.c.h.b16 %v276
    %v995 = vunpack.c.l.b16 %v277
    %v996 = vunpack.c.h.b16 %v277
    %v997 = vunpack.c.l.b16 %v278
    %v998 = vunpack.c.h.b16 %v278
    %v999 = vunpack.c.l.b16 %v279
    %v1000 = vunpack.c.h.b16 %v279
    %v1001 = vunpack.c.l.b16 %v280
    %v1002 = vunpack.c.h.b16 %v280
    %v1003 = vunpack.c.l.b16 %v281
    %v1004 = vunpack.c.h.b16 %v281
    %v1005 = vunpack.c.l.b16 %v282
    %v1006 = vunpack.c.h.b16 %v282
    %v1007 = vunpack.c.l.b16 %v283
    %v1008 = vunpack.c.h.b16 %v283
    %v1009 = vunpack.c.l.b16 %v284
    %v1010 = vunpack.c.h.b16 %v284
    %v1011 = vunpack.c.l.b16 %v285
    %v1012 = vunpack.c.h.b16 %v285
    %v1013 = vunpack.c.l.b16 %v286
    %v1014 = vunpack.c.h.b16 %v286
    %v1015 = vunpack.c.l.b16 %v287
    %v1016 = vunpack.c.h.b16 %v287
    %v1017 = vunpack.c.l.b16 %v288
    %v1018 = vunpack.c.h.b16 %v288
    %v1019 = vunpack.c.l.b16 %v289
    %v1020 = vunpack.c.h.b16 %v289
    %v1021 = vunpack.c.l.b16 %v290
    %v1022 = vunpack.c.h.b16 %v290
    %v1023 = vunpack.c.l.b16 %v291
    %v1024 = vunpack.c.h.b16 %v291
    %v1025 = vunpack.c.l.b16 %v292
    %v1026 = vunpack.c.h.b16 %v292
    %v1027 = vunpack.c.l.b16 %v293
    %v1028 = vunpack.c.h.b16 %v293
    %v1029 = vunpack.c.l.b16 %v294
    %v1030 = vunpack.c.h.b16 %v294
    %v1031 = vunpack.c.l.b16 %v295
    %v1032 = vunpack.c.h.b16 %v295
    %v1033 = vunpack.c.l.b16 %v296
    %v1034 = vunpack.c.h.b16 %v296
    %v1035 = vunpack.c.l.b16 %v297
    %v1036 = vunpack.c.h.b16 %v297
    %v1037 = vunpack.c.l.b16 %v298
    %v1038 = vunpack.c.h.b16 %v298
    %v1039 = vunpack.c.l.b16 %v299
    %v1040 = vunpack.c.h.b16 %v299
    %v1041 = vunpack.c.l.b16 %v300
    %v1042 = vunpack.c.h.b16 %v300
    %v1043 = vunpack.c.l.b16 %v301
    %v1044 = vunpack.c.h.b16 %v301
    %v1045 = vunpack.c.l.b16 %v302
    %v1046 = vunpack.c.h.b16 %v302
    %v1047 = vunpack.c.l.b16 %v303
    %v1048 = vunpack.c.h.b16 %v303
    %v1049 = vunpack.c.l.b16 %v304
    %v1050 = vunpack.c.h.b16 %v304
    %v1051 = vunpack.c.l.b16 %v305
    %v1052 = vunpack.c.h.b16 %v305
    %v1053 = vunpack.c.l.b16 %v306
    %v1054 = vunpack.c.h.b16 %v306
    %v1055 = vunpack.c.l.b16 %v307
    %v1056 = vunpack.c.h.b16 %v307
    %v1057 = vunpack.c.l.b16 %v308
    %v1058 = vunpack.c.h.b16 %v308
    %v1059 = vunpack.c.l.b16 %v309
    %v1060 = vunpack.c.h.b16 %v309
    %v1061 = vunpack.c.l.b16 %v310
    %v1062 = vunpack.c.h.b16 %v310
    %v1063 = vunpack.c.l.b16 %v311
    %v1064 = vunpack.c.h.b16 %v311
    %v1065 = vunpack.c.l.b16 %v312
    %v1066 = vunpack.c.h.b16 %v312
    %v1067 = vunpack.c.l.b16 %v313
    %v1068 = vunpack.c.h.b16 %v313
    %v1069 = vunpack.c.l.b16 %v314
    %v1070 = vunpack.c.h.b16 %v314
    %v1071 = vunpack.c.l.b16 %v315
    %v1072 = vunpack.c.h.b16 %v315
    %v1073 = vunpack.c.l.b16 %v316
    %v1074 = vunpack.c.h.b16 %v316
    %v1075 = vunpack.c.l.b16 %v317
    %v1076 = vunpack.c.h.b16 %v317
    %v1077 = vunpack.c.l.b16 %v318
    %v1078 = vunpack.c.h.b16 %v318
    %v1079 = vunpack.c.l.b16 %v319
    %v1080 = vunpack.c.h.b16 %v319
    %v1081 = vunpack.c.l.b16 %v320
    %v1082 = vunpack.c.h.b16 %v320
    %v1083 = vunpack.c.l.b16 %v321
    %v1084 = vunpack.c.h.b16 %v321
    %v1085 = vunpack.c.l.b16 %v322
    %v1086 = vunpack.c.h.b16 %v322
    %v1087 = vunpack.c.l.b16 %v323
    %v1088 = vunpack.c.h.b16 %v323
    %v1089 = vunpack.c.l.b16 %v324
    %v1090 = vunpack.c.h.b16 %v324
    %v1091 = vunpack.c.l.b16 %v325
    %v1092 = vunpack.c.h.b16 %v325
    %v1093 = vunpack.c.l.b16 %v326
    %v1094 = vunpack.c.h.b16 %v326
    %v1095 = vunpack.c.l.b16 %v327
    %v1096 = vunpack.c.h.b16 %v327
    %v1097 = vunpack.c.l.b16 %v328
    %v1098 = vunpack.c.h.b16 %v328
    %v1099 = vunpack.c.l.b16 %v329
    %v1100 = vunpack.c.h.b16 %v329
    %v1101 = vunpack.c.l.b16 %v330
    %v1102 = vunpack.c.h.b16 %v330
    %v1103 = vunpack.c.l.b16 %v331
    %v1104 = vunpack.c.h.b16 %v331
    %v1105 = vunpack.c.l.b16 %v332
    %v1106 = vunpack.c.h.b16 %v332
    %v1107 = vunpack.c.l.b16 %v333
    %v1108 = vunpack.c.h.b16 %v333
    %v1109 = vunpack.c.l.b16 %v334
    %v1110 = vunpack.c.h.b16 %v334
    %v1111 = vunpack.c.l.b16 %v335
    %v1112 = vunpack.c.h.b16 %v335
    %v1113 = vunpack.c.l.b16 %v336
    %v1114 = vunpack.c.h.b16 %v336
    %v1115 = vunpack.c.l.b16 %v337
    %v1116 = vunpack.c.h.b16 %v337
    %v1117 = vunpack.c.l.b16 %v338
    %v1118 = vunpack.c.h.b16 %v338
    %v1119 = vunpack.c.l.b16 %v339
    %v1120 = vunpack.c.h.b16 %v339
    %v1121 = vunpack.c.l.b16 %v340
    %v1122 = vunpack.c.h.b16 %v340
    %v1123 = vunpack.c.l.b16 %v341
    %v1124 = vunpack.c.h.b16 %v341
    %v1125 = vunpack.c.l.b16 %v342
    %v1126 = vunpack.c.h.b16 %v342
    %v1127 = vunpack.c.l.b16 %v343
    %v1128 = vunpack.c.h.b16 %v343
    %v1129 = vunpack.c.l.b16 %v344
    %v1130 = vunpack.c.h.b16 %v344
    %v1131 = vunpack.c.l.b16 %v345
    %v1132 = vunpack.c.h.b16 %v345
    %v1133 = vunpack.c.l.b16 %v346
    %v1134 = vunpack.c.h.b16 %v346
    %v1135 = vunpack.c.l.b16 %v347
    %v1136 = vunpack.c.h.b16 %v347
    %v1137 = vunpack.c.l.b16 %v348
    %v1138 = vunpack.c.h.b16 %v348
    %v1139 = vunpack.c.l.b16 %v349
    %v1140 = vunpack.c.h.b16 %v349
    %v1141 = vunpack.c.l.b16 %v350
    %v1142 = vunpack.c.h.b16 %v350
    %v1143 = vunpack.c.l.b16 %v351
    %v1144 = vunpack.c.h.b16 %v351
    %v1145 = vunpack.c.l.b16 %v352
    %v1146 = vunpack.c.h.b16 %v352
    %v1147 = vunpack.c.l.b16 %v353
    %v1148 = vunpack.c.h.b16 %v353
    %v1149 = vunpack.c.l.b16 %v354
    %v1150 = vunpack.c.h.b16 %v354
    %v1151 = vunpack.c.l.b16 %v355
    %v1152 = vunpack.c.h.b16 %v355
    %v1153 = vunpack.c.l.b16 %v356
    %v1154 = vunpack.c.h.b16 %v356
    %v1155 = vunpack.c.l.b16 %v357
    %v1156 = vunpack.c.h.b16 %v357
    %v1157 = vunpack.c.l.b16 %v358
    %v1158 = vunpack.c.h.b16 %v358
    %v1159 = vunpack.c.l.b16 %v359
    %v1160 = vunpack.c.h.b16 %v359
    %v1161 = vunpack.c.l.b16 %v360
    %v1162 = vunpack.c.h.b16 %v360
    %v1163 = vunpack.c.l.b16 %v361
    %v1164 = vunpack.c.h.b16 %v361
    %v1165 = vunpack.c.l.b16 %v362
    %v1166 = vunpack.c.h.b16 %v362
    %v1167 = vunpack.c.l.b16 %v363
    %v1168 = vunpack.c.h.b16 %v363
    %v1169 = vunpack.c.l.b16 %v364
    %v1170 = vunpack.c.h.b16 %v364
    %v1171 = vunpack.c.l.b16 %v365
    %v1172 = vunpack.c.h.b16 %v365
    %v1173 = vunpack.c.l.b16 %v366
    %v1174 = vunpack.c.h.b16 %v366
    %v1175 = vpack.c.b16 %v667, %v663
    %v1176 = vpack.c.b16 %v668, %v664
    %v1177 = vpack.c.b16 %v669, %v665
    %v1178 = vpack.c.b16 %v670, %v666
    %v1179 = vpack.c.b16 %v675, %v671
    %v1180 = vpack.c.b16 %v676, %v672
    %v1181 = vpack.c.b16 %v677, %v673
    %v1182 = vpack.c.b16 %v678, %v674
    %v1183 = vpack.c.b16 %v683, %v679
    %v1184 = vpack.c.b16 %v684, %v680
    %v1185 = vpack.c.b16 %v685, %v681
    %v1186 = vpack.c.b16 %v686, %v682
    %v1187 = vpack.c.b16 %v691, %v687
    %v1188 = vpack.c.b16 %v692, %v688
    %v1189 = vpack.c.b16 %v693, %v689
    %v1190 = vpack.c.b16 %v694, %v690
    %v1191 = vpack.c.b16 %v699, %v695
    %v1192 = vpack.c.b16 %v700, %v696
    %v1193 = vpack.c.b16 %v701, %v697
    %v1194 = vpack.c.b16 %v702, %v698
    %v1195 = vpack.c.b16 %v707, %v703
    %v1196 = vpack.c.b16 %v708, %v704
    %v1197 = vpack.c.b16 %v709, %v705
    %v1198 = vpack.c.b16 %v710, %v706
    %v1199 = vpack.c.b16 %v715, %v711
    %v1200 = vpack.c.b16 %v716, %v712
    %v1201 = vpack.c.b16 %v717, %v713
    %v1202 = vpack.c.b16 %v718, %v714
    %v1203 = vpack.c.b16 %v723, %v719
    %v1204 = vpack.c.b16 %v724, %v720
    %v1205 = vpack.c.b16 %v725, %v721
    %v1206 = vpack.c.b16 %v726, %v722
    %v1207 = vpack.c.b16 %v731, %v727
    %v1208 = vpack.c.b16 %v732, %v728
    %v1209 = vpack.c.b16 %v733, %v729
    %v1210 = vpack.c.b16 %v734, %v730
    %v1211 = vpack.c.b16 %v739, %v735
    %v1212 = vpack.c.b16 %v740, %v736
    %v1213 = vpack.c.b16 %v741, %v737
    %v1214 = vpack.c.b16 %v742, %v738
    %v1215 = vpack.c.b16 %v747, %v743
    %v1216 = vpack.c.b16 %v748, %v744
    %v1217 = vpack.c.b16 %v749, %v745
    %v1218 = vpack.c.b16 %v750, %v746
    %v1219 = vpack.c.b16 %v755, %v751
    %v1220 = vpack.c.b16 %v756, %v752
    %v1221 = vpack.c.b16 %v757, %v753
    %v1222 = vpack.c.b16 %v758, %v754
    %v1223 = vpack.c.b16 %v763, %v759
    %v1224 = vpack.c.b16 %v764, %v760
    %v1225 = vpack.c.b16 %v765, %v761
    %v1226 = vpack.c.b16 %v766, %v762
    %v1227 = vpack.c.b16 %v771, %v767
    %v1228 = vpack.c.b16 %v772, %v768
    %v1229 = vpack.c.b16 %v773, %v769
    %v1230 = vpack.c.b16 %v774, %v770
    %v1231 = vpack.c.b16 %v779, %v775
    %v1232 = vpack.c.b16 %v780, %v776
    %v1233 = vpack.c.b16 %v781, %v777
    %v1234 = vpack.c.b16 %v782, %v778
    %v1235 = vpack.c.b16 %v787, %v783
    %v1236 = vpack.c.b16 %v788, %v784
    %v1237 = vpack.c.b16 %v789, %v785
    %v1238 = vpack.c.b16 %v790, %v786
    %v1239 = vpack.c.b16 %v795, %v791
    %v1240 = vpack.c.b16 %v796, %v792
    %v1241 = vpack.c.b16 %v797, %v793
    %v1242 = vpack.c.b16 %v798, %v794
    %v1243 = vpack.c.b16 %v803, %v799
    %v1244 = vpack.c.b16 %v804, %v800
    %v1245 = vpack.c.b16 %v805, %v801
    %v1246 = vpack.c.b16 %v806, %v802
    %v1247 = vpack.c.b16 %v811, %v807
    %v1248 = vpack.c.b16 %v812, %v808
    %v1249 = vpack.c.b16 %v813, %v809
    %v1250 = vpack.c.b16 %v814, %v810
    %v1251 = vpack.c.b16 %v819, %v815
    %v1252 = vpack.c.b16 %v820, %v816
    %v1253 = vpack.c.b16 %v821, %v817
    %v1254 = vpack.c.b16 %v822, %v818
    %v1255 = vpack.c.b16 %v827, %v823
    %v1256 = vpack.c.b16 %v828, %v824
    %v1257 = vpack.c.b16 %v829, %v825
    %v1258 = vpack.c.b16 %v830, %v826
    %v1259 = vpack.c.b16 %v835, %v831
    %v1260 = vpack.c.b16 %v836, %v832
    %v1261 = vpack.c.b16 %v837, %v833
    %v1262 = vpack.c.b16 %v838, %v834
    %v1263 = vpack.c.b16 %v843, %v839
    %v1264 = vpack.c.b16 %v844, %v840
    %v1265 = vpack.c.b16 %v845, %v841
    %v1266 = vpack.c.b16 %v846, %v842
    %v1267 = vpack.c.b16 %v851, %v847
    %v1268 = vpack.c.b16 %v852, %v848
    %v1269 = vpack.c.b16 %v853, %v849
    %v1270 = vpack.c.b16 %v854, %v850
    %v1271 = vpack.c.b16 %v859, %v855
    %v1272 = vpack.c.b16 %v860, %v856
    %v1273 = vpack.c.b16 %v861, %v857
    %v1274 = vpack.c.b16 %v862, %v858
    %v1275 = vpack.c.b16 %v867, %v863
    %v1276 = vpack.c.b16 %v868, %v864
    %v1277 = vpack.c.b16 %v869, %v865
    %v1278 = vpack.c.b16 %v870, %v866
    %v1279 = vpack.c.b16 %v875, %v871
    %v1280 = vpack.c.b16 %v876, %v872
    %v1281 = vpack.c.b16 %v877, %v873
    %v1282 = vpack.c.b16 %v878, %v874
    %v1283 = vpack.c.b16 %v883, %v879
    %v1284 = vpack.c.b16 %v884, %v880
    %v1285 = vpack.c.b16 %v885, %v881
    %v1286 = vpack.c.b16 %v886, %v882
    %v1287 = vpack.c.b16 %v891, %v887
    %v1288 = vpack.c.b16 %v892, %v888
    %v1289 = vpack.c.b16 %v893, %v889
    %v1290 = vpack.c.b16 %v894, %v890
    %v1291 = vpack.c.b16 %v899, %v895
    %v1292 = vpack.c.b16 %v900, %v896
    %v1293 = vpack.c.b16 %v901, %v897
    %v1294 = vpack.c.b16 %v902, %v898
    %v1295 = vpack.c.b16 %v907, %v903
    %v1296 = vpack.c.b16 %v908, %v904
    %v1297 = vpack.c.b16 %v909, %v905
    %v1298 = vpack.c.b16 %v910, %v906
    %v1299 = vpack.c.b16 %v915, %v911
    %v1300 = vpack.c.b16 %v916, %v912
    %v1301 = vpack.c.b16 %v917, %v913
    %v1302 = vpack.c.b16 %v918, %v914
    %v1303 = vpack.c.b16 %v923, %v919
    %v1304 = vpack.c.b16 %v924, %v920
    %v1305 = vpack.c.b16 %v925, %v921
    %v1306 = vpack.c.b16 %v926, %v922
    %v1307 = vpack.c.b16 %v931, %v927
    %v1308 = vpack.c.b16 %v932, %v928
    %v1309 = vpack.c.b16 %v933, %v929
    %v1310 = vpack.c.b16 %v934, %v930
    %v1311 = vpack.c.b16 %v939, %v935
    %v1312 = vpack.c.b16 %v940, %v936
    %v1313 = vpack.c.b16 %v941, %v937
    %v1314 = vpack.c.b16 %v942, %v938
    %v1315 = vpack.c.b16 %v947, %v943
    %v1316 = vpack.c.b16 %v948, %v944
    %v1317 = vpack.c.b16 %v949, %v945
    %v1318 = vpack.c.b16 %v950, %v946
    %v1319 = vpack.c.b16 %v955, %v951
    %v1320 = vpack.c.b16 %v956, %v952
    %v1321 = vpack.c.b16 %v957, %v953
    %v1322 = vpack.c.b16 %v958, %v954
    %v1323 = vpack.c.b16 %v963, %v959
    %v1324 = vpack.c.b16 %v964, %v960
    %v1325 = vpack.c.b16 %v965, %v961
    %v1326 = vpack.c.b16 %v966, %v962
    %v1327 = vpack.c.b16 %v971, %v967
    %v1328 = vpack.c.b16 %v972, %v968
    %v1329 = vpack.c.b16 %v973, %v969
    %v1330 = vpack.c.b16 %v974, %v970
    %v1331 = vpack.c.b16 %v979, %v975
    %v1332 = vpack.c.b16 %v980, %v976
    %v1333 = vpack.c.b16 %v981, %v977
    %v1334 = vpack.c.b16 %v982, %v978
    %v1335 = vpack.c.b16 %v987, %v983
    %v1336 = vpack.c.b16 %v988, %v984
    %v1337 = vpack.c.b16 %v989, %v985
    %v1338 = vpack.c.b16 %v990, %v986
    %v1339 = vpack.c.b16 %v995, %v991
    %v1340 = vpack.c.b16 %v996, %v992
    %v1341 = vpack.c.b16 %v997, %v993
    %v1342 = vpack.c.b16 %v998, %v994
    %v1343 = vpack.c.b16 %v1003, %v999
    %v1344 = vpack.c.b16 %v1004, %v1000
    %v1345 = vpack.c.b16 %v1005, %v1001
    %v1346 = vpack.c.b16 %v1006, %v1002
    %v1347 = vpack.c.b16 %v1011, %v1007
    %v1348 = vpack.c.b16 %v1012, %v1008
    %v1349 = vpack.c.b16 %v1013, %v1009
    %v1350 = vpack.c.b16 %v1014, %v1010
    %v1351 = vpack.c.b16 %v1019, %v1015
    %v1352 = vpack.c.b16 %v1020, %v1016
    %v1353 = vpack.c.b16 %v1021, %v1017
    %v1354 = vpack.c.b16 %v1022, %v1018
    %v1355 = vpack.c.b16 %v1027, %v1023
    %v1356 = vpack.c.b16 %v1028, %v1024
    %v1357 = vpack.c.b16 %v1029, %v1025
    %v1358 = vpack.c.b16 %v1030, %v1026
    %v1359 = vpack.c.b16 %v1035, %v1031
    %v1360 = vpack.c.b16 %v1036, %v1032
    %v1361 = vpack.c.b16 %v1037, %v1033
    %v1362 = vpack.c.b16 %v1038, %v1034
    %v1363 = vpack.c.b16 %v1043, %v1039
    %v1364 = vpack.c.b16 %v1044, %v1040
    %v1365 = vpack.c.b16 %v1045, %v1041
    %v1366 = vpack.c.b16 %v1046, %v1042
    %v1367 = vpack.c.b16 %v1051, %v1047
    %v1368 = vpack.c.b16 %v1052, %v1048
    %v1369 = vpack.c.b16 %v1053, %v1049
    %v1370 = vpack.c.b16 %v1054, %v1050
    %v1371 = vpack.c.b16 %v1059, %v1055
    %v1372 = vpack.c.b16 %v1060, %v1056
    %v1373 = vpack.c.b16 %v1061, %v1057
    %v1374 = vpack.c.b16 %v1062, %v1058
    %v1375 = vpack.c.b16 %v1067, %v1063
    %v1376 = vpack.c.b16 %v1068, %v1064
    %v1377 = vpack.c.b16 %v1069, %v1065
    %v1378 = vpack.c.b16 %v1070, %v1066
    %v1379 = vpack.c.b16 %v1075, %v1071
    %v1380 = vpack.c.b16 %v1076, %v1072
    %v1381 = vpack.c.b16 %v1077, %v1073
    %v1382 = vpack.c.b16 %v1078, %v1074
    %v1383 = vpack.c.b16 %v1083, %v1079
    %v1384 = vpack.c.b16 %v1084, %v1080
    %v1385 = vpack.c.b16 %v1085, %v1081
    %v1386 = vpack.c.b16 %v1086, %v1082
    %v1387 = vpack.c.b16 %v1091, %v1087
    %v1388 = vpack.c.b16 %v1092, %v1088
    %v1389 = vpack.c.b16 %v1093, %v1089
    %v1390 = vpack.c.b16 %v1094, %v1090
    %v1391 = vpack.c.b16 %v1099, %v1095
    %v1392 = vpack.c.b16 %v1100, %v1096
    %v1393 = vpack.c.b16 %v1101, %v1097
    %v1394 = vpack.c.b16 %v1102, %v1098
    %v1395 = vpack.c.b16 %v1107, %v1103
    %v1396 = vpack.c.b16 %v1108, %v1104
    %v1397 = vpack.c.b16 %v1109, %v1105
    %v1398 = vpack.c.b16 %v1110, %v1106
    %v1399 = vpack.c.b16 %v1115, %v1111
    %v1400 = vpack.c.b16 %v1116, %v1112
    %v1401 = vpack.c.b16 %v1117, %v1113
    %v1402 = vpack.c.b16 %v1118, %v1114
    %v1403 = vpack.c.b16 %v1123, %v1119
    %v1404 = vpack.c.b16 %v1124, %v1120
    %v1405 = vpack.c.b16 %v1125, %v1121
    %v1406 = vpack.c.b16 %v1126, %v1122
    %v1407 = vpack.c.b16 %v1131, %v1127
    %v1408 = vpack.c.b16 %v1132, %v1128
    %v1409 = vpack.c.b16 %v1133, %v1129
    %v1410 = vpack.c.b16 %v1134, %v1130
    %v1411 = vpack.c.b16 %v1139, %v1135
    %v1412 = vpack.c.b16 %v1140, %v1136
    %v1413 = vpack.c.b16 %v1141, %v1137
    %v1414 = vpack.c.b16 %v1142, %v1138
    %v1415 = vpack.c.b16 %v1147, %v1143
    %v1416 = vpack.c.b16 %v1148, %v1144
    %v1417 = vpack.c.b16 %v1149, %v1145
    %v1418 = vpack.c.b16 %v1150, %v1146
    %v1419 = vpack.c.b16 %v1155, %v1151
    %v1420 = vpack.c.b16 %v1156, %v1152
    %v1421 = vpack.c.b16 %v1157, %v1153
    %v1422 = vpack.c.b16 %v1158, %v1154
    %v1423 = vpack.c.b16 %v1163, %v1159
    %v1424 = vpack.c.b16 %v1164, %v1160
    %v1425 = vpack.c.b16 %v1165, %v1161
    %v1426 = vpack.c.b16 %v1166, %v1162
    %v1427 = vpack.c.b16 %v1171, %v1167
    %v1428 = vpack.c.b16 %v1172, %v1168
    %v1429 = vpack.c.b16 %v1173, %v1169
    %v1430 = vpack.c.b16 %v1174, %v1170
    %1687 = vmatprep.subr.bf16.mxu0 %v1176
    %1688 = vmatpush1.bf16.msra.mxu0 %v1175
    %1689 = vmatprep.subr.bf16.mxu0 %v1180
    %1690 = vmatpush1.bf16.msra.mxu0 %v1179
    %1691 = vmatprep.subr.bf16.mxu0 %v1184
    %1692 = vmatpush1.bf16.msra.mxu0 %v1183
    %1693 = vmatprep.subr.bf16.mxu0 %v1188
    %1694 = vmatpush1.bf16.msra.mxu0 %v1187
    %1695 = vmatprep.subr.bf16.mxu0 %v1192
    %1696 = vmatpush1.bf16.msra.mxu0 %v1191
    %1697 = vmatprep.subr.bf16.mxu0 %v1196
    %1698 = vmatpush1.bf16.msra.mxu0 %v1195
    %1699 = vmatprep.subr.bf16.mxu0 %v1200
    %1700 = vmatpush1.bf16.msra.mxu0 %v1199
    %1701 = vmatprep.subr.bf16.mxu0 %v1204
    %1702 = vmatpush1.bf16.msra.mxu0 %v1203
    %1703 = vmatprep.subr.bf16.mxu0 %v1208
    %1704 = vmatpush1.bf16.msra.mxu0 %v1207
    %1705 = vmatprep.subr.bf16.mxu0 %v1212
    %1706 = vmatpush1.bf16.msra.mxu0 %v1211
    %1707 = vmatprep.subr.bf16.mxu0 %v1216
    %1708 = vmatpush1.bf16.msra.mxu0 %v1215
    %1709 = vmatprep.subr.bf16.mxu0 %v1220
    %1710 = vmatpush1.bf16.msra.mxu0 %v1219
    %1711 = vmatprep.subr.bf16.mxu0 %v1224
    %1712 = vmatpush1.bf16.msra.mxu0 %v1223
    %1713 = vmatprep.subr.bf16.mxu0 %v1228
    %1714 = vmatpush1.bf16.msra.mxu0 %v1227
    %1715 = vmatprep.subr.bf16.mxu0 %v1232
    %1716 = vmatpush1.bf16.msra.mxu0 %v1231
    %1717 = vmatprep.subr.bf16.mxu0 %v1236
    %1718 = vmatpush1.bf16.msra.mxu0 %v1235
    %1719 = vmatprep.mubr.bf16.mxu0 %v392
    %1720 = vmatmul.mubr.bf16.gmra.mrb[0].mxu0 %v391
    %v1721 = vpop.f32.mrb[0].mxu0
    %v1722 = vadd.f32 0.0, %v1721
    %v1723 = vpop.f32.mrb[0].mxu0
    %v1724 = vadd.f32 0.0, %v1723
    %v1725 = vpop.f32.mrb[0].mxu0
    %v1726 = vadd.f32 0.0, %v1725
    %v1727 = vpop.f32.mrb[0].mxu0
    %v1728 = vadd.f32 0.0, %v1727
    %1729 = vdwg.mxu0
    %1730 = vmatprep.subr.bf16.mxu0 %v1240
    %1731 = vmatpush1.bf16.msra.mxu0 %v1239
    %1732 = vmatprep.subr.bf16.mxu0 %v1244
    %1733 = vmatpush1.bf16.msra.mxu0 %v1243
    %1734 = vmatprep.subr.bf16.mxu0 %v1248
    %1735 = vmatpush1.bf16.msra.mxu0 %v1247
    %1736 = vmatprep.subr.bf16.mxu0 %v1252
    %1737 = vmatpush1.bf16.msra.mxu0 %v1251
    %1738 = vmatprep.subr.bf16.mxu0 %v1256
    %1739 = vmatpush1.bf16.msra.mxu0 %v1255
    %1740 = vmatprep.subr.bf16.mxu0 %v1260
    %1741 = vmatpush1.bf16.msra.mxu0 %v1259
    %1742 = vmatprep.subr.bf16.mxu0 %v1264
    %1743 = vmatpush1.bf16.msra.mxu0 %v1263
    %1744 = vmatprep.subr.bf16.mxu0 %v1268
    %1745 = vmatpush1.bf16.msra.mxu0 %v1267
    %1746 = vmatprep.subr.bf16.mxu0 %v1272
    %1747 = vmatpush1.bf16.msra.mxu0 %v1271
    %1748 = vmatprep.subr.bf16.mxu0 %v1276
    %1749 = vmatpush1.bf16.msra.mxu0 %v1275
    %1750 = vmatprep.subr.bf16.mxu0 %v1280
    %1751 = vmatpush1.bf16.msra.mxu0 %v1279
    %1752 = vmatprep.subr.bf16.mxu0 %v1284
    %1753 = vmatpush1.bf16.msra.mxu0 %v1283
    %1754 = vmatprep.subr.bf16.mxu0 %v1288
    %1755 = vmatpush1.bf16.msra.mxu0 %v1287
    %1756 = vmatprep.subr.bf16.mxu0 %v1292
    %1757 = vmatpush1.bf16.msra.mxu0 %v1291
    %1758 = vmatprep.subr.bf16.mxu0 %v1296
    %1759 = vmatpush1.bf16.msra.mxu0 %v1295
    %1760 = vmatprep.subr.bf16.mxu0 %v1300
    %1761 = vmatpush1.bf16.msra.mxu0 %v1299
    %1762 = vmatprep.mubr.bf16.mxu0 %v394
    %1763 = vmatmul.mubr.bf16.gmra.mrb[0].mxu0 %v393
    %v1764 = vpop.f32.mrb[0].mxu0
    %v1765 = vadd.f32 %v1722, %v1764
    %v1766 = vpop.f32.mrb[0].mxu0
    %v1767 = vadd.f32 %v1724, %v1766
    %v1768 = vpop.f32.mrb[0].mxu0
    %v1769 = vadd.f32 %v1726, %v1768
    %v1770 = vpop.f32.mrb[0].mxu0
    %v1771 = vadd.f32 %v1728, %v1770
    %1772 = vdwg.mxu0
    %1773 = vmatprep.subr.bf16.mxu0 %v1304
    %1774 = vmatpush1.bf16.msra.mxu0 %v1303
    %1775 = vmatprep.subr.bf16.mxu0 %v1308
    %1776 = vmatpush1.bf16.msra.mxu0 %v1307
    %1777 = vmatprep.subr.bf16.mxu0 %v1312
    %1778 = vmatpush1.bf16.msra.mxu0 %v1311
    %1779 = vmatprep.subr.bf16.mxu0 %v1316
    %1780 = vmatpush1.bf16.msra.mxu0 %v1315
    %1781 = vmatprep.subr.bf16.mxu0 %v1320
    %1782 = vmatpush1.bf16.msra.mxu0 %v1319
    %1783 = vmatprep.subr.bf16.mxu0 %v1324
    %1784 = vmatpush1.bf16.msra.mxu0 %v1323
    %1785 = vmatprep.subr.bf16.mxu0 %v1328
    %1786 = vmatpush1.bf16.msra.mxu0 %v1327
    %1787 = vmatprep.subr.bf16.mxu0 %v1332
    %1788 = vmatpush1.bf16.msra.mxu0 %v1331
    %1789 = vmatprep.subr.bf16.mxu0 %v1336
    %1790 = vmatpush1.bf16.msra.mxu0 %v1335
    %1791 = vmatprep.subr.bf16.mxu0 %v1340
    %1792 = vmatpush1.bf16.msra.mxu0 %v1339
    %1793 = vmatprep.subr.bf16.mxu0 %v1344
    %1794 = vmatpush1.bf16.msra.mxu0 %v1343
    %1795 = vmatprep.subr.bf16.mxu0 %v1348
    %1796 = vmatpush1.bf16.msra.mxu0 %v1347
    %1797 = vmatprep.subr.bf16.mxu0 %v1352
    %1798 = vmatpush1.bf16.msra.mxu0 %v1351
    %1799 = vmatprep.subr.bf16.mxu0 %v1356
    %1800 = vmatpush1.bf16.msra.mxu0 %v1355
    %1801 = vmatprep.subr.bf16.mxu0 %v1360
    %1802 = vmatpush1.bf16.msra.mxu0 %v1359
    %1803 = vmatprep.subr.bf16.mxu0 %v1364
    %1804 = vmatpush1.bf16.msra.mxu0 %v1363
    %1805 = vmatprep.mubr.bf16.mxu0 %v396
    %1806 = vmatmul.mubr.bf16.gmra.mrb[0].mxu0 %v395
    %v1807 = vpop.f32.mrb[0].mxu0
    %v1808 = vadd.f32 %v1765, %v1807
    %v1809 = vpop.f32.mrb[0].mxu0
    %v1810 = vadd.f32 %v1767, %v1809
    %v1811 = vpop.f32.mrb[0].mxu0
    %v1812 = vadd.f32 %v1769, %v1811
    %v1813 = vpop.f32.mrb[0].mxu0
    %v1814 = vadd.f32 %v1771, %v1813
    %1815 = vdwg.mxu0
    %1816 = vmatprep.subr.bf16.mxu0 %v1368
    %1817 = vmatpush1.bf16.msra.mxu0 %v1367
    %1818 = vmatprep.subr.bf16.mxu0 %v1372
    %1819 = vmatpush1.bf16.msra.mxu0 %v1371
    %1820 = vmatprep.subr.bf16.mxu0 %v1376
    %1821 = vmatpush1.bf16.msra.mxu0 %v1375
    %1822 = vmatprep.subr.bf16.mxu0 %v1380
    %1823 = vmatpush1.bf16.msra.mxu0 %v1379
    %1824 = vmatprep.subr.bf16.mxu0 %v1384
    %1825 = vmatpush1.bf16.msra.mxu0 %v1383
    %1826 = vmatprep.subr.bf16.mxu0 %v1388
    %1827 = vmatpush1.bf16.msra.mxu0 %v1387
    %1828 = vmatprep.subr.bf16.mxu0 %v1392
    %1829 = vmatpush1.bf16.msra.mxu0 %v1391
    %1830 = vmatprep.subr.bf16.mxu0 %v1396
    %1831 = vmatpush1.bf16.msra.mxu0 %v1395
    %1832 = vmatprep.subr.bf16.mxu0 %v1400
    %1833 = vmatpush1.bf16.msra.mxu0 %v1399
    %1834 = vmatprep.subr.bf16.mxu0 %v1404
    %1835 = vmatpush1.bf16.msra.mxu0 %v1403
    %1836 = vmatprep.subr.bf16.mxu0 %v1408
    %1837 = vmatpush1.bf16.msra.mxu0 %v1407
    %1838 = vmatprep.subr.bf16.mxu0 %v1412
    %1839 = vmatpush1.bf16.msra.mxu0 %v1411
    %1840 = vmatprep.subr.bf16.mxu0 %v1416
    %1841 = vmatpush1.bf16.msra.mxu0 %v1415
    %1842 = vmatprep.subr.bf16.mxu0 %v1420
    %1843 = vmatpush1.bf16.msra.mxu0 %v1419
    %1844 = vmatprep.subr.bf16.mxu0 %v1424
    %1845 = vmatpush1.bf16.msra.mxu0 %v1423
    %1846 = vmatprep.subr.bf16.mxu0 %v1428
    %1847 = vmatpush1.bf16.msra.mxu0 %v1427
    %1848 = vmatprep.mubr.bf16.mxu0 %v398
    %1849 = vmatmul.mubr.bf16.gmra.mrb[0].mxu0 %v397
    %v1850 = vpop.f32.mrb[0].mxu0
    %v1851 = vadd.f32 %v1808, %v1850
    %v1852 = vpop.f32.mrb[0].mxu0
    %v1853 = vadd.f32 %v1810, %v1852
    %v1854 = vpop.f32.mrb[0].mxu0
    %v1855 = vadd.f32 %v1812, %v1854
    %v1856 = vpop.f32.mrb[0].mxu0
    %v1857 = vadd.f32 %v1814, %v1856
    %1858 = vdwg.mxu0
    %1859 = vmatprep.subr.bf16.mxu0 %v1178
    %1860 = vmatpush1.bf16.msra.mxu0 %v1177
    %1861 = vmatprep.subr.bf16.mxu0 %v1182
    %1862 = vmatpush1.bf16.msra.mxu0 %v1181
    %1863 = vmatprep.subr.bf16.mxu0 %v1186
    %1864 = vmatpush1.bf16.msra.mxu0 %v1185
    %1865 = vmatprep.subr.bf16.mxu0 %v1190
    %1866 = vmatpush1.bf16.msra.mxu0 %v1189
    %1867 = vmatprep.subr.bf16.mxu0 %v1194
    %1868 = vmatpush1.bf16.msra.mxu0 %v1193
    %1869 = vmatprep.subr.bf16.mxu0 %v1198
    %1870 = vmatpush1.bf16.msra.mxu0 %v1197
    %1871 = vmatprep.subr.bf16.mxu0 %v1202
    %1872 = vmatpush1.bf16.msra.mxu0 %v1201
    %1873 = vmatprep.subr.bf16.mxu0 %v1206
    %1874 = vmatpush1.bf16.msra.mxu0 %v1205
    %1875 = vmatprep.subr.bf16.mxu0 %v1210
    %1876 = vmatpush1.bf16.msra.mxu0 %v1209
    %1877 = vmatprep.subr.bf16.mxu0 %v1214
    %1878 = vmatpush1.bf16.msra.mxu0 %v1213
    %1879 = vmatprep.subr.bf16.mxu0 %v1218
    %1880 = vmatpush1.bf16.msra.mxu0 %v1217
    %1881 = vmatprep.subr.bf16.mxu0 %v1222
    %1882 = vmatpush1.bf16.msra.mxu0 %v1221
    %1883 = vmatprep.subr.bf16.mxu0 %v1226
    %1884 = vmatpush1.bf16.msra.mxu0 %v1225
    %1885 = vmatprep.subr.bf16.mxu0 %v1230
    %1886 = vmatpush1.bf16.msra.mxu0 %v1229
    %1887 = vmatprep.subr.bf16.mxu0 %v1234
    %1888 = vmatpush1.bf16.msra.mxu0 %v1233
    %1889 = vmatprep.subr.bf16.mxu0 %v1238
    %1890 = vmatpush1.bf16.msra.mxu0 %v1237
    %1891 = vmatprep.mubr.bf16.mxu0 %v392
    %1892 = vmatmul.mubr.bf16.gmra.mrb[0].mxu0 %v391
    %v1893 = vpop.f32.mrb[0].mxu0
    %v1894 = vadd.f32 0.0, %v1893
    %v1895 = vpop.f32.mrb[0].mxu0
    %v1896 = vadd.f32 0.0, %v1895
    %v1897 = vpop.f32.mrb[0].mxu0
    %v1898 = vadd.f32 0.0, %v1897
    %v1899 = vpop.f32.mrb[0].mxu0
    %v1900 = vadd.f32 0.0, %v1899
    %1901 = vdwg.mxu0
    %1902 = vmatprep.subr.bf16.mxu0 %v1242
    %1903 = vmatpush1.bf16.msra.mxu0 %v1241
    %1904 = vmatprep.subr.bf16.mxu0 %v1246
    %1905 = vmatpush1.bf16.msra.mxu0 %v1245
    %1906 = vmatprep.subr.bf16.mxu0 %v1250
    %1907 = vmatpush1.bf16.msra.mxu0 %v1249
    %1908 = vmatprep.subr.bf16.mxu0 %v1254
    %1909 = vmatpush1.bf16.msra.mxu0 %v1253
    %1910 = vmatprep.subr.bf16.mxu0 %v1258
    %1911 = vmatpush1.bf16.msra.mxu0 %v1257
    %1912 = vmatprep.subr.bf16.mxu0 %v1262
    %1913 = vmatpush1.bf16.msra.mxu0 %v1261
    %1914 = vmatprep.subr.bf16.mxu0 %v1266
    %1915 = vmatpush1.bf16.msra.mxu0 %v1265
    %1916 = vmatprep.subr.bf16.mxu0 %v1270
    %1917 = vmatpush1.bf16.msra.mxu0 %v1269
    %1918 = vmatprep.subr.bf16.mxu0 %v1274
    %1919 = vmatpush1.bf16.msra.mxu0 %v1273
    %1920 = vmatprep.subr.bf16.mxu0 %v1278
    %1921 = vmatpush1.bf16.msra.mxu0 %v1277
    %1922 = vmatprep.subr.bf16.mxu0 %v1282
    %1923 = vmatpush1.bf16.msra.mxu0 %v1281
    %1924 = vmatprep.subr.bf16.mxu0 %v1286
    %1925 = vmatpush1.bf16.msra.mxu0 %v1285
    %1926 = vmatprep.subr.bf16.mxu0 %v1290
    %1927 = vmatpush1.bf16.msra.mxu0 %v1289
    %1928 = vmatprep.subr.bf16.mxu0 %v1294
    %1929 = vmatpush1.bf16.msra.mxu0 %v1293
    %1930 = vmatprep.subr.bf16.mxu0 %v1298
    %1931 = vmatpush1.bf16.msra.mxu0 %v1297
    %1932 = vmatprep.subr.bf16.mxu0 %v1302
    %1933 = vmatpush1.bf16.msra.mxu0 %v1301
    %1934 = vmatprep.mubr.bf16.mxu0 %v394
    %1935 = vmatmul.mubr.bf16.gmra.mrb[0].mxu0 %v393
    %v1936 = vpop.f32.mrb[0].mxu0
    %v1937 = vadd.f32 %v1894, %v1936
    %v1938 = vpop.f32.mrb[0].mxu0
    %v1939 = vadd.f32 %v1896, %v1938
    %v1940 = vpop.f32.mrb[0].mxu0
    %v1941 = vadd.f32 %v1898, %v1940
    %v1942 = vpop.f32.mrb[0].mxu0
    %v1943 = vadd.f32 %v1900, %v1942
    %1944 = vdwg.mxu0
    %1945 = vmatprep.subr.bf16.mxu0 %v1306
    %1946 = vmatpush1.bf16.msra.mxu0 %v1305
    %1947 = vmatprep.subr.bf16.mxu0 %v1310
    %1948 = vmatpush1.bf16.msra.mxu0 %v1309
    %1949 = vmatprep.subr.bf16.mxu0 %v1314
    %1950 = vmatpush1.bf16.msra.mxu0 %v1313
    %1951 = vmatprep.subr.bf16.mxu0 %v1318
    %1952 = vmatpush1.bf16.msra.mxu0 %v1317
    %1953 = vmatprep.subr.bf16.mxu0 %v1322
    %1954 = vmatpush1.bf16.msra.mxu0 %v1321
    %1955 = vmatprep.subr.bf16.mxu0 %v1326
    %1956 = vmatpush1.bf16.msra.mxu0 %v1325
    %1957 = vmatprep.subr.bf16.mxu0 %v1330
    %1958 = vmatpush1.bf16.msra.mxu0 %v1329
    %1959 = vmatprep.subr.bf16.mxu0 %v1334
    %1960 = vmatpush1.bf16.msra.mxu0 %v1333
    %1961 = vmatprep.subr.bf16.mxu0 %v1338
    %1962 = vmatpush1.bf16.msra.mxu0 %v1337
    %1963 = vmatprep.subr.bf16.mxu0 %v1342
    %1964 = vmatpush1.bf16.msra.mxu0 %v1341
    %1965 = vmatprep.subr.bf16.mxu0 %v1346
    %1966 = vmatpush1.bf16.msra.mxu0 %v1345
    %1967 = vmatprep.subr.bf16.mxu0 %v1350
    %1968 = vmatpush1.bf16.msra.mxu0 %v1349
    %1969 = vmatprep.subr.bf16.mxu0 %v1354
    %1970 = vmatpush1.bf16.msra.mxu0 %v1353
    %1971 = vmatprep.subr.bf16.mxu0 %v1358
    %1972 = vmatpush1.bf16.msra.mxu0 %v1357
    %1973 = vmatprep.subr.bf16.mxu0 %v1362
    %1974 = vmatpush1.bf16.msra.mxu0 %v1361
    %1975 = vmatprep.subr.bf16.mxu0 %v1366
    %1976 = vmatpush1.bf16.msra.mxu0 %v1365
    %1977 = vmatprep.mubr.bf16.mxu0 %v396
    %1978 = vmatmul.mubr.bf16.gmra.mrb[0].mxu0 %v395
    %v1979 = vpop.f32.mrb[0].mxu0
    %v1980 = vadd.f32 %v1937, %v1979
    %v1981 = vpop.f32.mrb[0].mxu0
    %v1982 = vadd.f32 %v1939, %v1981
    %v1983 = vpop.f32.mrb[0].mxu0
    %v1984 = vadd.f32 %v1941, %v1983
    %v1985 = vpop.f32.mrb[0].mxu0
    %v1986 = vadd.f32 %v1943, %v1985
    %1987 = vdwg.mxu0
    %1988 = vmatprep.subr.bf16.mxu0 %v1370
    %1989 = vmatpush1.bf16.msra.mxu0 %v1369
    %1990 = vmatprep.subr.bf16.mxu0 %v1374
    %1991 = vmatpush1.bf16.msra.mxu0 %v1373
    %1992 = vmatprep.subr.bf16.mxu0 %v1378
    %1993 = vmatpush1.bf16.msra.mxu0 %v1377
    %1994 = vmatprep.subr.bf16.mxu0 %v1382
    %1995 = vmatpush1.bf16.msra.mxu0 %v1381
    %1996 = vmatprep.subr.bf16.mxu0 %v1386
    %1997 = vmatpush1.bf16.msra.mxu0 %v1385
    %1998 = vmatprep.subr.bf16.mxu0 %v1390
    %1999 = vmatpush1.bf16.msra.mxu0 %v1389
    %2000 = vmatprep.subr.bf16.mxu0 %v1394
    %2001 = vmatpush1.bf16.msra.mxu0 %v1393
    %2002 = vmatprep.subr.bf16.mxu0 %v1398
    %2003 = vmatpush1.bf16.msra.mxu0 %v1397
    %2004 = vmatprep.subr.bf16.mxu0 %v1402
    %2005 = vmatpush1.bf16.msra.mxu0 %v1401
    %2006 = vmatprep.subr.bf16.mxu0 %v1406
    %2007 = vmatpush1.bf16.msra.mxu0 %v1405
    %2008 = vmatprep.subr.bf16.mxu0 %v1410
    %2009 = vmatpush1.bf16.msra.mxu0 %v1409
    %2010 = vmatprep.subr.bf16.mxu0 %v1414
    %2011 = vmatpush1.bf16.msra.mxu0 %v1413
    %2012 = vmatprep.subr.bf16.mxu0 %v1418
    %2013 = vmatpush1.bf16.msra.mxu0 %v1417
    %2014 = vmatprep.subr.bf16.mxu0 %v1422
    %2015 = vmatpush1.bf16.msra.mxu0 %v1421
    %2016 = vmatprep.subr.bf16.mxu0 %v1426
    %2017 = vmatpush1.bf16.msra.mxu0 %v1425
    %2018 = vmatprep.subr.bf16.mxu0 %v1430
    %2019 = vmatpush1.bf16.msra.mxu0 %v1429
    %2020 = vmatprep.mubr.bf16.mxu0 %v398
    %2021 = vmatmul.mubr.bf16.gmra.mrb[0].mxu0 %v397
    %v2022 = vpop.f32.mrb[0].mxu0
    %v2023 = vadd.f32 %v1980, %v2022
    %v2024 = vpop.f32.mrb[0].mxu0
    %v2025 = vadd.f32 %v1982, %v2024
    %v2026 = vpop.f32.mrb[0].mxu0
    %v2027 = vadd.f32 %v1984, %v2026
    %v2028 = vpop.f32.mrb[0].mxu0
    %v2029 = vadd.f32 %v1986, %v2028
    %2030 = vdwg.mxu0
    %v2031 = vadd.f32 %v95, %v1851
    %v2032 = vadd.f32 %v96, %v1853
    %v2033 = vadd.f32 %v97, %v2023
    %v2034 = vadd.f32 %v98, %v2025
    %v2035 = vadd.f32 %v99, %v1855
    %v2036 = vadd.f32 %v100, %v1857
    %v2037 = vadd.f32 %v101, %v2027
    %v2038 = vadd.f32 %v102, %v2029
    %2039 = vst [vmem:[#allocation2] sm:$0xff] %v2031
    %2040 = vst [vmem:[#allocation2 + $0x8] sm:$0xff] %v2032
    %2041 = vst [vmem:[#allocation2 + $0x10] sm:$0xff] %v2033
    %2042 = vst [vmem:[#allocation2 + $0x18] sm:$0xff] %v2034
    %2043 = vst [vmem:[#allocation2 + $0x20] sm:$0xff] %v2035
    %2044 = vst [vmem:[#allocation2 + $0x28] sm:$0xff] %v2036
    %2045 = vst [vmem:[#allocation2 + $0x30] sm:$0xff] %v2037
    %2046 = vst [vmem:[#allocation2 + $0x38] sm:$0xff] %v2038
    // Predicated region
    $region50: #{tpu_custom_call.1} parent=1 // pred_check
      %p2047 = pneg %p83
    $region51: #{tpu_custom_call.1} parent=1 // pred_check_branch
      %2049 = sbr.rel (%p2047) target = $region53
    $region52: #{tpu_custom_call.1} parent=1 // pred_region
      %v2050 = vld [vmem:[#allocation2] sm:$0xff]
      %v2051 = vld [vmem:[#allocation2 + $0x8] sm:$0xff]
      %v2052 = vld [vmem:[#allocation2 + $0x10] sm:$0xff]
      %v2053 = vld [vmem:[#allocation2 + $0x18] sm:$0xff]
      %v2054 = vld [vmem:[#allocation2 + $0x20] sm:$0xff]
      %v2055 = vld [vmem:[#allocation2 + $0x28] sm:$0xff]
      %v2056 = vld [vmem:[#allocation2 + $0x30] sm:$0xff]
      %v2057 = vld [vmem:[#allocation2 + $0x38] sm:$0xff]
      %v2058 = vld [vmem:[%s2] sm:$0xf]
      %v2060 = vlaneseq
      %v2061 = vshrl.u32 %v2060, 7
      %v2062 = vsub.s32 0, %v2061
      %v2063 = vrot.slane %v2058, %v2062
      %v2064 = vlaneseq
      %v2065 = vshrl.u32 %v2064, 7
      %v2066 = vsub.s32 1, %v2065
      %v2067 = vrot.slane %v2058, %v2066
      %v2068 = vlaneseq
      %v2069 = vshrl.u32 %v2068, 7
      %v2070 = vsub.s32 2, %v2069
      %v2071 = vrot.slane %v2058, %v2070
      %v2072 = vlaneseq
      %v2073 = vshrl.u32 %v2072, 7
      %v2074 = vsub.s32 3, %v2073
      %v2075 = vrot.slane %v2058, %v2074
      %v2080 = vadd.f32 %v2050, %v2063
      %v2081 = vadd.f32 %v2051, %v2067
      %v2082 = vadd.f32 %v2052, %v2071
      %v2083 = vadd.f32 %v2053, %v2075
      %v2084 = vadd.f32 %v2054, %v2063
      %v2085 = vadd.f32 %v2055, %v2067
      %v2086 = vadd.f32 %v2056, %v2071
      %v2087 = vadd.f32 %v2057, %v2075
      %vm2088 = vcmp.gt.f32.partialorder %v2080, 0.0
      %vm2089 = vcmp.gt.f32.partialorder %v2081, 0.0
      %vm2090 = vcmp.gt.f32.partialorder %v2082, 0.0
      %vm2091 = vcmp.gt.f32.partialorder %v2083, 0.0
      %vm2092 = vcmp.gt.f32.partialorder %v2084, 0.0
      %vm2093 = vcmp.gt.f32.partialorder %v2085, 0.0
      %vm2094 = vcmp.gt.f32.partialorder %v2086, 0.0
      %vm2095 = vcmp.gt.f32.partialorder %v2087, 0.0
      %v2096 = vmul.f32 %v2080, 0.2
      %v2097 = vmul.f32 %v2081, 0.2
      %v2098 = vmul.f32 %v2082, 0.2
      %v2099 = vmul.f32 %v2083, 0.2
      %v2100 = vmul.f32 %v2084, 0.2
      %v2101 = vmul.f32 %v2085, 0.2
      %v2102 = vmul.f32 %v2086, 0.2
      %v2103 = vmul.f32 %v2087, 0.2
      %v2104 = vsel %vm2088, %v2080, %v2096
      %v2105 = vsel %vm2089, %v2081, %v2097
      %v2106 = vsel %vm2090, %v2082, %v2098
      %v2107 = vsel %vm2091, %v2083, %v2099
      %v2108 = vsel %vm2092, %v2084, %v2100
      %v2109 = vsel %vm2093, %v2085, %v2101
      %v2110 = vsel %vm2094, %v2086, %v2102
      %v2111 = vsel %vm2095, %v2087, %v2103
      %v2112 = vpack.c.bf16 %v2108, %v2104
      %v2113 = vpack.c.bf16 %v2109, %v2105
      %v2114 = vpack.c.bf16 %v2110, %v2106
      %v2115 = vpack.c.bf16 %v2111, %v2107
      %v2116 = vld [vmem:[#allocation8] sm:$0xff]
      %v2117 = vld [vmem:[#allocation8 + $0x8] sm:$0xff]
      %v2118 = vld [vmem:[#allocation8 + $0x10] sm:$0xff]
      %v2119 = vld [vmem:[#allocation8 + $0x18] sm:$0xff]
      %v2120 = vld [vmem:[#allocation8 + $0x20] sm:$0xff]
      %v2121 = vld [vmem:[#allocation8 + $0x28] sm:$0xff]
      %v2122 = vld [vmem:[#allocation8 + $0x30] sm:$0xff]
      %v2123 = vld [vmem:[#allocation8 + $0x38] sm:$0xff]
      %v2124 = vld [vmem:[#allocation8 + $0x40] sm:$0xff]
      %v2125 = vld [vmem:[#allocation8 + $0x48] sm:$0xff]
      %v2126 = vld [vmem:[#allocation8 + $0x50] sm:$0xff]
      %v2127 = vld [vmem:[#allocation8 + $0x58] sm:$0xff]
      %v2128 = vld [vmem:[#allocation8 + $0x60] sm:$0xff]
      %v2129 = vld [vmem:[#allocation8 + $0x68] sm:$0xff]
      %v2130 = vld [vmem:[#allocation8 + $0x70] sm:$0xff]
      %v2131 = vld [vmem:[#allocation8 + $0x78] sm:$0xff]
      %v2132 = vld [vmem:[#allocation8 + $0x80] sm:$0xff]
      %v2133 = vld [vmem:[#allocation8 + $0x88] sm:$0xff]
      %v2134 = vld [vmem:[#allocation8 + $0x90] sm:$0xff]
      %v2135 = vld [vmem:[#allocation8 + $0x98] sm:$0xff]
      %v2136 = vld [vmem:[#allocation8 + $0xa0] sm:$0xff]
      %v2137 = vld [vmem:[#allocation8 + $0xa8] sm:$0xff]
      %v2138 = vld [vmem:[#allocation8 + $0xb0] sm:$0xff]
      %v2139 = vld [vmem:[#allocation8 + $0xb8] sm:$0xff]
      %v2140 = vld [vmem:[#allocation8 + $0xc0] sm:$0xff]
      %v2141 = vld [vmem:[#allocation8 + $0xc8] sm:$0xff]
      %v2142 = vld [vmem:[#allocation8 + $0xd0] sm:$0xff]
      %v2143 = vld [vmem:[#allocation8 + $0xd8] sm:$0xff]
      %v2144 = vld [vmem:[#allocation8 + $0xe0] sm:$0xff]
      %v2145 = vld [vmem:[#allocation8 + $0xe8] sm:$0xff]
      %v2146 = vld [vmem:[#allocation8 + $0xf0] sm:$0xff]
      %v2147 = vld [vmem:[#allocation8 + $0xf8] sm:$0xff]
      %v2148 = vld [vmem:[#allocation8 + $0x100] sm:$0xff]
      %v2149 = vld [vmem:[#allocation8 + $0x108] sm:$0xff]
      %v2150 = vld [vmem:[#allocation8 + $0x110] sm:$0xff]
      %v2151 = vld [vmem:[#allocation8 + $0x118] sm:$0xff]
      %v2152 = vld [vmem:[#allocation8 + $0x120] sm:$0xff]
      %v2153 = vld [vmem:[#allocation8 + $0x128] sm:$0xff]
      %v2154 = vld [vmem:[#allocation8 + $0x130] sm:$0xff]
      %v2155 = vld [vmem:[#allocation8 + $0x138] sm:$0xff]
      %v2156 = vld [vmem:[#allocation8 + $0x140] sm:$0xff]
      %v2157 = vld [vmem:[#allocation8 + $0x148] sm:$0xff]
      %v2158 = vld [vmem:[#allocation8 + $0x150] sm:$0xff]
      %v2159 = vld [vmem:[#allocation8 + $0x158] sm:$0xff]
      %v2160 = vld [vmem:[#allocation8 + $0x160] sm:$0xff]
      %v2161 = vld [vmem:[#allocation8 + $0x168] sm:$0xff]
      %v2162 = vld [vmem:[#allocation8 + $0x170] sm:$0xff]
      %v2163 = vld [vmem:[#allocation8 + $0x178] sm:$0xff]
      %v2164 = vld [vmem:[#allocation8 + $0x180] sm:$0xff]
      %v2165 = vld [vmem:[#allocation8 + $0x188] sm:$0xff]
      %v2166 = vld [vmem:[#allocation8 + $0x190] sm:$0xff]
      %v2167 = vld [vmem:[#allocation8 + $0x198] sm:$0xff]
      %v2168 = vld [vmem:[#allocation8 + $0x1a0] sm:$0xff]
      %v2169 = vld [vmem:[#allocation8 + $0x1a8] sm:$0xff]
      %v2170 = vld [vmem:[#allocation8 + $0x1b0] sm:$0xff]
      %v2171 = vld [vmem:[#allocation8 + $0x1b8] sm:$0xff]
      %v2172 = vld [vmem:[#allocation8 + $0x1c0] sm:$0xff]
      %v2173 = vld [vmem:[#allocation8 + $0x1c8] sm:$0xff]
      %v2174 = vld [vmem:[#allocation8 + $0x1d0] sm:$0xff]
      %v2175 = vld [vmem:[#allocation8 + $0x1d8] sm:$0xff]
      %v2176 = vld [vmem:[#allocation8 + $0x1e0] sm:$0xff]
      %v2177 = vld [vmem:[#allocation8 + $0x1e8] sm:$0xff]
      %v2178 = vld [vmem:[#allocation8 + $0x1f0] sm:$0xff]
      %v2179 = vld [vmem:[#allocation8 + $0x1f8] sm:$0xff]
      %v2180 = vld [vmem:[%s4] sm:$0x3]
      %v2182 = vlaneseq
      %v2183 = vshrl.u32 %v2182, 7
      %v2184 = vsub.s32 0, %v2183
      %v2185 = vrot.slane %v2180, %v2184
      %v2186 = vlaneseq
      %v2187 = vshrl.u32 %v2186, 7
      %v2188 = vsub.s32 1, %v2187
      %v2189 = vrot.slane %v2180, %v2188
      %v2256 = vunpack.c.l.b16 %v2116
      %v2257 = vunpack.c.h.b16 %v2116
      %v2258 = vunpack.c.l.b16 %v2117
      %v2259 = vunpack.c.h.b16 %v2117
      %v2260 = vunpack.c.l.b16 %v2118
      %v2261 = vunpack.c.h.b16 %v2118
      %v2262 = vunpack.c.l.b16 %v2119
      %v2263 = vunpack.c.h.b16 %v2119
      %v2264 = vunpack.c.l.b16 %v2120
      %v2265 = vunpack.c.h.b16 %v2120
      %v2266 = vunpack.c.l.b16 %v2121
      %v2267 = vunpack.c.h.b16 %v2121
      %v2268 = vunpack.c.l.b16 %v2122
      %v2269 = vunpack.c.h.b16 %v2122
      %v2270 = vunpack.c.l.b16 %v2123
      %v2271 = vunpack.c.h.b16 %v2123
      %v2272 = vunpack.c.l.b16 %v2124
      %v2273 = vunpack.c.h.b16 %v2124
      %v2274 = vunpack.c.l.b16 %v2125
      %v2275 = vunpack.c.h.b16 %v2125
      %v2276 = vunpack.c.l.b16 %v2126
      %v2277 = vunpack.c.h.b16 %v2126
      %v2278 = vunpack.c.l.b16 %v2127
      %v2279 = vunpack.c.h.b16 %v2127
      %v2280 = vunpack.c.l.b16 %v2128
      %v2281 = vunpack.c.h.b16 %v2128
      %v2282 = vunpack.c.l.b16 %v2129
      %v2283 = vunpack.c.h.b16 %v2129
      %v2284 = vunpack.c.l.b16 %v2130
      %v2285 = vunpack.c.h.b16 %v2130
      %v2286 = vunpack.c.l.b16 %v2131
      %v2287 = vunpack.c.h.b16 %v2131
      %v2288 = vunpack.c.l.b16 %v2132
      %v2289 = vunpack.c.h.b16 %v2132
      %v2290 = vunpack.c.l.b16 %v2133
      %v2291 = vunpack.c.h.b16 %v2133
      %v2292 = vunpack.c.l.b16 %v2134
      %v2293 = vunpack.c.h.b16 %v2134
      %v2294 = vunpack.c.l.b16 %v2135
      %v2295 = vunpack.c.h.b16 %v2135
      %v2296 = vunpack.c.l.b16 %v2136
      %v2297 = vunpack.c.h.b16 %v2136
      %v2298 = vunpack.c.l.b16 %v2137
      %v2299 = vunpack.c.h.b16 %v2137
      %v2300 = vunpack.c.l.b16 %v2138
      %v2301 = vunpack.c.h.b16 %v2138
      %v2302 = vunpack.c.l.b16 %v2139
      %v2303 = vunpack.c.h.b16 %v2139
      %v2304 = vunpack.c.l.b16 %v2140
      %v2305 = vunpack.c.h.b16 %v2140
      %v2306 = vunpack.c.l.b16 %v2141
      %v2307 = vunpack.c.h.b16 %v2141
      %v2308 = vunpack.c.l.b16 %v2142
      %v2309 = vunpack.c.h.b16 %v2142
      %v2310 = vunpack.c.l.b16 %v2143
      %v2311 = vunpack.c.h.b16 %v2143
      %v2312 = vunpack.c.l.b16 %v2144
      %v2313 = vunpack.c.h.b16 %v2144
      %v2314 = vunpack.c.l.b16 %v2145
      %v2315 = vunpack.c.h.b16 %v2145
      %v2316 = vunpack.c.l.b16 %v2146
      %v2317 = vunpack.c.h.b16 %v2146
      %v2318 = vunpack.c.l.b16 %v2147
      %v2319 = vunpack.c.h.b16 %v2147
      %v2320 = vunpack.c.l.b16 %v2148
      %v2321 = vunpack.c.h.b16 %v2148
      %v2322 = vunpack.c.l.b16 %v2149
      %v2323 = vunpack.c.h.b16 %v2149
      %v2324 = vunpack.c.l.b16 %v2150
      %v2325 = vunpack.c.h.b16 %v2150
      %v2326 = vunpack.c.l.b16 %v2151
      %v2327 = vunpack.c.h.b16 %v2151
      %v2328 = vunpack.c.l.b16 %v2152
      %v2329 = vunpack.c.h.b16 %v2152
      %v2330 = vunpack.c.l.b16 %v2153
      %v2331 = vunpack.c.h.b16 %v2153
      %v2332 = vunpack.c.l.b16 %v2154
      %v2333 = vunpack.c.h.b16 %v2154
      %v2334 = vunpack.c.l.b16 %v2155
      %v2335 = vunpack.c.h.b16 %v2155
      %v2336 = vunpack.c.l.b16 %v2156
      %v2337 = vunpack.c.h.b16 %v2156
      %v2338 = vunpack.c.l.b16 %v2157
      %v2339 = vunpack.c.h.b16 %v2157
      %v2340 = vunpack.c.l.b16 %v2158
      %v2341 = vunpack.c.h.b16 %v2158
      %v2342 = vunpack.c.l.b16 %v2159
      %v2343 = vunpack.c.h.b16 %v2159
      %v2344 = vunpack.c.l.b16 %v2160
      %v2345 = vunpack.c.h.b16 %v2160
      %v2346 = vunpack.c.l.b16 %v2161
      %v2347 = vunpack.c.h.b16 %v2161
      %v2348 = vunpack.c.l.b16 %v2162
      %v2349 = vunpack.c.h.b16 %v2162
      %v2350 = vunpack.c.l.b16 %v2163
      %v2351 = vunpack.c.h.b16 %v2163
      %v2352 = vunpack.c.l.b16 %v2164
      %v2353 = vunpack.c.h.b16 %v2164
      %v2354 = vunpack.c.l.b16 %v2165
      %v2355 = vunpack.c.h.b16 %v2165
      %v2356 = vunpack.c.l.b16 %v2166
      %v2357 = vunpack.c.h.b16 %v2166
      %v2358 = vunpack.c.l.b16 %v2167
      %v2359 = vunpack.c.h.b16 %v2167
      %v2360 = vunpack.c.l.b16 %v2168
      %v2361 = vunpack.c.h.b16 %v2168
      %v2362 = vunpack.c.l.b16 %v2169
      %v2363 = vunpack.c.h.b16 %v2169
      %v2364 = vunpack.c.l.b16 %v2170
      %v2365 = vunpack.c.h.b16 %v2170
      %v2366 = vunpack.c.l.b16 %v2171
      %v2367 = vunpack.c.h.b16 %v2171
      %v2368 = vunpack.c.l.b16 %v2172
      %v2369 = vunpack.c.h.b16 %v2172
      %v2370 = vunpack.c.l.b16 %v2173
      %v2371 = vunpack.c.h.b16 %v2173
      %v2372 = vunpack.c.l.b16 %v2174
      %v2373 = vunpack.c.h.b16 %v2174
      %v2374 = vunpack.c.l.b16 %v2175
      %v2375 = vunpack.c.h.b16 %v2175
      %v2376 = vunpack.c.l.b16 %v2176
      %v2377 = vunpack.c.h.b16 %v2176
      %v2378 = vunpack.c.l.b16 %v2177
      %v2379 = vunpack.c.h.b16 %v2177
      %v2380 = vunpack.c.l.b16 %v2178
      %v2381 = vunpack.c.h.b16 %v2178
      %v2382 = vunpack.c.l.b16 %v2179
      %v2383 = vunpack.c.h.b16 %v2179
      %v2384 = vpack.c.b16 %v2258, %v2256
      %v2385 = vpack.c.b16 %v2259, %v2257
      %v2386 = vpack.c.b16 %v2262, %v2260
      %v2387 = vpack.c.b16 %v2263, %v2261
      %v2388 = vpack.c.b16 %v2266, %v2264
      %v2389 = vpack.c.b16 %v2267, %v2265
      %v2390 = vpack.c.b16 %v2270, %v2268
      %v2391 = vpack.c.b16 %v2271, %v2269
      %v2392 = vpack.c.b16 %v2274, %v2272
      %v2393 = vpack.c.b16 %v2275, %v2273
      %v2394 = vpack.c.b16 %v2278, %v2276
      %v2395 = vpack.c.b16 %v2279, %v2277
      %v2396 = vpack.c.b16 %v2282, %v2280
      %v2397 = vpack.c.b16 %v2283, %v2281
      %v2398 = vpack.c.b16 %v2286, %v2284
      %v2399 = vpack.c.b16 %v2287, %v2285
      %v2400 = vpack.c.b16 %v2290, %v2288
      %v2401 = vpack.c.b16 %v2291, %v2289
      %v2402 = vpack.c.b16 %v2294, %v2292
      %v2403 = vpack.c.b16 %v2295, %v2293
      %v2404 = vpack.c.b16 %v2298, %v2296
      %v2405 = vpack.c.b16 %v2299, %v2297
      %v2406 = vpack.c.b16 %v2302, %v2300
      %v2407 = vpack.c.b16 %v2303, %v2301
      %v2408 = vpack.c.b16 %v2306, %v2304
      %v2409 = vpack.c.b16 %v2307, %v2305
      %v2410 = vpack.c.b16 %v2310, %v2308
      %v2411 = vpack.c.b16 %v2311, %v2309
      %v2412 = vpack.c.b16 %v2314, %v2312
      %v2413 = vpack.c.b16 %v2315, %v2313
      %v2414 = vpack.c.b16 %v2318, %v2316
      %v2415 = vpack.c.b16 %v2319, %v2317
      %v2416 = vpack.c.b16 %v2322, %v2320
      %v2417 = vpack.c.b16 %v2323, %v2321
      %v2418 = vpack.c.b16 %v2326, %v2324
      %v2419 = vpack.c.b16 %v2327, %v2325
      %v2420 = vpack.c.b16 %v2330, %v2328
      %v2421 = vpack.c.b16 %v2331, %v2329
      %v2422 = vpack.c.b16 %v2334, %v2332
      %v2423 = vpack.c.b16 %v2335, %v2333
      %v2424 = vpack.c.b16 %v2338, %v2336
      %v2425 = vpack.c.b16 %v2339, %v2337
      %v2426 = vpack.c.b16 %v2342, %v2340
      %v2427 = vpack.c.b16 %v2343, %v2341
      %v2428 = vpack.c.b16 %v2346, %v2344
      %v2429 = vpack.c.b16 %v2347, %v2345
      %v2430 = vpack.c.b16 %v2350, %v2348
      %v2431 = vpack.c.b16 %v2351, %v2349
      %v2432 = vpack.c.b16 %v2354, %v2352
      %v2433 = vpack.c.b16 %v2355, %v2353
      %v2434 = vpack.c.b16 %v2358, %v2356
      %v2435 = vpack.c.b16 %v2359, %v2357
      %v2436 = vpack.c.b16 %v2362, %v2360
      %v2437 = vpack.c.b16 %v2363, %v2361
      %v2438 = vpack.c.b16 %v2366, %v2364
      %v2439 = vpack.c.b16 %v2367, %v2365
      %v2440 = vpack.c.b16 %v2370, %v2368
      %v2441 = vpack.c.b16 %v2371, %v2369
      %v2442 = vpack.c.b16 %v2374, %v2372
      %v2443 = vpack.c.b16 %v2375, %v2373
      %v2444 = vpack.c.b16 %v2378, %v2376
      %v2445 = vpack.c.b16 %v2379, %v2377
      %v2446 = vpack.c.b16 %v2382, %v2380
      %v2447 = vpack.c.b16 %v2383, %v2381
      %2512 = vmatprep.subr.bf16.mxu0 %v2385
      %2513 = vmatpush1.bf16.msra.mxu0 %v2384
      %2514 = vmatprep.subr.bf16.mxu0 %v2387
      %2515 = vmatpush1.bf16.msra.mxu0 %v2386
      %2516 = vmatprep.subr.bf16.mxu0 %v2389
      %2517 = vmatpush1.bf16.msra.mxu0 %v2388
      %2518 = vmatprep.subr.bf16.mxu0 %v2391
      %2519 = vmatpush1.bf16.msra.mxu0 %v2390
      %2520 = vmatprep.subr.bf16.mxu0 %v2393
      %2521 = vmatpush1.bf16.msra.mxu0 %v2392
      %2522 = vmatprep.subr.bf16.mxu0 %v2395
      %2523 = vmatpush1.bf16.msra.mxu0 %v2394
      %2524 = vmatprep.subr.bf16.mxu0 %v2397
      %2525 = vmatpush1.bf16.msra.mxu0 %v2396
      %2526 = vmatprep.subr.bf16.mxu0 %v2399
      %2527 = vmatpush1.bf16.msra.mxu0 %v2398
      %2528 = vmatprep.subr.bf16.mxu0 %v2401
      %2529 = vmatpush1.bf16.msra.mxu0 %v2400
      %2530 = vmatprep.subr.bf16.mxu0 %v2403
      %2531 = vmatpush1.bf16.msra.mxu0 %v2402
      %2532 = vmatprep.subr.bf16.mxu0 %v2405
      %2533 = vmatpush1.bf16.msra.mxu0 %v2404
      %2534 = vmatprep.subr.bf16.mxu0 %v2407
      %2535 = vmatpush1.bf16.msra.mxu0 %v2406
      %2536 = vmatprep.subr.bf16.mxu0 %v2409
      %2537 = vmatpush1.bf16.msra.mxu0 %v2408
      %2538 = vmatprep.subr.bf16.mxu0 %v2411
      %2539 = vmatpush1.bf16.msra.mxu0 %v2410
      %2540 = vmatprep.subr.bf16.mxu0 %v2413
      %2541 = vmatpush1.bf16.msra.mxu0 %v2412
      %2542 = vmatprep.subr.bf16.mxu0 %v2415
      %2543 = vmatpush1.bf16.msra.mxu0 %v2414
      %2544 = vmatprep.mubr.bf16.mxu0 %v2113
      %2545 = vmatmul.mubr.bf16.gmra.mrb[0].mxu0 %v2112
      %v2546 = vpop.f32.mrb[0].mxu0
      %v2547 = vadd.f32 %v2185, %v2546
      %v2548 = vpop.f32.mrb[0].mxu0
      %v2549 = vadd.f32 %v2189, %v2548
      %v2550 = vpop.f32.mrb[0].mxu0
      %v2551 = vadd.f32 %v2185, %v2550
      %v2552 = vpop.f32.mrb[0].mxu0
      %v2553 = vadd.f32 %v2189, %v2552
      %2554 = vdwg.mxu0
      %2555 = vmatprep.subr.bf16.mxu0 %v2417
      %2556 = vmatpush1.bf16.msra.mxu0 %v2416
      %2557 = vmatprep.subr.bf16.mxu0 %v2419
      %2558 = vmatpush1.bf16.msra.mxu0 %v2418
      %2559 = vmatprep.subr.bf16.mxu0 %v2421
      %2560 = vmatpush1.bf16.msra.mxu0 %v2420
      %2561 = vmatprep.subr.bf16.mxu0 %v2423
      %2562 = vmatpush1.bf16.msra.mxu0 %v2422
      %2563 = vmatprep.subr.bf16.mxu0 %v2425
      %2564 = vmatpush1.bf16.msra.mxu0 %v2424
      %2565 = vmatprep.subr.bf16.mxu0 %v2427
      %2566 = vmatpush1.bf16.msra.mxu0 %v2426
      %2567 = vmatprep.subr.bf16.mxu0 %v2429
      %2568 = vmatpush1.bf16.msra.mxu0 %v2428
      %2569 = vmatprep.subr.bf16.mxu0 %v2431
      %2570 = vmatpush1.bf16.msra.mxu0 %v2430
      %2571 = vmatprep.subr.bf16.mxu0 %v2433
      %2572 = vmatpush1.bf16.msra.mxu0 %v2432
      %2573 = vmatprep.subr.bf16.mxu0 %v2435
      %2574 = vmatpush1.bf16.msra.mxu0 %v2434
      %2575 = vmatprep.subr.bf16.mxu0 %v2437
      %2576 = vmatpush1.bf16.msra.mxu0 %v2436
      %2577 = vmatprep.subr.bf16.mxu0 %v2439
      %2578 = vmatpush1.bf16.msra.mxu0 %v2438
      %2579 = vmatprep.subr.bf16.mxu0 %v2441
      %2580 = vmatpush1.bf16.msra.mxu0 %v2440
      %2581 = vmatprep.subr.bf16.mxu0 %v2443
      %2582 = vmatpush1.bf16.msra.mxu0 %v2442
      %2583 = vmatprep.subr.bf16.mxu0 %v2445
      %2584 = vmatpush1.bf16.msra.mxu0 %v2444
      %2585 = vmatprep.subr.bf16.mxu0 %v2447
      %2586 = vmatpush1.bf16.msra.mxu0 %v2446
      %2587 = vmatprep.mubr.bf16.mxu0 %v2115
      %2588 = vmatmul.mubr.bf16.gmra.mrb[0].mxu0 %v2114
      %v2589 = vpop.f32.mrb[0].mxu0
      %v2590 = vadd.f32 %v2547, %v2589
      %v2591 = vpop.f32.mrb[0].mxu0
      %v2592 = vadd.f32 %v2549, %v2591
      %v2593 = vpop.f32.mrb[0].mxu0
      %v2594 = vadd.f32 %v2551, %v2593
      %v2595 = vpop.f32.mrb[0].mxu0
      %v2596 = vadd.f32 %v2553, %v2595
      %2597 = vdwg.mxu0
      %vm2598 = vcmp.gt.f32.partialorder %v2590, 0.0
      %vm2599 = vcmp.gt.f32.partialorder %v2592, 0.0
      %vm2600 = vcmp.gt.f32.partialorder %v2594, 0.0
      %vm2601 = vcmp.gt.f32.partialorder %v2596, 0.0
      %v2602 = vmul.f32 %v2590, 0.2
      %v2603 = vmul.f32 %v2592, 0.2
      %v2604 = vmul.f32 %v2594, 0.2
      %v2605 = vmul.f32 %v2596, 0.2
      %v2606 = vsel %vm2598, %v2590, %v2602
      %v2607 = vsel %vm2599, %v2592, %v2603
      %v2608 = vsel %vm2600, %v2594, %v2604
      %v2609 = vsel %vm2601, %v2596, %v2605
      %v2610 = vpack.c.bf16 %v2608, %v2606
      %v2611 = vpack.c.bf16 %v2609, %v2607
      %v2612 = vld [vmem:[#allocation9] sm:$0xf]
      %v2613 = vld [vmem:[#allocation9 + $0x4] sm:$0xf]
      %v2614 = vld [vmem:[#allocation9 + $0x8] sm:$0xf]
      %v2615 = vld [vmem:[#allocation9 + $0xc] sm:$0xf]
      %v2616 = vld [vmem:[#allocation9 + $0x10] sm:$0xf]
      %v2617 = vld [vmem:[#allocation9 + $0x14] sm:$0xf]
      %v2618 = vld [vmem:[#allocation9 + $0x18] sm:$0xf]
      %v2619 = vld [vmem:[#allocation9 + $0x1c] sm:$0xf]
      %v2620 = vld [vmem:[#allocation9 + $0x20] sm:$0xf]
      %v2621 = vld [vmem:[#allocation9 + $0x24] sm:$0xf]
      %v2622 = vld [vmem:[#allocation9 + $0x28] sm:$0xf]
      %v2623 = vld [vmem:[#allocation9 + $0x2c] sm:$0xf]
      %v2624 = vld [vmem:[#allocation9 + $0x30] sm:$0xf]
      %v2625 = vld [vmem:[#allocation9 + $0x34] sm:$0xf]
      %v2626 = vld [vmem:[#allocation9 + $0x38] sm:$0xf]
      %v2627 = vld [vmem:[#allocation9 + $0x3c] sm:$0xf]
      %v2628 = vld [vmem:[#allocation9 + $0x40] sm:$0xf]
      %v2629 = vld [vmem:[#allocation9 + $0x44] sm:$0xf]
      %v2630 = vld [vmem:[#allocation9 + $0x48] sm:$0xf]
      %v2631 = vld [vmem:[#allocation9 + $0x4c] sm:$0xf]
      %v2632 = vld [vmem:[#allocation9 + $0x50] sm:$0xf]
      %v2633 = vld [vmem:[#allocation9 + $0x54] sm:$0xf]
      %v2634 = vld [vmem:[#allocation9 + $0x58] sm:$0xf]
      %v2635 = vld [vmem:[#allocation9 + $0x5c] sm:$0xf]
      %v2636 = vld [vmem:[#allocation9 + $0x60] sm:$0xf]
      %v2637 = vld [vmem:[#allocation9 + $0x64] sm:$0xf]
      %v2638 = vld [vmem:[#allocation9 + $0x68] sm:$0xf]
      %v2639 = vld [vmem:[#allocation9 + $0x6c] sm:$0xf]
      %v2640 = vld [vmem:[#allocation9 + $0x70] sm:$0xf]
      %v2641 = vld [vmem:[#allocation9 + $0x74] sm:$0xf]
      %v2642 = vld [vmem:[#allocation9 + $0x78] sm:$0xf]
      %v2643 = vld [vmem:[#allocation9 + $0x7c] sm:$0xf]
      %v2676 = vunpack.c.l.b16 %v2612
      %v2677 = vunpack.c.l.b16 %v2613
      %v2678 = vunpack.c.l.b16 %v2614
      %v2679 = vunpack.c.l.b16 %v2615
      %v2680 = vunpack.c.l.b16 %v2616
      %v2681 = vunpack.c.l.b16 %v2617
      %v2682 = vunpack.c.l.b16 %v2618
      %v2683 = vunpack.c.l.b16 %v2619
      %v2684 = vunpack.c.l.b16 %v2620
      %v2685 = vunpack.c.l.b16 %v2621
      %v2686 = vunpack.c.l.b16 %v2622
      %v2687 = vunpack.c.l.b16 %v2623
      %v2688 = vunpack.c.l.b16 %v2624
      %v2689 = vunpack.c.l.b16 %v2625
      %v2690 = vunpack.c.l.b16 %v2626
      %v2691 = vunpack.c.l.b16 %v2627
      %v2692 = vunpack.c.l.b16 %v2628
      %v2693 = vunpack.c.l.b16 %v2629
      %v2694 = vunpack.c.l.b16 %v2630
      %v2695 = vunpack.c.l.b16 %v2631
      %v2696 = vunpack.c.l.b16 %v2632
      %v2697 = vunpack.c.l.b16 %v2633
      %v2698 = vunpack.c.l.b16 %v2634
      %v2699 = vunpack.c.l.b16 %v2635
      %v2700 = vunpack.c.l.b16 %v2636
      %v2701 = vunpack.c.l.b16 %v2637
      %v2702 = vunpack.c.l.b16 %v2638
      %v2703 = vunpack.c.l.b16 %v2639
      %v2704 = vunpack.c.l.b16 %v2640
      %v2705 = vunpack.c.l.b16 %v2641
      %v2706 = vunpack.c.l.b16 %v2642
      %v2707 = vunpack.c.l.b16 %v2643
      %v2708 = vpack.c.b16 %v2677, %v2676
      %v2709 = vpack.c.b16 %v2679, %v2678
      %v2710 = vpack.c.b16 %v2681, %v2680
      %v2711 = vpack.c.b16 %v2683, %v2682
      %v2712 = vpack.c.b16 %v2685, %v2684
      %v2713 = vpack.c.b16 %v2687, %v2686
      %v2714 = vpack.c.b16 %v2689, %v2688
      %v2715 = vpack.c.b16 %v2691, %v2690
      %v2716 = vpack.c.b16 %v2693, %v2692
      %v2717 = vpack.c.b16 %v2695, %v2694
      %v2718 = vpack.c.b16 %v2697, %v2696
      %v2719 = vpack.c.b16 %v2699, %v2698
      %v2720 = vpack.c.b16 %v2701, %v2700
      %v2721 = vpack.c.b16 %v2703, %v2702
      %v2722 = vpack.c.b16 %v2705, %v2704
      %v2723 = vpack.c.b16 %v2707, %v2706
      %2740 = vmatprep.subr.bf16.mxu0 0
      %2741 = vmatpush1.bf16.msra.mxu0 %v2708
      %2742 = vmatprep.subr.bf16.mxu0 0
      %2743 = vmatpush1.bf16.msra.mxu0 %v2709
      %2744 = vmatprep.subr.bf16.mxu0 0
      %2745 = vmatpush1.bf16.msra.mxu0 %v2710
      %2746 = vmatprep.subr.bf16.mxu0 0
      %2747 = vmatpush1.bf16.msra.mxu0 %v2711
      %2748 = vmatprep.subr.bf16.mxu0 0
      %2749 = vmatpush1.bf16.msra.mxu0 %v2712
      %2750 = vmatprep.subr.bf16.mxu0 0
      %2751 = vmatpush1.bf16.msra.mxu0 %v2713
      %2752 = vmatprep.subr.bf16.mxu0 0
      %2753 = vmatpush1.bf16.msra.mxu0 %v2714
      %2754 = vmatprep.subr.bf16.mxu0 0
      %2755 = vmatpush1.bf16.msra.mxu0 %v2715
      %2756 = vmatprep.subr.bf16.mxu0 0
      %2757 = vmatpush1.bf16.msra.mxu0 %v2716
      %2758 = vmatprep.subr.bf16.mxu0 0
      %2759 = vmatpush1.bf16.msra.mxu0 %v2717
      %2760 = vmatprep.subr.bf16.mxu0 0
      %2761 = vmatpush1.bf16.msra.mxu0 %v2718
      %2762 = vmatprep.subr.bf16.mxu0 0
      %2763 = vmatpush1.bf16.msra.mxu0 %v2719
      %2764 = vmatprep.subr.bf16.mxu0 0
      %2765 = vmatpush1.bf16.msra.mxu0 %v2720
      %2766 = vmatprep.subr.bf16.mxu0 0
      %2767 = vmatpush1.bf16.msra.mxu0 %v2721
      %2768 = vmatprep.subr.bf16.mxu0 0
      %2769 = vmatpush1.bf16.msra.mxu0 %v2722
      %2770 = vmatprep.subr.bf16.mxu0 0
      %2771 = vmatpush1.bf16.msra.mxu0 %v2723
      %2772 = vmatprep.mubr.bf16.mxu0 %v2611
      %2773 = vmatmul.mubr.bf16.gmra.mrb[0].mxu0 %v2610
      %v2774 = vpop.f32.mrb[0].mxu0
      %v2775 = vadd.f32 0.0, %v2774
      %v2776 = vpop.f32.mrb[0].mxu0
      %v2777 = vpop.f32.mrb[0].mxu0
      %v2778 = vadd.f32 0.0, %v2777
      %v2779 = vpop.f32.mrb[0].mxu0
      %2780 = vdwg.mxu0
      %s2781 = sld [smem:[#allocation3]]
      %v2782 = vstv %s2781
      %v2783 = vadd.f32 %v2775, %v2782
      %v2784 = vadd.f32 %v2778, %v2782
      %v2785 = vsub.f32 0.0, %v2783
      %v2786 = vsub.f32 0.0, %v2784
      %v2787 = vmul.f32 %v2785, 1.442695
      %v2788 = vpow.pop %v2787
      %v2789 = vmul.f32 %v2786, 1.442695
      %v2790 = vpow.pop %v2789
      %v2791 = vadd.f32 %v2788, 1.0
      %v2792 = vadd.f32 %v2790, 1.0
      %v2793 = vrcp.pop %v2791
      %v2794 = vrcp.pop %v2792
      %vm2795 = vcmask 7168
      %2796 = vst.msk [vmem:[%s7] sm:$0xff] %vm2795, %v2793
      %2797 = vst.msk [vmem:[%s7 + $0x8] sm:$0xff] %vm2795, %v2794
    $region53: #{tpu_custom_call.1} parent=1 // pred_fallthru
      _
    // Predicated region
    $region54: #{tpu_custom_call.1} parent=1 // pred_check
      _
    $region55: #{tpu_custom_call.1} parent=1 // pred_check_branch
      %2799 = sbr.rel (0) target = $region57
    $region56: #{tpu_custom_call.1} parent=1 // pred_region
      _
    $region57: #{tpu_custom_call.1} parent=1 // pred_fallthru
      _
    // Predicated region
    $region58: #{tpu_custom_call.1} parent=1 // pred_check
      _
    $region59: #{tpu_custom_call.1} parent=1 // pred_check_branch
      %2801 = sbr.rel (0) target = $region61
    $region60: #{tpu_custom_call.1} parent=1 // pred_region
      _
    $region61: #{tpu_custom_call.1} parent=1 // pred_fallthru
      _
    %2802 = vsyncpa [#allocation5], 1
    %2803 = vsyncpa [#allocation7], 1
    %2804 = vsyncpa [#allocation10], 1

</llo_original>
